<compile_context>
chip_gen: v6e
topology: v6e:2x2x1
jax: 0.10.0
libtpu: 0.0.40
codegen_flags: <defaults>
</compile_context>

<pallas_src>
import jax
import jax.numpy as jnp
from jax.experimental import pallas as pl
from jax.experimental.pallas import tpu as pltpu


def _leaky_relu(z, slope=0.01):
    # nn.LeakyReLU() default negative_slope = 0.01
    return jnp.where(z >= 0, z, slope * z)


def _sigmoid_kernel(z):
    # 1 / (1 + exp(-z)); exp and reciprocal both land off the VALU (EUP).
    return pl.reciprocal(1.0 + jnp.exp(-z), approx=True)


# ---------------------------------------------------------------------------
# Kernel: encoder + fused (mask|feature) estimator, one packed output.
# ---------------------------------------------------------------------------
def dade_self_kernel(
    x_ref,
    we_ref, be_ref,          # encoder            (row-packed)
    w1_ref, b1_ref,          # layer1 mask|feat   (row-packed, concatenated)
    w2_ref, b2_ref,          # layer2 block-diag  (row-packed)
    w3_ref, b3_ref,          # layer3 block-diag  (row-packed)
    out_ref,                 # packed [tile_rows, R*2*dim]  (mask|feature per batch row)
):
    cd = we_ref.dtype        # matmul compute dtype (bf16 by default)

    x = x_ref[...]
    h = _leaky_relu(
        jnp.dot(x, we_ref[...], preferred_element_type=jnp.float32) + be_ref[...]
    )
    y = _leaky_relu(
        jnp.dot(h.astype(cd), w1_ref[...], preferred_element_type=jnp.float32)
        + b1_ref[...]
    )
    y = _leaky_relu(
        jnp.dot(y.astype(cd), w2_ref[...], preferred_element_type=jnp.float32)
        + b2_ref[...]
    )
    y = _sigmoid_kernel(
        jnp.dot(y.astype(cd), w3_ref[...], preferred_element_type=jnp.float32)
        + b3_ref[...]
    )
    out_ref[...] = y.astype(out_ref.dtype)


# ---------------------------------------------------------------------------
# Wrapper-side weight fusion / row packing (exact, pure layout transforms).
# ---------------------------------------------------------------------------
def _row_pack_factor(dim):
    # Pack R batch rows per kernel row so lane dims become multiples of 128.
    if dim < 128 and 128 % dim == 0:
        return 128 // dim
    return 1


def _block_diag2(a, b):
    za = jnp.zeros((a.shape[0], b.shape[1]), a.dtype)
    zb = jnp.zeros((b.shape[0], a.shape[1]), b.dtype)
    top = jnp.concatenate([a, za], axis=1)
    bot = jnp.concatenate([zb, b], axis=1)
    return jnp.concatenate([top, bot], axis=0)


def pack_params(params, row_pack, compute_dtype=jnp.bfloat16):
    (we, be, wm1, bm1, wm2, bm2, wm3, bm3, wf1, bf1, wf2, bf2, wf3, bf3) = params

    # 1) fuse mask / feature branches (exact: concatenation + block-diagonal)
    w1 = jnp.concatenate([wm1, wf1], axis=1)     # [dim, 256]
    b1 = jnp.concatenate([bm1, bf1], axis=1)     # [1, 256]
    w2 = _block_diag2(wm2, wf2)                  # [256, 128]
    b2 = jnp.concatenate([bm2, bf2], axis=1)     # [1, 128]
    w3 = _block_diag2(wm3, wf3)                  # [128, 2*dim]
    b3 = jnp.concatenate([bm3, bf3], axis=1)     # [1, 2*dim]

    # 2) row packing: y_packed = x_packed @ kron(I_R, W), bias tiled R times
    def rpw(w):
        if row_pack == 1:
            return w
        return jnp.kron(jnp.eye(row_pack, dtype=w.dtype), w)

    def rpb(b):
        if row_pack == 1:
            return b
        return jnp.tile(b, (1, row_pack))

    weights = tuple(rpw(w).astype(compute_dtype) for w in (we, w1, w2, w3))
    biases = tuple(rpb(b).astype(jnp.float32) for b in (be, b1, b2, b3))
    return weights, biases


# ---------------------------------------------------------------------------
# Forward pass
# ---------------------------------------------------------------------------
def dade_self_forward(x, params, *, batch_tile=1024, compute_dtype=jnp.bfloat16):
    """DADE_Self forward: returns (mask_output, feature_output), each [B, dim] f32."""
    B, dim = x.shape
    R = _row_pack_factor(dim)
    assert B % R == 0, "batch must be divisible by the row-packing factor"

    if batch_tile > B:
        batch_tile = B
    # keep >= 2 grid steps when possible so v7x can shard the batch across its 2 TCs
    if batch_tile == B and B % (2 * R) == 0 and (B // 2) >= 8 * R:
        batch_tile = B // 2
    assert B % batch_tile == 0, "batch must be divisible by batch_tile"
    assert batch_tile % R == 0, "batch_tile must be divisible by the row-packing factor"

    tile_rows = batch_tile // R
    n_rows = B // R
    assert tile_rows == n_rows or tile_rows % 8 == 0, "tile rows must be a multiple of 8"

    (we, w1, w2, w3), (be, b1, b2, b3) = pack_params(params, R, compute_dtype)

    # Free, row-major relabel: row i holds batch rows i*R .. i*R+R-1 concatenated.
    x_packed = x.reshape(n_rows, R * dim).astype(compute_dtype)

    def wspec(a):
        # whole (tiny) weight/bias array resident in VMEM every grid step
        return pl.BlockSpec(a.shape, lambda i: (0, 0))

    x_spec = pl.BlockSpec((tile_rows, R * dim), lambda i: (i, 0))
    out_spec = pl.BlockSpec((tile_rows, R * 2 * dim), lambda i: (i, 0))

    out_packed = pl.pallas_call(
        dade_self_kernel,
        out_shape=jax.ShapeDtypeStruct((n_rows, R * 2 * dim), jnp.float32),
        grid=(n_rows // tile_rows,),
        in_specs=[
            x_spec,
            wspec(we), wspec(be),
            wspec(w1), wspec(b1),
            wspec(w2), wspec(b2),
            wspec(w3), wspec(b3),
        ],
        out_specs=out_spec,
        compiler_params=pltpu.CompilerParams(
            dimension_semantics=("parallel",),
            # footprint is only a few MiB; default scoped VMEM limit is fine on
            # v5e/v6e/v7x. Raise vmem_limit_bytes only if dim or batch_tile grows a lot.
        ),
    )(x_packed, we, be, w1, b1, w2, b2, w3, b3)

    packed = out_packed.reshape(B, 2 * dim)       # free row-major relabel back
    return packed[:, :dim], packed[:, dim:]


# ---------------------------------------------------------------------------
# Parameter init + references (for the correctness check)
# ---------------------------------------------------------------------------
def init_params(key, dim):
    """Deterministic synthetic parameter init (shapes match DADE_Self.__init__)."""
    ks = jax.random.split(key, 14)

    def lin(kw, kb, fan_in, fan_out):
        w = jax.random.normal(kw, (fan_in, fan_out), jnp.float32) * (1.0 / jnp.sqrt(fan_in))
        b = jax.random.normal(kb, (1, fan_out), jnp.float32) * 0.01
        return w, b

    we, be = lin(ks[0], ks[1], dim, dim)          # encoder Linear(dim, dim)
    wm1, bm1 = lin(ks[2], ks[3], dim, 128)        # mask Linear(dim, 128)
    wm2, bm2 = lin(ks[4], ks[5], 128, 64)         # mask Linear(128, 64)
    wm3, bm3 = lin(ks[6], ks[7], 64, dim)         # mask Linear(64, dim)
    wf1, bf1 = lin(ks[8], ks[9], dim, 128)        # feature Linear(dim, 128)
    wf2, bf2 = lin(ks[10], ks[11], 128, 64)       # feature Linear(128, 64)
    wf3, bf3 = lin(ks[12], ks[13], 64, dim)       # feature Linear(64, dim)
    return (we, be, wm1, bm1, wm2, bm2, wm3, bm3, wf1, bf1, wf2, bf2, wf3, bf3)


def reference_forward(x, params, compute_dtype=jnp.float32):
    """Plain-JAX reference (unfused). compute_dtype = matmul input dtype."""
    (we, be, wm1, bm1, wm2, bm2, wm3, bm3, wf1, bf1, wf2, bf2, wf3, bf3) = params

    def lin(a, w, b):
        return jnp.dot(a.astype(compute_dtype), w.astype(compute_dtype),
                       preferred_element_type=jnp.float32) + b

    h = _leaky_relu(lin(x, we, be))
    m = _leaky_relu(lin(h, wm1, bm1))
    m = _leaky_relu(lin(m, wm2, bm2))
    m = jax.nn.sigmoid(lin(m, wm3, bm3))
    f = _leaky_relu(lin(h, wf1, bf1))
    f = _leaky_relu(lin(f, wf2, bf2))
    f = jax.nn.sigmoid(lin(f, wf3, bf3))
    return m, f


if __name__ == "__main__":
    key = jax.random.PRNGKey(0)
    k_x, k_p = jax.random.split(key)

    dim = 32          # feature dimension (the `dim` arg of DADE_Self)
    batch = 256       # small tabular batch (row-packs to 64 kernel rows, 2 grid steps)

    x = jax.random.normal(k_x, (batch, dim), jnp.float32)
    params = init_params(k_p, dim)

    mask_out, feat_out = dade_self_forward(x, params)
    jax.block_until_ready((mask_out, feat_out))

    # precision-matched reference (bf16 matmul inputs, f32 accumulation)
    m_ref_bf, f_ref_bf = reference_forward(x, params, compute_dtype=jnp.bfloat16)
    assert jnp.allclose(mask_out, m_ref_bf, atol=2e-3, rtol=2e-3)
    assert jnp.allclose(feat_out, f_ref_bf, atol=2e-3, rtol=2e-3)

    # full-f32 reference (module semantics); looser tolerance due to bf16 matmuls
    m_ref, f_ref = reference_forward(x, params, compute_dtype=jnp.float32)
    assert jnp.allclose(mask_out, m_ref, atol=3e-2, rtol=3e-2)
    assert jnp.allclose(feat_out, f_ref, atol=3e-2, rtol=3e-2)

    print("KERNEL_OK")
</pallas_src>

<mosaic_0001>
module attributes {stable_mosaic.version = 11 : i64} {
  func.func @dade_self_kernel(%arg0: i32, %arg1: memref<32x128xbf16, #tpu.memory_space<vmem>>, %arg2: memref<128x128xbf16, #tpu.memory_space<vmem>>, %arg3: memref<1x128xf32, #tpu.memory_space<vmem>>, %arg4: memref<128x1024xbf16, #tpu.memory_space<vmem>>, %arg5: memref<1x1024xf32, #tpu.memory_space<vmem>>, %arg6: memref<1024x512xbf16, #tpu.memory_space<vmem>>, %arg7: memref<1x512xf32, #tpu.memory_space<vmem>>, %arg8: memref<512x256xbf16, #tpu.memory_space<vmem>>, %arg9: memref<1x256xf32, #tpu.memory_space<vmem>>, %arg10: memref<32x256xf32, #tpu.memory_space<vmem>>) attributes {dimension_semantics = [#tpu.dimension_semantics<parallel>], iteration_bounds = array<i64: 2>, scalar_prefetch = 0 : i64, scratch_operands = 0 : i64, tpu.core_type = #tpu.core_type<tc>, window_params = [{transform_indices = @transform_0, window_bounds = array<i64: 32, 128>}, {pipeline_mode = #tpu.pipeline_mode<synchronous>, transform_indices = @transform_1, window_bounds = array<i64: 128, 128>}, {pipeline_mode = #tpu.pipeline_mode<synchronous>, transform_indices = @transform_2, window_bounds = array<i64: 1, 128>}, {pipeline_mode = #tpu.pipeline_mode<synchronous>, transform_indices = @transform_3, window_bounds = array<i64: 128, 1024>}, {pipeline_mode = #tpu.pipeline_mode<synchronous>, transform_indices = @transform_4, window_bounds = array<i64: 1, 1024>}, {pipeline_mode = #tpu.pipeline_mode<synchronous>, transform_indices = @transform_5, window_bounds = array<i64: 1024, 512>}, {pipeline_mode = #tpu.pipeline_mode<synchronous>, transform_indices = @transform_6, window_bounds = array<i64: 1, 512>}, {pipeline_mode = #tpu.pipeline_mode<synchronous>, transform_indices = @transform_7, window_bounds = array<i64: 512, 256>}, {pipeline_mode = #tpu.pipeline_mode<synchronous>, transform_indices = @transform_8, window_bounds = array<i64: 1, 256>}, {transform_indices = @transform_9, window_bounds = array<i64: 32, 256>}]} {
    %c0 = arith.constant 0 : index
    %c0_0 = arith.constant 0 : index
    %0 = vector.load %arg1[%c0, %c0_0] : memref<32x128xbf16, #tpu.memory_space<vmem>>, vector<32x128xbf16>
    %c0_1 = arith.constant 0 : index
    %c0_2 = arith.constant 0 : index
    %1 = vector.load %arg2[%c0_1, %c0_2] : memref<128x128xbf16, #tpu.memory_space<vmem>>, vector<128x128xbf16>
    %cst = arith.constant dense<0.000000e+00> : vector<32x128xf32>
    %2 = tpu.matmul %0, %1, %cst {dimension_numbers = #tpu.dot_dimension_numbers<[1], [0], [0], [1], [0, 0, 1, 1], [], []>} : vector<32x128xbf16>, vector<128x128xbf16>, vector<32x128xf32> -> vector<32x128xf32>
    %c0_3 = arith.constant 0 : index
    %c0_4 = arith.constant 0 : index
    %3 = vector.load %arg3[%c0_3, %c0_4] : memref<1x128xf32, #tpu.memory_space<vmem>>, vector<1x128xf32>
    %4 = vector.broadcast %3 : vector<1x128xf32> to vector<32x128xf32>
    %5 = arith.addf %2, %4 : vector<32x128xf32>
    %cst_5 = arith.constant 0.000000e+00 : f32
    %6 = vector.broadcast %cst_5 : f32 to vector<32x128xf32>
    %7 = arith.cmpf oge, %5, %6 : vector<32x128xf32>
    %cst_6 = arith.constant 0.00999999977 : f32
    %8 = vector.broadcast %cst_6 : f32 to vector<32x128xf32>
    %9 = arith.mulf %8, %5 : vector<32x128xf32>
    %10 = arith.select %7, %5, %9 : vector<32x128xi1>, vector<32x128xf32>
    %11 = arith.truncf %10 : vector<32x128xf32> to vector<32x128xbf16>
    %c0_7 = arith.constant 0 : index
    %c0_8 = arith.constant 0 : index
    %12 = vector.load %arg4[%c0_7, %c0_8] : memref<128x1024xbf16, #tpu.memory_space<vmem>>, vector<128x1024xbf16>
    %cst_9 = arith.constant dense<0.000000e+00> : vector<32x1024xf32>
    %13 = tpu.matmul %11, %12, %cst_9 {dimension_numbers = #tpu.dot_dimension_numbers<[1], [0], [0], [1], [0, 0, 1, 1], [], []>} : vector<32x128xbf16>, vector<128x1024xbf16>, vector<32x1024xf32> -> vector<32x1024xf32>
    %c0_10 = arith.constant 0 : index
    %c0_11 = arith.constant 0 : index
    %14 = vector.load %arg5[%c0_10, %c0_11] : memref<1x1024xf32, #tpu.memory_space<vmem>>, vector<1x1024xf32>
    %15 = vector.broadcast %14 : vector<1x1024xf32> to vector<32x1024xf32>
    %16 = arith.addf %13, %15 : vector<32x1024xf32>
    %cst_12 = arith.constant 0.000000e+00 : f32
    %17 = vector.broadcast %cst_12 : f32 to vector<32x1024xf32>
    %18 = arith.cmpf oge, %16, %17 : vector<32x1024xf32>
    %cst_13 = arith.constant 0.00999999977 : f32
    %19 = vector.broadcast %cst_13 : f32 to vector<32x1024xf32>
    %20 = arith.mulf %19, %16 : vector<32x1024xf32>
    %21 = arith.select %18, %16, %20 : vector<32x1024xi1>, vector<32x1024xf32>
    %22 = arith.truncf %21 : vector<32x1024xf32> to vector<32x1024xbf16>
    %c0_14 = arith.constant 0 : index
    %c0_15 = arith.constant 0 : index
    %23 = vector.load %arg6[%c0_14, %c0_15] : memref<1024x512xbf16, #tpu.memory_space<vmem>>, vector<1024x512xbf16>
    %cst_16 = arith.constant dense<0.000000e+00> : vector<32x512xf32>
    %24 = tpu.matmul %22, %23, %cst_16 {dimension_numbers = #tpu.dot_dimension_numbers<[1], [0], [0], [1], [0, 0, 1, 1], [], []>} : vector<32x1024xbf16>, vector<1024x512xbf16>, vector<32x512xf32> -> vector<32x512xf32>
    %c0_17 = arith.constant 0 : index
    %c0_18 = arith.constant 0 : index
    %25 = vector.load %arg7[%c0_17, %c0_18] : memref<1x512xf32, #tpu.memory_space<vmem>>, vector<1x512xf32>
    %26 = vector.broadcast %25 : vector<1x512xf32> to vector<32x512xf32>
    %27 = arith.addf %24, %26 : vector<32x512xf32>
    %cst_19 = arith.constant 0.000000e+00 : f32
    %28 = vector.broadcast %cst_19 : f32 to vector<32x512xf32>
    %29 = arith.cmpf oge, %27, %28 : vector<32x512xf32>
    %cst_20 = arith.constant 0.00999999977 : f32
    %30 = vector.broadcast %cst_20 : f32 to vector<32x512xf32>
    %31 = arith.mulf %30, %27 : vector<32x512xf32>
    %32 = arith.select %29, %27, %31 : vector<32x512xi1>, vector<32x512xf32>
    %33 = arith.truncf %32 : vector<32x512xf32> to vector<32x512xbf16>
    %c0_21 = arith.constant 0 : index
    %c0_22 = arith.constant 0 : index
    %34 = vector.load %arg8[%c0_21, %c0_22] : memref<512x256xbf16, #tpu.memory_space<vmem>>, vector<512x256xbf16>
    %cst_23 = arith.constant dense<0.000000e+00> : vector<32x256xf32>
    %35 = tpu.matmul %33, %34, %cst_23 {dimension_numbers = #tpu.dot_dimension_numbers<[1], [0], [0], [1], [0, 0, 1, 1], [], []>} : vector<32x512xbf16>, vector<512x256xbf16>, vector<32x256xf32> -> vector<32x256xf32>
    %c0_24 = arith.constant 0 : index
    %c0_25 = arith.constant 0 : index
    %36 = vector.load %arg9[%c0_24, %c0_25] : memref<1x256xf32, #tpu.memory_space<vmem>>, vector<1x256xf32>
    %37 = vector.broadcast %36 : vector<1x256xf32> to vector<32x256xf32>
    %38 = arith.addf %35, %37 : vector<32x256xf32>
    %cst_26 = arith.constant 0.000000e+00 : f32
    %39 = vector.broadcast %cst_26 : f32 to vector<32x256xf32>
    %40 = arith.subf %39, %38 : vector<32x256xf32>
    %41 = math.exp %40 : vector<32x256xf32>
    %cst_27 = arith.constant 1.000000e+00 : f32
    %42 = vector.broadcast %cst_27 : f32 to vector<32x256xf32>
    %43 = arith.addf %42, %41 : vector<32x256xf32>
    %44 = tpu.reciprocal %43 {approx = true} : vector<32x256xf32> -> vector<32x256xf32>
    %c0_28 = arith.constant 0 : index
    %c0_29 = arith.constant 0 : index
    %45 = vector.load %arg10[%c0_28, %c0_29] : memref<32x256xf32, #tpu.memory_space<vmem>>, vector<32x256xf32>
    tpu.vector_store %arg10[%c0_28, %c0_29], %44 {strides = array<i32>} : memref<32x256xf32, #tpu.memory_space<vmem>>, vector<32x256xf32>,
    return
  }
  func.func @transform_0(%arg0: i32) -> (i32, i32) {
    %c0_i32 = arith.constant 0 : i32
    %c0_i32_0 = arith.constant 0 : i32
    return %arg0, %c0_i32 : i32, i32
  }
  func.func @transform_1(%arg0: i32) -> (i32, i32) {
    %c0_i32 = arith.constant 0 : i32
    %c0_i32_0 = arith.constant 0 : i32
    %c0_i32_1 = arith.constant 0 : i32
    return %c0_i32, %c0_i32_0 : i32, i32
  }
  func.func @transform_2(%arg0: i32) -> (i32, i32) {
    %c0_i32 = arith.constant 0 : i32
    %c0_i32_0 = arith.constant 0 : i32
    %c0_i32_1 = arith.constant 0 : i32
    return %c0_i32, %c0_i32_0 : i32, i32
  }
  func.func @transform_3(%arg0: i32) -> (i32, i32) {
    %c0_i32 = arith.constant 0 : i32
    %c0_i32_0 = arith.constant 0 : i32
    %c0_i32_1 = arith.constant 0 : i32
    return %c0_i32, %c0_i32_0 : i32, i32
  }
  func.func @transform_4(%arg0: i32) -> (i32, i32) {
    %c0_i32 = arith.constant 0 : i32
    %c0_i32_0 = arith.constant 0 : i32
    %c0_i32_1 = arith.constant 0 : i32
    return %c0_i32, %c0_i32_0 : i32, i32
  }
  func.func @transform_5(%arg0: i32) -> (i32, i32) {
    %c0_i32 = arith.constant 0 : i32
    %c0_i32_0 = arith.constant 0 : i32
    %c0_i32_1 = arith.constant 0 : i32
    return %c0_i32, %c0_i32_0 : i32, i32
  }
  func.func @transform_6(%arg0: i32) -> (i32, i32) {
    %c0_i32 = arith.constant 0 : i32
    %c0_i32_0 = arith.constant 0 : i32
    %c0_i32_1 = arith.constant 0 : i32
    return %c0_i32, %c0_i32_0 : i32, i32
  }
  func.func @transform_7(%arg0: i32) -> (i32, i32) {
    %c0_i32 = arith.constant 0 : i32
    %c0_i32_0 = arith.constant 0 : i32
    %c0_i32_1 = arith.constant 0 : i32
    return %c0_i32, %c0_i32_0 : i32, i32
  }
  func.func @transform_8(%arg0: i32) -> (i32, i32) {
    %c0_i32 = arith.constant 0 : i32
    %c0_i32_0 = arith.constant 0 : i32
    %c0_i32_1 = arith.constant 0 : i32
    return %c0_i32, %c0_i32_0 : i32, i32
  }
  func.func @transform_9(%arg0: i32) -> (i32, i32) {
    %c0_i32 = arith.constant 0 : i32
    %c0_i32_0 = arith.constant 0 : i32
    return %arg0, %c0_i32 : i32, i32
  }
}

</mosaic_0001>

<llo_original>
// kernel: tpu_custom_call.1
$region0: #{tpu_custom_call.1}
  #allocation0 [shape = 'u32[]', space=smem, size = 0x4, offset = 0x4, fixed_abs, tag = 'smem constant byte address 0x4 - core index']
  #allocation1 [shape = 'u32[144,128]{1,0:T(1,128)}', space=vmem, size = 0x12000, scoped, tag = 'internal scratch']
  %s0 = inlined_call_operand.hbm [shape: bf16[64,128], index: 0, kind: input, shape index: {}]
  %s1 = inlined_call_operand.hbm [shape: bf16[128,128], index: 1, kind: input, shape index: {}]
  %s2 = inlined_call_operand.vmem [shape: f32[1,128], index: 2, kind: input, shape index: {}]
  %s3 = inlined_call_operand.hbm [shape: bf16[128,1024], index: 3, kind: input, shape index: {}]
  %s4 = inlined_call_operand.hbm [shape: f32[1,1024], index: 4, kind: input, shape index: {}]
  %s5 = inlined_call_operand.hbm [shape: bf16[1024,512], index: 5, kind: input, shape index: {}]
  %s6 = inlined_call_operand.vmem [shape: f32[1,512], index: 6, kind: input, shape index: {}]
  %s7 = inlined_call_operand.hbm [shape: bf16[512,256], index: 7, kind: input, shape index: {}]
  %s8 = inlined_call_operand.vmem [shape: f32[1,256], index: 8, kind: input, shape index: {}]
  %s9 = inlined_call_operand.hbm [shape: f32[64,256], index: 9, kind: output, shape index: {}]
  %s10 = sld [smem:[#allocation0]]
  $region93: #{tpu_custom_call.1} parent=0
    _
  %s12 = ssub.s32 1, %s10
  %s13 = scalar_select 0, %s12, %s10
  $region1: #{tpu_custom_call.1} parent=0
    #allocation2 [shape = 'u8[16384]{0}', space=vmem, size = 0x4000, scoped, tag = 'input window, operand 0']
    #allocation3 [shape = 's32[2]{0}', space=sflag, size = 0x8, scoped, tag = 'scoped memory for tpu_custom_call.1']
    #allocation4 [shape = 's32[2]{0}', space=sflag, size = 0x8, scoped, tag = 'scoped memory for tpu_custom_call.1']
    #allocation5 [shape = 'u8[32768]{0}', space=vmem, size = 0x8000, scoped, tag = 'input window, operand 1, single buffered']
    #allocation6 [shape = 's32[1]{0}', space=sflag, size = 0x4, scoped, tag = 'scoped memory for tpu_custom_call.1']
    #allocation7 [shape = 'u8[262144]{0}', space=vmem, size = 0x40000, scoped, tag = 'input window, operand 3, single buffered']
    #allocation8 [shape = 'u8[4096]{0}', space=vmem, size = 0x1000, scoped, tag = 'input window, operand 4, single buffered']
    #allocation9 [shape = 's32[1]{0}', space=sflag, size = 0x4, scoped, tag = 'scoped memory for tpu_custom_call.1']
    #allocation10 [shape = 'u8[1048576]{0}', space=vmem, size = 0x100000, scoped, tag = 'input window, operand 5, single buffered']
    #allocation11 [shape = 'u8[262144]{0}', space=vmem, size = 0x40000, scoped, tag = 'input window, operand 7, single buffered']
    #allocation12 [shape = 's32[1]{0}', space=sflag, size = 0x4, scoped, tag = 'scoped memory for tpu_custom_call.1']
    #allocation13 [shape = 'u8[65536]{0}', space=vmem, size = 0x10000, scoped, tag = 'output window, operand 0']
    %14 = vsyncpa [#allocation3], 0
    %s15 = scalar_lea.sflag [#allocation3], 1
    %16 = vsyncpa %s15, 0
    %17 = vsyncpa [#allocation6], 0
    %18 = vsyncpa [#allocation9], 0
    %19 = vsyncpa [#allocation12], 0
    %20 = vsyncpa [#allocation4], 0
    %s21 = scalar_lea.sflag [#allocation4], 1
    %22 = vsyncpa %s21, 0
    loop: start=0, step=1, limit=4
    $region2: #{tpu_custom_call.1} parent=1 // loop_pre_header
      _
    $region3: #{tpu_custom_call.1} parent=1 // loop_header
      %s24 = sphi 0, %s28
      %p25 = scmp.ge.s32.totalorder %s24, 4
      %s34 = sphi 0, %s36
      %s37 = sphi 0, %s34
      %s38 = sphi 0, %s37
      %s54 = sphi 0, %s38
      %s58 = sphi 0, %s58
      %s60 = sphi 0, %s58
      %s61 = sphi 0, %s60
      %s75 = sphi 0, %s61
      %s79 = sphi 0, %s79
      %s81 = sphi 0, %s79
      %s82 = sphi 0, %s81
      %s96 = sphi 0, %s82
      %s100 = sphi 0, %s100
      %s102 = sphi 0, %s100
      %s103 = sphi 0, %s102
      %s117 = sphi 0, %s103
      %s121 = sphi 0, %s121
      %s123 = sphi 0, %s121
      %s124 = sphi 0, %s123
      %s138 = sphi 0, %s124
      %s142 = sphi 0, %s142
      %s144 = sphi 0, %s142
      %s145 = sphi 0, %s144
      %s159 = sphi 0, %s145
      %s163 = sphi 0, %s163
      %s165 = sphi 0, %s163
      %s166 = sphi 0, %s165
      %s180 = sphi 0, %s166
      %s184 = sphi 0, %s184
      %s186 = sphi 0, %s184
      %s187 = sphi 0, %s186
      %s201 = sphi 0, %s187
      %s205 = sphi 0, %s205
      %s207 = sphi 0, %s205
      %s208 = sphi 0, %s207
      %s222 = sphi 0, %s208
      %s228 = sphi 0, %s230
      %s231 = sphi 0, %s228
      %s232 = sphi 0, %s231
      %s248 = sphi 0, %s232
    $region4: #{tpu_custom_call.1} parent=1 // loop_header_branch
      %27 = sbr.rel (%p25) target = $region8
    $region5: #{tpu_custom_call.1} parent=1 // loop_body
      %s29 = ssub.s32 %s24, 1
      %s30 = ssub.s32 %s24, 2
      %s31 = sadd.s32 %s24, 1
      %s32 = ssub.s32 %s24, %s31
      %p33 = scmp.eq.s32.totalorder %s32, 0
      %s35 = sadd.s32 %s34, 1
      %s36 = scalar_select %p33, %s34, %s35
      %p39 = pneg %p33
      %p40 = scmp.eq.s32.totalorder %s24, 1
      %p41 = por %p39, %p40
      %p42 = scmp.ne.s32.totalorder %s34, %s37
      %p43 = scmp.eq.s32.totalorder %s24, 0
      %p44 = por %p42, %p43
      %p45 = scmp.ne.s32.totalorder %s34, %s37
      %p46 = scmp.eq.s32.totalorder %s29, 1
      %p47 = por %p45, %p46
      %p48 = scmp.ne.s32.totalorder %s37, %s38
      %p49 = scmp.eq.s32.totalorder %s29, 0
      %p50 = por %p48, %p49
      %p51 = scmp.ne.s32.totalorder %s37, %s38
      %p52 = scmp.eq.s32.totalorder %s30, 1
      %p53 = por %p51, %p52
      %p55 = scmp.ne.s32.totalorder %s38, %s54
      %p56 = scmp.eq.s32.totalorder %s30, 0
      %p57 = por %p55, %p56
      %s59 = sadd.s32 %s58, 1
      %p62 = scmp.eq.s32.totalorder %s24, 1
      %p63 = scmp.ne.s32.totalorder %s58, %s60
      %p64 = scmp.eq.s32.totalorder %s24, 0
      %p65 = por %p63, %p64
      %p66 = scmp.ne.s32.totalorder %s58, %s60
      %p67 = scmp.eq.s32.totalorder %s29, 1
      %p68 = por %p66, %p67
      %p69 = scmp.ne.s32.totalorder %s60, %s61
      %p70 = scmp.eq.s32.totalorder %s29, 0
      %p71 = por %p69, %p70
      %p72 = scmp.ne.s32.totalorder %s60, %s61
      %p73 = scmp.eq.s32.totalorder %s30, 1
      %p74 = por %p72, %p73
      %p76 = scmp.ne.s32.totalorder %s61, %s75
      %p77 = scmp.eq.s32.totalorder %s30, 0
      %p78 = por %p76, %p77
      %s80 = sadd.s32 %s79, 1
      %p83 = scmp.eq.s32.totalorder %s24, 1
      %p84 = scmp.ne.s32.totalorder %s79, %s81
      %p85 = scmp.eq.s32.totalorder %s24, 0
      %p86 = por %p84, %p85
      %p87 = scmp.ne.s32.totalorder %s79, %s81
      %p88 = scmp.eq.s32.totalorder %s29, 1
      %p89 = por %p87, %p88
      %p90 = scmp.ne.s32.totalorder %s81, %s82
      %p91 = scmp.eq.s32.totalorder %s29, 0
      %p92 = por %p90, %p91
      %p93 = scmp.ne.s32.totalorder %s81, %s82
      %p94 = scmp.eq.s32.totalorder %s30, 1
      %p95 = por %p93, %p94
      %p97 = scmp.ne.s32.totalorder %s82, %s96
      %p98 = scmp.eq.s32.totalorder %s30, 0
      %p99 = por %p97, %p98
      %s101 = sadd.s32 %s100, 1
      %p104 = scmp.eq.s32.totalorder %s24, 1
      %p105 = scmp.ne.s32.totalorder %s100, %s102
      %p106 = scmp.eq.s32.totalorder %s24, 0
      %p107 = por %p105, %p106
      %p108 = scmp.ne.s32.totalorder %s100, %s102
      %p109 = scmp.eq.s32.totalorder %s29, 1
      %p110 = por %p108, %p109
      %p111 = scmp.ne.s32.totalorder %s102, %s103
      %p112 = scmp.eq.s32.totalorder %s29, 0
      %p113 = por %p111, %p112
      %p114 = scmp.ne.s32.totalorder %s102, %s103
      %p115 = scmp.eq.s32.totalorder %s30, 1
      %p116 = por %p114, %p115
      %p118 = scmp.ne.s32.totalorder %s103, %s117
      %p119 = scmp.eq.s32.totalorder %s30, 0
      %p120 = por %p118, %p119
      %s122 = sadd.s32 %s121, 1
      %p125 = scmp.eq.s32.totalorder %s24, 1
      %p126 = scmp.ne.s32.totalorder %s121, %s123
      %p127 = scmp.eq.s32.totalorder %s24, 0
      %p128 = por %p126, %p127
      %p129 = scmp.ne.s32.totalorder %s121, %s123
      %p130 = scmp.eq.s32.totalorder %s29, 1
      %p131 = por %p129, %p130
      %p132 = scmp.ne.s32.totalorder %s123, %s124
      %p133 = scmp.eq.s32.totalorder %s29, 0
      %p134 = por %p132, %p133
      %p135 = scmp.ne.s32.totalorder %s123, %s124
      %p136 = scmp.eq.s32.totalorder %s30, 1
      %p137 = por %p135, %p136
      %p139 = scmp.ne.s32.totalorder %s124, %s138
      %p140 = scmp.eq.s32.totalorder %s30, 0
      %p141 = por %p139, %p140
      %s143 = sadd.s32 %s142, 1
      %p146 = scmp.eq.s32.totalorder %s24, 1
      %p147 = scmp.ne.s32.totalorder %s142, %s144
      %p148 = scmp.eq.s32.totalorder %s24, 0
      %p149 = por %p147, %p148
      %p150 = scmp.ne.s32.totalorder %s142, %s144
      %p151 = scmp.eq.s32.totalorder %s29, 1
      %p152 = por %p150, %p151
      %p153 = scmp.ne.s32.totalorder %s144, %s145
      %p154 = scmp.eq.s32.totalorder %s29, 0
      %p155 = por %p153, %p154
      %p156 = scmp.ne.s32.totalorder %s144, %s145
      %p157 = scmp.eq.s32.totalorder %s30, 1
      %p158 = por %p156, %p157
      %p160 = scmp.ne.s32.totalorder %s145, %s159
      %p161 = scmp.eq.s32.totalorder %s30, 0
      %p162 = por %p160, %p161
      %s164 = sadd.s32 %s163, 1
      %p167 = scmp.eq.s32.totalorder %s24, 1
      %p168 = scmp.ne.s32.totalorder %s163, %s165
      %p169 = scmp.eq.s32.totalorder %s24, 0
      %p170 = por %p168, %p169
      %p171 = scmp.ne.s32.totalorder %s163, %s165
      %p172 = scmp.eq.s32.totalorder %s29, 1
      %p173 = por %p171, %p172
      %p174 = scmp.ne.s32.totalorder %s165, %s166
      %p175 = scmp.eq.s32.totalorder %s29, 0
      %p176 = por %p174, %p175
      %p177 = scmp.ne.s32.totalorder %s165, %s166
      %p178 = scmp.eq.s32.totalorder %s30, 1
      %p179 = por %p177, %p178
      %p181 = scmp.ne.s32.totalorder %s166, %s180
      %p182 = scmp.eq.s32.totalorder %s30, 0
      %p183 = por %p181, %p182
      %s185 = sadd.s32 %s184, 1
      %p188 = scmp.eq.s32.totalorder %s24, 1
      %p189 = scmp.ne.s32.totalorder %s184, %s186
      %p190 = scmp.eq.s32.totalorder %s24, 0
      %p191 = por %p189, %p190
      %p192 = scmp.ne.s32.totalorder %s184, %s186
      %p193 = scmp.eq.s32.totalorder %s29, 1
      %p194 = por %p192, %p193
      %p195 = scmp.ne.s32.totalorder %s186, %s187
      %p196 = scmp.eq.s32.totalorder %s29, 0
      %p197 = por %p195, %p196
      %p198 = scmp.ne.s32.totalorder %s186, %s187
      %p199 = scmp.eq.s32.totalorder %s30, 1
      %p200 = por %p198, %p199
      %p202 = scmp.ne.s32.totalorder %s187, %s201
      %p203 = scmp.eq.s32.totalorder %s30, 0
      %p204 = por %p202, %p203
      %s206 = sadd.s32 %s205, 1
      %p209 = scmp.eq.s32.totalorder %s24, 1
      %p210 = scmp.ne.s32.totalorder %s205, %s207
      %p211 = scmp.eq.s32.totalorder %s24, 0
      %p212 = por %p210, %p211
      %p213 = scmp.ne.s32.totalorder %s205, %s207
      %p214 = scmp.eq.s32.totalorder %s29, 1
      %p215 = por %p213, %p214
      %p216 = scmp.ne.s32.totalorder %s207, %s208
      %p217 = scmp.eq.s32.totalorder %s29, 0
      %p218 = por %p216, %p217
      %p219 = scmp.ne.s32.totalorder %s207, %s208
      %p220 = scmp.eq.s32.totalorder %s30, 1
      %p221 = por %p219, %p220
      %p223 = scmp.ne.s32.totalorder %s208, %s222
      %p224 = scmp.eq.s32.totalorder %s30, 0
      %p225 = por %p223, %p224
      %s226 = ssub.s32 %s24, %s31
      %p227 = scmp.eq.s32.totalorder %s226, 0
      %s229 = sadd.s32 %s228, 1
      %s230 = scalar_select %p227, %s228, %s229
      %p233 = pneg %p227
      %p234 = scmp.eq.s32.totalorder %s24, 1
      %p235 = por %p233, %p234
      %p236 = scmp.ne.s32.totalorder %s228, %s231
      %p237 = scmp.eq.s32.totalorder %s24, 0
      %p238 = por %p236, %p237
      %p239 = scmp.ne.s32.totalorder %s228, %s231
      %p240 = scmp.eq.s32.totalorder %s29, 1
      %p241 = por %p239, %p240
      %p242 = scmp.ne.s32.totalorder %s231, %s232
      %p243 = scmp.eq.s32.totalorder %s29, 0
      %p244 = por %p242, %p243
      %p245 = scmp.ne.s32.totalorder %s231, %s232
      %p246 = scmp.eq.s32.totalorder %s30, 1
      %p247 = por %p245, %p246
      %p249 = scmp.ne.s32.totalorder %s232, %s248
      %p250 = scmp.eq.s32.totalorder %s30, 0
      %p251 = por %p249, %p250
      %p252 = scmp.le.s32.totalorder 1, %s24
      %p253 = scmp.lt.s32.totalorder %s24, 3
      %p254 = pnand %p252, %p253
      %p255 = pneg %p254
      // Predicated region
      $region9: #{tpu_custom_call.1} parent=5 // pred_check
        _
      $region10: #{tpu_custom_call.1} parent=5 // pred_check_branch
        %257 = sbr.rel (%p254) target = $region12
      $region11: #{tpu_custom_call.1} parent=5 // pred_region
        %s258 = ssub.s32 %s24, 1
        // Predicated region
        $region13: #{tpu_custom_call.1} parent=11 // pred_check
          %p259 = pneg %p71
        $region14: #{tpu_custom_call.1} parent=11 // pred_check_branch
          %261 = sbr.rel (%p259) target = $region16
        $region15: #{tpu_custom_call.1} parent=11 // pred_region
          %s263 = ssub.s32 1024, 1024
          %264 = vsyncadd [#allocation6], %s263
          %s265 = sshll.u32 [#allocation5], 4
          %s266 = int_to_ptr.vmem [resolvable:$true] %s265
          %271 = dma.hbm_to_vmem [thread:$0]  %s1, 1024, %s266, [#allocation6], 64, 64, 4
        $region16: #{tpu_custom_call.1} parent=11 // pred_fallthru
          _
        // Predicated region
        $region17: #{tpu_custom_call.1} parent=11 // pred_check
          %p272 = pneg %p92
        $region18: #{tpu_custom_call.1} parent=11 // pred_check_branch
          %274 = sbr.rel (%p272) target = $region20
        $region19: #{tpu_custom_call.1} parent=11 // pred_region
          _
        $region20: #{tpu_custom_call.1} parent=11 // pred_fallthru
          _
        // Predicated region
        $region21: #{tpu_custom_call.1} parent=11 // pred_check
          %p275 = pneg %p113
        $region22: #{tpu_custom_call.1} parent=11 // pred_check_branch
          %277 = sbr.rel (%p275) target = $region24
        $region23: #{tpu_custom_call.1} parent=11 // pred_region
          %s279 = ssub.s32 8192, 8192
          %280 = vsyncadd [#allocation6], %s279
          %s281 = sshll.u32 [#allocation7], 4
          %s282 = int_to_ptr.vmem [resolvable:$true] %s281
          %287 = dma.hbm_to_vmem [thread:$0]  %s3, 8192, %s282, [#allocation6], 512, 512, 32
        $region24: #{tpu_custom_call.1} parent=11 // pred_fallthru
          _
        // Predicated region
        $region25: #{tpu_custom_call.1} parent=11 // pred_check
          %p288 = pneg %p134
        $region26: #{tpu_custom_call.1} parent=11 // pred_check_branch
          %290 = sbr.rel (%p288) target = $region28
        $region27: #{tpu_custom_call.1} parent=11 // pred_region
          %s292 = ssub.s32 128, 128
          %293 = vsyncadd [#allocation9], %s292
          %s295 = sshll.u32 [#allocation8], 4
          %s296 = int_to_ptr.vmem [resolvable:$true] %s295
          %298 = dma.hbm_to_vmem [thread:$0]  %s4, 128, %s296, [#allocation9]
        $region28: #{tpu_custom_call.1} parent=11 // pred_fallthru
          _
        // Predicated region
        $region29: #{tpu_custom_call.1} parent=11 // pred_check
          %p299 = pneg %p155
        $region30: #{tpu_custom_call.1} parent=11 // pred_check_branch
          %301 = sbr.rel (%p299) target = $region32
        $region31: #{tpu_custom_call.1} parent=11 // pred_region
          %s303 = ssub.s32 32768, 32768
          %304 = vsyncadd [#allocation9], %s303
          %s305 = sshll.u32 [#allocation10], 4
          %s306 = int_to_ptr.vmem [resolvable:$true] %s305
          %311 = dma.hbm_to_vmem [thread:$0]  %s5, 32768, %s306, [#allocation9], 256, 256, 16
        $region32: #{tpu_custom_call.1} parent=11 // pred_fallthru
          _
        // Predicated region
        $region33: #{tpu_custom_call.1} parent=11 // pred_check
          %p312 = pneg %p176
        $region34: #{tpu_custom_call.1} parent=11 // pred_check_branch
          %314 = sbr.rel (%p312) target = $region36
        $region35: #{tpu_custom_call.1} parent=11 // pred_region
          _
        $region36: #{tpu_custom_call.1} parent=11 // pred_fallthru
          _
        // Predicated region
        $region37: #{tpu_custom_call.1} parent=11 // pred_check
          %p315 = pneg %p197
        $region38: #{tpu_custom_call.1} parent=11 // pred_check_branch
          %317 = sbr.rel (%p315) target = $region40
        $region39: #{tpu_custom_call.1} parent=11 // pred_region
          %s319 = ssub.s32 8192, 8192
          %320 = vsyncadd [#allocation12], %s319
          %s321 = sshll.u32 [#allocation11], 4
          %s322 = int_to_ptr.vmem [resolvable:$true] %s321
          %327 = dma.hbm_to_vmem [thread:$0]  %s7, 8192, %s322, [#allocation12], 128, 128, 8
        $region40: #{tpu_custom_call.1} parent=11 // pred_fallthru
          _
        // Predicated region
        $region41: #{tpu_custom_call.1} parent=11 // pred_check
          %p328 = pneg %p218
        $region42: #{tpu_custom_call.1} parent=11 // pred_check_branch
          %330 = sbr.rel (%p328) target = $region44
        $region43: #{tpu_custom_call.1} parent=11 // pred_region
          _
        $region44: #{tpu_custom_call.1} parent=11 // pred_fallthru
          _
      $region12: #{tpu_custom_call.1} parent=5 // pred_fallthru
        _
      %p331 = scmp.lt.s32.totalorder %s24, 2
      // Predicated region
      $region45: #{tpu_custom_call.1} parent=5 // pred_check
        %p332 = pneg %p331
      $region46: #{tpu_custom_call.1} parent=5 // pred_check_branch
        %334 = sbr.rel (%p332) target = $region48
      $region47: #{tpu_custom_call.1} parent=5 // pred_region
        // Predicated region
        $region49: #{tpu_custom_call.1} parent=47 // pred_check
          %p335 = pneg %p44
        $region50: #{tpu_custom_call.1} parent=47 // pred_check_branch
          %337 = sbr.rel (%p335) target = $region52
        $region51: #{tpu_custom_call.1} parent=47 // pred_region
          %s338 = sand.u32 %s34, 1
          %s339 = scalar_lea.sflag [#allocation3], %s338
          %s340 = sand.u32 %s34, 1
          %s341 = smul.addr %s340, 16
          %s342 = scalar_lea.vmem [#allocation2], %s341
          %s343 = smul.u32 4, %s24
          %s345 = ssub.s32 256, 256
          %346 = vsyncadd %s339, %s345
          %s347 = smul.addr %s343, 64
          %s348 = scalar_lea.hbm %s0, %s347
          %s349 = sshll.u32 %s342, 4
          %s350 = int_to_ptr.vmem [resolvable:$true] %s349
          %355 = dma.hbm_to_vmem [thread:$0]  %s348, 256, %s350, %s339, 64, 64, 4
        $region52: #{tpu_custom_call.1} parent=47 // pred_fallthru
          _
      $region48: #{tpu_custom_call.1} parent=5 // pred_fallthru
        _
      %p356 = scmp.le.s32.totalorder 1, %s24
      %p357 = scmp.lt.s32.totalorder %s24, 3
      %p358 = pnand %p356, %p357
      %p359 = pneg %p358
      // Predicated region
      $region53: #{tpu_custom_call.1} parent=5 // pred_check
        _
      $region54: #{tpu_custom_call.1} parent=5 // pred_check_branch
        %361 = sbr.rel (%p358) target = $region56
      $region55: #{tpu_custom_call.1} parent=5 // pred_region
        %s362 = ssub.s32 %s24, 1
        %s363 = sand.u32 %s37, 1
        %s364 = scalar_lea.sflag [#allocation3], %s363
        %s365 = sand.u32 %s37, 1
        %s366 = smul.addr %s365, 16
        %s367 = scalar_lea.vmem [#allocation2], %s366
        // Predicated region
        $region57: #{tpu_custom_call.1} parent=55 // pred_check
          %p368 = pneg %p50
        $region58: #{tpu_custom_call.1} parent=55 // pred_check_branch
          %370 = sbr.rel (%p368) target = $region60
        $region59: #{tpu_custom_call.1} parent=55 // pred_region
          %371 = dma.done %s364, 256
        $region60: #{tpu_custom_call.1} parent=55 // pred_fallthru
          _
        // Predicated region
        $region61: #{tpu_custom_call.1} parent=55 // pred_check
          %p372 = pneg %p71
        $region62: #{tpu_custom_call.1} parent=55 // pred_check_branch
          %374 = sbr.rel (%p372) target = $region64
        $region63: #{tpu_custom_call.1} parent=55 // pred_region
          %375 = dma.done [#allocation6], 1024
        $region64: #{tpu_custom_call.1} parent=55 // pred_fallthru
          _
        // Predicated region
        $region65: #{tpu_custom_call.1} parent=55 // pred_check
          %p376 = pneg %p113
        $region66: #{tpu_custom_call.1} parent=55 // pred_check_branch
          %378 = sbr.rel (%p376) target = $region68
        $region67: #{tpu_custom_call.1} parent=55 // pred_region
          %379 = dma.done [#allocation6], 8192
        $region68: #{tpu_custom_call.1} parent=55 // pred_fallthru
          _
        // Predicated region
        $region69: #{tpu_custom_call.1} parent=55 // pred_check
          %p380 = pneg %p134
        $region70: #{tpu_custom_call.1} parent=55 // pred_check_branch
          %382 = sbr.rel (%p380) target = $region72
        $region71: #{tpu_custom_call.1} parent=55 // pred_region
          %383 = dma.done [#allocation9], 128
        $region72: #{tpu_custom_call.1} parent=55 // pred_fallthru
          _
        // Predicated region
        $region73: #{tpu_custom_call.1} parent=55 // pred_check
          %p384 = pneg %p155
        $region74: #{tpu_custom_call.1} parent=55 // pred_check_branch
          %386 = sbr.rel (%p384) target = $region76
        $region75: #{tpu_custom_call.1} parent=55 // pred_region
          %387 = dma.done [#allocation9], 32768
        $region76: #{tpu_custom_call.1} parent=55 // pred_fallthru
          _
        // Predicated region
        $region77: #{tpu_custom_call.1} parent=55 // pred_check
          %p388 = pneg %p197
        $region78: #{tpu_custom_call.1} parent=55 // pred_check_branch
          %390 = sbr.rel (%p388) target = $region80
        $region79: #{tpu_custom_call.1} parent=55 // pred_region
          %391 = dma.done [#allocation12], 8192
        $region80: #{tpu_custom_call.1} parent=55 // pred_fallthru
          _
        %s392 = sand.u32 %s37, 1
        %s393 = scalar_lea.sflag [#allocation3], %s392
        %s394 = sand.u32 %s37, 1
        %s395 = smul.addr %s394, 16
        %s396 = scalar_lea.vmem [#allocation2], %s395
        %p397 = pneg %p50
        %p398 = pneg %p47
        %p399 = pneg %p71
        %p400 = pneg %p68
        %p401 = pneg %p92
        %p402 = pneg %p89
        %p403 = pneg %p113
        %p404 = pneg %p110
        %p405 = pneg %p134
        %p406 = pneg %p131
        %p407 = pneg %p155
        %p408 = pneg %p152
        %p409 = pneg %p176
        %p410 = pneg %p173
        %p411 = pneg %p197
        %p412 = pneg %p194
        %p413 = pneg %p218
        %p414 = pneg %p215
        %p415 = pneg %p244
        %p416 = pneg %p241
        %s417 = sand.u32 %s231, 1
        %s418 = scalar_lea.sflag [#allocation4], %s417
        %s419 = sand.u32 %s231, 1
        %s420 = smul.addr %s419, 64
        %s421 = scalar_lea.vmem [#allocation13], %s420
        %s422 = smul.u32 4, %s29
        %s423 = smul.u32 4, %s29
        %v425 = vld [vmem:[%s367] sm:$0xf]
        %v426 = vld [vmem:[%s367 + $0x4] sm:$0xf]
        %v427 = vld [vmem:[%s367 + $0x8] sm:$0xf]
        %v428 = vld [vmem:[%s367 + $0xc] sm:$0xf]
        %v429 = vld [vmem:[#allocation5] sm:$0xf]
        %v430 = vld [vmem:[#allocation5 + $0x4] sm:$0xf]
        %v431 = vld [vmem:[#allocation5 + $0x8] sm:$0xf]
        %v432 = vld [vmem:[#allocation5 + $0xc] sm:$0xf]
        %v433 = vld [vmem:[#allocation5 + $0x10] sm:$0xf]
        %v434 = vld [vmem:[#allocation5 + $0x14] sm:$0xf]
        %v435 = vld [vmem:[#allocation5 + $0x18] sm:$0xf]
        %v436 = vld [vmem:[#allocation5 + $0x1c] sm:$0xf]
        %v437 = vld [vmem:[#allocation5 + $0x20] sm:$0xf]
        %v438 = vld [vmem:[#allocation5 + $0x24] sm:$0xf]
        %v439 = vld [vmem:[#allocation5 + $0x28] sm:$0xf]
        %v440 = vld [vmem:[#allocation5 + $0x2c] sm:$0xf]
        %v441 = vld [vmem:[#allocation5 + $0x30] sm:$0xf]
        %v442 = vld [vmem:[#allocation5 + $0x34] sm:$0xf]
        %v443 = vld [vmem:[#allocation5 + $0x38] sm:$0xf]
        %v444 = vld [vmem:[#allocation5 + $0x3c] sm:$0xf]
        %v445 = vld [vmem:[%s2] sm:$0x1]
        %v447 = vlaneseq
        %v448 = vshrl.u32 %v447, 7
        %v449 = vsub.s32 0, %v448
        %v450 = vrot.slane %v445, %v449
        %v456 = vunpack.c.l.b16 %v425
        %v457 = vunpack.c.l.b16 %v426
        %v458 = vunpack.c.l.b16 %v427
        %v459 = vunpack.c.l.b16 %v428
        %v460 = vpack.c.b16 %v457, %v456
        %v461 = vpack.c.b16 %v459, %v458
        %v480 = vunpack.c.l.b16 %v429
        %v481 = vunpack.c.l.b16 %v430
        %v482 = vunpack.c.l.b16 %v431
        %v483 = vunpack.c.l.b16 %v432
        %v484 = vunpack.c.l.b16 %v433
        %v485 = vunpack.c.l.b16 %v434
        %v486 = vunpack.c.l.b16 %v435
        %v487 = vunpack.c.l.b16 %v436
        %v488 = vunpack.c.l.b16 %v437
        %v489 = vunpack.c.l.b16 %v438
        %v490 = vunpack.c.l.b16 %v439
        %v491 = vunpack.c.l.b16 %v440
        %v492 = vunpack.c.l.b16 %v441
        %v493 = vunpack.c.l.b16 %v442
        %v494 = vunpack.c.l.b16 %v443
        %v495 = vunpack.c.l.b16 %v444
        %v496 = vpack.c.b16 %v481, %v480
        %v497 = vpack.c.b16 %v483, %v482
        %v498 = vpack.c.b16 %v485, %v484
        %v499 = vpack.c.b16 %v487, %v486
        %v500 = vpack.c.b16 %v489, %v488
        %v501 = vpack.c.b16 %v491, %v490
        %v502 = vpack.c.b16 %v493, %v492
        %v503 = vpack.c.b16 %v495, %v494
        %512 = vmatprep.subr.bf16.mxu0 0
        %513 = vmatpush1.bf16.msra.mxu0 %v503
        %514 = vmatprep.subr.bf16.mxu0 0
        %515 = vmatpush1.bf16.msra.mxu0 %v502
        %516 = vmatprep.subr.bf16.mxu0 0
        %517 = vmatpush1.bf16.msra.mxu0 %v501
        %518 = vmatprep.subr.bf16.mxu0 0
        %519 = vmatpush1.bf16.msra.mxu0 %v500
        %520 = vmatprep.subr.bf16.mxu0 0
        %521 = vmatpush1.bf16.msra.mxu0 %v499
        %522 = vmatprep.subr.bf16.mxu0 0
        %523 = vmatpush1.bf16.msra.mxu0 %v498
        %524 = vmatprep.subr.bf16.mxu0 0
        %525 = vmatpush1.bf16.msra.mxu0 %v497
        %526 = vmatprep.subr.bf16.mxu0 0
        %527 = vmatpush1.bf16.msra.mxu0 %v496
        %528 = vmatprep.subr.bf16.mxu0 0
        %529 = vmatpush2.bf16.msra.mxu0 0
        %530 = vmatprep.subr.bf16.mxu0 0
        %531 = vmatpush2.bf16.msra.mxu0 0
        %532 = vmatprep.subr.bf16.mxu0 0
        %533 = vmatpush2.bf16.msra.mxu0 0
        %534 = vmatprep.subr.bf16.mxu0 0
        %535 = vmatpush2.bf16.msra.mxu0 0
        %536 = vmatprep.subr.bf16.mxu0 0
        %537 = vmatpush2.bf16.msra.mxu0 0
        %538 = vmatprep.subr.bf16.mxu0 0
        %539 = vmatpush2.bf16.msra.mxu0 0
        %540 = vmatprep.subr.bf16.mxu0 0
        %541 = vmatpush2.bf16.msra.mxu0 0
        %542 = vmatprep.subr.bf16.mxu0 0
        %543 = vmatpush2.bf16.msra.mxu0 0
        %544 = vmatprep.mubr.bf16.mxu0 0
        %545 = vmatmul.mubr.bf16.gmra.mxu0 %v460
        %v546 = vpop.f32.mrf.mxu0
        %v547 = vadd.f32 %v450, %v546
        %v548 = vpop.f32.mrf.mxu0
        %v549 = vpop.f32.mrf.mxu0
        %v550 = vadd.f32 %v450, %v549
        %v551 = vpop.f32.mrf.mxu0
        %552 = vmatprep.mubr.bf16.mxu0 0
        %553 = vmatmul.mubr.bf16.gmra.mxu0 %v461
        %v554 = vpop.f32.mrf.mxu0
        %v555 = vadd.f32 %v450, %v554
        %v556 = vpop.f32.mrf.mxu0
        %v557 = vpop.f32.mrf.mxu0
        %v558 = vadd.f32 %v450, %v557
        %v559 = vpop.f32.mrf.mxu0
        %560 = vdwg.mxu0
        %vm561 = vcmp.ge.f32.partialorder %v547, 0.0
        %vm562 = vcmp.ge.f32.partialorder %v550, 0.0
        %vm563 = vcmp.ge.f32.partialorder %v555, 0.0
        %vm564 = vcmp.ge.f32.partialorder %v558, 0.0
        %v565 = vmul.f32 %v547, 0.01
        %v566 = vmul.f32 %v550, 0.01
        %v567 = vmul.f32 %v555, 0.01
        %v568 = vmul.f32 %v558, 0.01
        %v569 = vsel %vm561, %v547, %v565
        %v570 = vsel %vm562, %v550, %v566
        %v571 = vsel %vm563, %v555, %v567
        %v572 = vsel %vm564, %v558, %v568
        %v573 = vpack.c.bf16 %v570, %v569
        %v574 = vpack.c.bf16 %v572, %v571
        %v575 = vld [vmem:[#allocation7] sm:$0xff]
        %v576 = vld [vmem:[#allocation7 + $0x8] sm:$0xff]
        %v577 = vld [vmem:[#allocation7 + $0x10] sm:$0xff]
        %v578 = vld [vmem:[#allocation7 + $0x18] sm:$0xff]
        %v579 = vld [vmem:[#allocation7 + $0x20] sm:$0xff]
        %v580 = vld [vmem:[#allocation7 + $0x28] sm:$0xff]
        %v581 = vld [vmem:[#allocation7 + $0x30] sm:$0xff]
        %v582 = vld [vmem:[#allocation7 + $0x38] sm:$0xff]
        %v583 = vld [vmem:[#allocation7 + $0x40] sm:$0xff]
        %v584 = vld [vmem:[#allocation7 + $0x48] sm:$0xff]
        %v585 = vld [vmem:[#allocation7 + $0x50] sm:$0xff]
        %v586 = vld [vmem:[#allocation7 + $0x58] sm:$0xff]
        %v587 = vld [vmem:[#allocation7 + $0x60] sm:$0xff]
        %v588 = vld [vmem:[#allocation7 + $0x68] sm:$0xff]
        %v589 = vld [vmem:[#allocation7 + $0x70] sm:$0xff]
        %v590 = vld [vmem:[#allocation7 + $0x78] sm:$0xff]
        %v591 = vld [vmem:[#allocation7 + $0x80] sm:$0xff]
        %v592 = vld [vmem:[#allocation7 + $0x88] sm:$0xff]
        %v593 = vld [vmem:[#allocation7 + $0x90] sm:$0xff]
        %v594 = vld [vmem:[#allocation7 + $0x98] sm:$0xff]
        %v595 = vld [vmem:[#allocation7 + $0xa0] sm:$0xff]
        %v596 = vld [vmem:[#allocation7 + $0xa8] sm:$0xff]
        %v597 = vld [vmem:[#allocation7 + $0xb0] sm:$0xff]
        %v598 = vld [vmem:[#allocation7 + $0xb8] sm:$0xff]
        %v599 = vld [vmem:[#allocation7 + $0xc0] sm:$0xff]
        %v600 = vld [vmem:[#allocation7 + $0xc8] sm:$0xff]
        %v601 = vld [vmem:[#allocation7 + $0xd0] sm:$0xff]
        %v602 = vld [vmem:[#allocation7 + $0xd8] sm:$0xff]
        %v603 = vld [vmem:[#allocation7 + $0xe0] sm:$0xff]
        %v604 = vld [vmem:[#allocation7 + $0xe8] sm:$0xff]
        %v605 = vld [vmem:[#allocation7 + $0xf0] sm:$0xff]
        %v606 = vld [vmem:[#allocation7 + $0xf8] sm:$0xff]
        %v607 = vld [vmem:[#allocation7 + $0x100] sm:$0xff]
        %v608 = vld [vmem:[#allocation7 + $0x108] sm:$0xff]
        %v609 = vld [vmem:[#allocation7 + $0x110] sm:$0xff]
        %v610 = vld [vmem:[#allocation7 + $0x118] sm:$0xff]
        %v611 = vld [vmem:[#allocation7 + $0x120] sm:$0xff]
        %v612 = vld [vmem:[#allocation7 + $0x128] sm:$0xff]
        %v613 = vld [vmem:[#allocation7 + $0x130] sm:$0xff]
        %v614 = vld [vmem:[#allocation7 + $0x138] sm:$0xff]
        %v615 = vld [vmem:[#allocation7 + $0x140] sm:$0xff]
        %v616 = vld [vmem:[#allocation7 + $0x148] sm:$0xff]
        %v617 = vld [vmem:[#allocation7 + $0x150] sm:$0xff]
        %v618 = vld [vmem:[#allocation7 + $0x158] sm:$0xff]
        %v619 = vld [vmem:[#allocation7 + $0x160] sm:$0xff]
        %v620 = vld [vmem:[#allocation7 + $0x168] sm:$0xff]
        %v621 = vld [vmem:[#allocation7 + $0x170] sm:$0xff]
        %v622 = vld [vmem:[#allocation7 + $0x178] sm:$0xff]
        %v623 = vld [vmem:[#allocation7 + $0x180] sm:$0xff]
        %v624 = vld [vmem:[#allocation7 + $0x188] sm:$0xff]
        %v625 = vld [vmem:[#allocation7 + $0x190] sm:$0xff]
        %v626 = vld [vmem:[#allocation7 + $0x198] sm:$0xff]
        %v627 = vld [vmem:[#allocation7 + $0x1a0] sm:$0xff]
        %v628 = vld [vmem:[#allocation7 + $0x1a8] sm:$0xff]
        %v629 = vld [vmem:[#allocation7 + $0x1b0] sm:$0xff]
        %v630 = vld [vmem:[#allocation7 + $0x1b8] sm:$0xff]
        %v631 = vld [vmem:[#allocation7 + $0x1c0] sm:$0xff]
        %v632 = vld [vmem:[#allocation7 + $0x1c8] sm:$0xff]
        %v633 = vld [vmem:[#allocation7 + $0x1d0] sm:$0xff]
        %v634 = vld [vmem:[#allocation7 + $0x1d8] sm:$0xff]
        %v635 = vld [vmem:[#allocation7 + $0x1e0] sm:$0xff]
        %v636 = vld [vmem:[#allocation7 + $0x1e8] sm:$0xff]
        %v637 = vld [vmem:[#allocation7 + $0x1f0] sm:$0xff]
        %v638 = vld [vmem:[#allocation7 + $0x1f8] sm:$0xff]
        %v639 = vld [vmem:[#allocation8] sm:$0xff]
        %v641 = vlaneseq
        %v642 = vshrl.u32 %v641, 7
        %v643 = vsub.s32 0, %v642
        %v644 = vrot.slane %v639, %v643
        %v645 = vlaneseq
        %v646 = vshrl.u32 %v645, 7
        %v647 = vsub.s32 1, %v646
        %v648 = vrot.slane %v639, %v647
        %v649 = vlaneseq
        %v650 = vshrl.u32 %v649, 7
        %v651 = vsub.s32 2, %v650
        %v652 = vrot.slane %v639, %v651
        %v653 = vlaneseq
        %v654 = vshrl.u32 %v653, 7
        %v655 = vsub.s32 3, %v654
        %v656 = vrot.slane %v639, %v655
        %v657 = vlaneseq
        %v658 = vshrl.u32 %v657, 7
        %v659 = vsub.s32 4, %v658
        %v660 = vrot.slane %v639, %v659
        %v661 = vlaneseq
        %v662 = vshrl.u32 %v661, 7
        %v663 = vsub.s32 5, %v662
        %v664 = vrot.slane %v639, %v663
        %v665 = vlaneseq
        %v666 = vshrl.u32 %v665, 7
        %v667 = vsub.s32 6, %v666
        %v668 = vrot.slane %v639, %v667
        %v669 = vlaneseq
        %v670 = vshrl.u32 %v669, 7
        %v671 = vsub.s32 7, %v670
        %v672 = vrot.slane %v639, %v671
        %v745 = vunpack.c.l.b16 %v575
        %v746 = vunpack.c.h.b16 %v575
        %v747 = vunpack.c.l.b16 %v576
        %v748 = vunpack.c.h.b16 %v576
        %v749 = vunpack.c.l.b16 %v577
        %v750 = vunpack.c.h.b16 %v577
        %v751 = vunpack.c.l.b16 %v578
        %v752 = vunpack.c.h.b16 %v578
        %v753 = vunpack.c.l.b16 %v579
        %v754 = vunpack.c.h.b16 %v579
        %v755 = vunpack.c.l.b16 %v580
        %v756 = vunpack.c.h.b16 %v580
        %v757 = vunpack.c.l.b16 %v581
        %v758 = vunpack.c.h.b16 %v581
        %v759 = vunpack.c.l.b16 %v582
        %v760 = vunpack.c.h.b16 %v582
        %v761 = vunpack.c.l.b16 %v583
        %v762 = vunpack.c.h.b16 %v583
        %v763 = vunpack.c.l.b16 %v584
        %v764 = vunpack.c.h.b16 %v584
        %v765 = vunpack.c.l.b16 %v585
        %v766 = vunpack.c.h.b16 %v585
        %v767 = vunpack.c.l.b16 %v586
        %v768 = vunpack.c.h.b16 %v586
        %v769 = vunpack.c.l.b16 %v587
        %v770 = vunpack.c.h.b16 %v587
        %v771 = vunpack.c.l.b16 %v588
        %v772 = vunpack.c.h.b16 %v588
        %v773 = vunpack.c.l.b16 %v589
        %v774 = vunpack.c.h.b16 %v589
        %v775 = vunpack.c.l.b16 %v590
        %v776 = vunpack.c.h.b16 %v590
        %v777 = vunpack.c.l.b16 %v591
        %v778 = vunpack.c.h.b16 %v591
        %v779 = vunpack.c.l.b16 %v592
        %v780 = vunpack.c.h.b16 %v592
        %v781 = vunpack.c.l.b16 %v593
        %v782 = vunpack.c.h.b16 %v593
        %v783 = vunpack.c.l.b16 %v594
        %v784 = vunpack.c.h.b16 %v594
        %v785 = vunpack.c.l.b16 %v595
        %v786 = vunpack.c.h.b16 %v595
        %v787 = vunpack.c.l.b16 %v596
        %v788 = vunpack.c.h.b16 %v596
        %v789 = vunpack.c.l.b16 %v597
        %v790 = vunpack.c.h.b16 %v597
        %v791 = vunpack.c.l.b16 %v598
        %v792 = vunpack.c.h.b16 %v598
        %v793 = vunpack.c.l.b16 %v599
        %v794 = vunpack.c.h.b16 %v599
        %v795 = vunpack.c.l.b16 %v600
        %v796 = vunpack.c.h.b16 %v600
        %v797 = vunpack.c.l.b16 %v601
        %v798 = vunpack.c.h.b16 %v601
        %v799 = vunpack.c.l.b16 %v602
        %v800 = vunpack.c.h.b16 %v602
        %v801 = vunpack.c.l.b16 %v603
        %v802 = vunpack.c.h.b16 %v603
        %v803 = vunpack.c.l.b16 %v604
        %v804 = vunpack.c.h.b16 %v604
        %v805 = vunpack.c.l.b16 %v605
        %v806 = vunpack.c.h.b16 %v605
        %v807 = vunpack.c.l.b16 %v606
        %v808 = vunpack.c.h.b16 %v606
        %v809 = vunpack.c.l.b16 %v607
        %v810 = vunpack.c.h.b16 %v607
        %v811 = vunpack.c.l.b16 %v608
        %v812 = vunpack.c.h.b16 %v608
        %v813 = vunpack.c.l.b16 %v609
        %v814 = vunpack.c.h.b16 %v609
        %v815 = vunpack.c.l.b16 %v610
        %v816 = vunpack.c.h.b16 %v610
        %v817 = vunpack.c.l.b16 %v611
        %v818 = vunpack.c.h.b16 %v611
        %v819 = vunpack.c.l.b16 %v612
        %v820 = vunpack.c.h.b16 %v612
        %v821 = vunpack.c.l.b16 %v613
        %v822 = vunpack.c.h.b16 %v613
        %v823 = vunpack.c.l.b16 %v614
        %v824 = vunpack.c.h.b16 %v614
        %v825 = vunpack.c.l.b16 %v615
        %v826 = vunpack.c.h.b16 %v615
        %v827 = vunpack.c.l.b16 %v616
        %v828 = vunpack.c.h.b16 %v616
        %v829 = vunpack.c.l.b16 %v617
        %v830 = vunpack.c.h.b16 %v617
        %v831 = vunpack.c.l.b16 %v618
        %v832 = vunpack.c.h.b16 %v618
        %v833 = vunpack.c.l.b16 %v619
        %v834 = vunpack.c.h.b16 %v619
        %v835 = vunpack.c.l.b16 %v620
        %v836 = vunpack.c.h.b16 %v620
        %v837 = vunpack.c.l.b16 %v621
        %v838 = vunpack.c.h.b16 %v621
        %v839 = vunpack.c.l.b16 %v622
        %v840 = vunpack.c.h.b16 %v622
        %v841 = vunpack.c.l.b16 %v623
        %v842 = vunpack.c.h.b16 %v623
        %v843 = vunpack.c.l.b16 %v624
        %v844 = vunpack.c.h.b16 %v624
        %v845 = vunpack.c.l.b16 %v625
        %v846 = vunpack.c.h.b16 %v625
        %v847 = vunpack.c.l.b16 %v626
        %v848 = vunpack.c.h.b16 %v626
        %v849 = vunpack.c.l.b16 %v627
        %v850 = vunpack.c.h.b16 %v627
        %v851 = vunpack.c.l.b16 %v628
        %v852 = vunpack.c.h.b16 %v628
        %v853 = vunpack.c.l.b16 %v629
        %v854 = vunpack.c.h.b16 %v629
        %v855 = vunpack.c.l.b16 %v630
        %v856 = vunpack.c.h.b16 %v630
        %v857 = vunpack.c.l.b16 %v631
        %v858 = vunpack.c.h.b16 %v631
        %v859 = vunpack.c.l.b16 %v632
        %v860 = vunpack.c.h.b16 %v632
        %v861 = vunpack.c.l.b16 %v633
        %v862 = vunpack.c.h.b16 %v633
        %v863 = vunpack.c.l.b16 %v634
        %v864 = vunpack.c.h.b16 %v634
        %v865 = vunpack.c.l.b16 %v635
        %v866 = vunpack.c.h.b16 %v635
        %v867 = vunpack.c.l.b16 %v636
        %v868 = vunpack.c.h.b16 %v636
        %v869 = vunpack.c.l.b16 %v637
        %v870 = vunpack.c.h.b16 %v637
        %v871 = vunpack.c.l.b16 %v638
        %v872 = vunpack.c.h.b16 %v638
        %v873 = vpack.c.b16 %v753, %v745
        %v874 = vpack.c.b16 %v754, %v746
        %v875 = vpack.c.b16 %v755, %v747
        %v876 = vpack.c.b16 %v756, %v748
        %v877 = vpack.c.b16 %v757, %v749
        %v878 = vpack.c.b16 %v758, %v750
        %v879 = vpack.c.b16 %v759, %v751
        %v880 = vpack.c.b16 %v760, %v752
        %v881 = vpack.c.b16 %v769, %v761
        %v882 = vpack.c.b16 %v770, %v762
        %v883 = vpack.c.b16 %v771, %v763
        %v884 = vpack.c.b16 %v772, %v764
        %v885 = vpack.c.b16 %v773, %v765
        %v886 = vpack.c.b16 %v774, %v766
        %v887 = vpack.c.b16 %v775, %v767
        %v888 = vpack.c.b16 %v776, %v768
        %v889 = vpack.c.b16 %v785, %v777
        %v890 = vpack.c.b16 %v786, %v778
        %v891 = vpack.c.b16 %v787, %v779
        %v892 = vpack.c.b16 %v788, %v780
        %v893 = vpack.c.b16 %v789, %v781
        %v894 = vpack.c.b16 %v790, %v782
        %v895 = vpack.c.b16 %v791, %v783
        %v896 = vpack.c.b16 %v792, %v784
        %v897 = vpack.c.b16 %v801, %v793
        %v898 = vpack.c.b16 %v802, %v794
        %v899 = vpack.c.b16 %v803, %v795
        %v900 = vpack.c.b16 %v804, %v796
        %v901 = vpack.c.b16 %v805, %v797
        %v902 = vpack.c.b16 %v806, %v798
        %v903 = vpack.c.b16 %v807, %v799
        %v904 = vpack.c.b16 %v808, %v800
        %v905 = vpack.c.b16 %v817, %v809
        %v906 = vpack.c.b16 %v818, %v810
        %v907 = vpack.c.b16 %v819, %v811
        %v908 = vpack.c.b16 %v820, %v812
        %v909 = vpack.c.b16 %v821, %v813
        %v910 = vpack.c.b16 %v822, %v814
        %v911 = vpack.c.b16 %v823, %v815
        %v912 = vpack.c.b16 %v824, %v816
        %v913 = vpack.c.b16 %v833, %v825
        %v914 = vpack.c.b16 %v834, %v826
        %v915 = vpack.c.b16 %v835, %v827
        %v916 = vpack.c.b16 %v836, %v828
        %v917 = vpack.c.b16 %v837, %v829
        %v918 = vpack.c.b16 %v838, %v830
        %v919 = vpack.c.b16 %v839, %v831
        %v920 = vpack.c.b16 %v840, %v832
        %v921 = vpack.c.b16 %v849, %v841
        %v922 = vpack.c.b16 %v850, %v842
        %v923 = vpack.c.b16 %v851, %v843
        %v924 = vpack.c.b16 %v852, %v844
        %v925 = vpack.c.b16 %v853, %v845
        %v926 = vpack.c.b16 %v854, %v846
        %v927 = vpack.c.b16 %v855, %v847
        %v928 = vpack.c.b16 %v856, %v848
        %v929 = vpack.c.b16 %v865, %v857
        %v930 = vpack.c.b16 %v866, %v858
        %v931 = vpack.c.b16 %v867, %v859
        %v932 = vpack.c.b16 %v868, %v860
        %v933 = vpack.c.b16 %v869, %v861
        %v934 = vpack.c.b16 %v870, %v862
        %v935 = vpack.c.b16 %v871, %v863
        %v936 = vpack.c.b16 %v872, %v864
        %1001 = vmatprep.subr.bf16.mxu0 %v930
        %1002 = vmatpush1.bf16.msra.mxu0 %v929
        %1003 = vmatprep.subr.bf16.mxu0 %v922
        %1004 = vmatpush1.bf16.msra.mxu0 %v921
        %1005 = vmatprep.subr.bf16.mxu0 %v914
        %1006 = vmatpush1.bf16.msra.mxu0 %v913
        %1007 = vmatprep.subr.bf16.mxu0 %v906
        %1008 = vmatpush1.bf16.msra.mxu0 %v905
        %1009 = vmatprep.subr.bf16.mxu0 %v898
        %1010 = vmatpush1.bf16.msra.mxu0 %v897
        %1011 = vmatprep.subr.bf16.mxu0 %v890
        %1012 = vmatpush1.bf16.msra.mxu0 %v889
        %1013 = vmatprep.subr.bf16.mxu0 %v882
        %1014 = vmatpush1.bf16.msra.mxu0 %v881
        %1015 = vmatprep.subr.bf16.mxu0 %v874
        %1016 = vmatpush1.bf16.msra.mxu0 %v873
        %1017 = vmatprep.subr.bf16.mxu0 0
        %1018 = vmatpush2.bf16.msra.mxu0 0
        %1019 = vmatprep.subr.bf16.mxu0 0
        %1020 = vmatpush2.bf16.msra.mxu0 0
        %1021 = vmatprep.subr.bf16.mxu0 0
        %1022 = vmatpush2.bf16.msra.mxu0 0
        %1023 = vmatprep.subr.bf16.mxu0 0
        %1024 = vmatpush2.bf16.msra.mxu0 0
        %1025 = vmatprep.subr.bf16.mxu0 0
        %1026 = vmatpush2.bf16.msra.mxu0 0
        %1027 = vmatprep.subr.bf16.mxu0 0
        %1028 = vmatpush2.bf16.msra.mxu0 0
        %1029 = vmatprep.subr.bf16.mxu0 0
        %1030 = vmatpush2.bf16.msra.mxu0 0
        %1031 = vmatprep.subr.bf16.mxu0 0
        %1032 = vmatpush2.bf16.msra.mxu0 0
        %1033 = vmatprep.mubr.bf16.mxu0 0
        %1034 = vmatmul.mubr.bf16.gmra.mxu0 %v573
        %v1035 = vpop.f32.mrf.mxu0
        %v1036 = vadd.f32 %v644, %v1035
        %v1037 = vpop.f32.mrf.mxu0
        %v1038 = vadd.f32 %v648, %v1037
        %v1039 = vpop.f32.mrf.mxu0
        %v1040 = vadd.f32 %v644, %v1039
        %v1041 = vpop.f32.mrf.mxu0
        %v1042 = vadd.f32 %v648, %v1041
        %1043 = vmatprep.mubr.bf16.mxu0 0
        %1044 = vmatmul.mubr.bf16.gmra.mxu0 %v574
        %v1045 = vpop.f32.mrf.mxu0
        %v1046 = vadd.f32 %v644, %v1045
        %v1047 = vpop.f32.mrf.mxu0
        %v1048 = vadd.f32 %v648, %v1047
        %v1049 = vpop.f32.mrf.mxu0
        %v1050 = vadd.f32 %v644, %v1049
        %v1051 = vpop.f32.mrf.mxu0
        %v1052 = vadd.f32 %v648, %v1051
        %1053 = vdwg.mxu0
        %1054 = vmatprep.subr.bf16.mxu0 %v932
        %1055 = vmatpush1.bf16.msra.mxu0 %v931
        %1056 = vmatprep.subr.bf16.mxu0 %v924
        %1057 = vmatpush1.bf16.msra.mxu0 %v923
        %1058 = vmatprep.subr.bf16.mxu0 %v916
        %1059 = vmatpush1.bf16.msra.mxu0 %v915
        %1060 = vmatprep.subr.bf16.mxu0 %v908
        %1061 = vmatpush1.bf16.msra.mxu0 %v907
        %1062 = vmatprep.subr.bf16.mxu0 %v900
        %1063 = vmatpush1.bf16.msra.mxu0 %v899
        %1064 = vmatprep.subr.bf16.mxu0 %v892
        %1065 = vmatpush1.bf16.msra.mxu0 %v891
        %1066 = vmatprep.subr.bf16.mxu0 %v884
        %1067 = vmatpush1.bf16.msra.mxu0 %v883
        %1068 = vmatprep.subr.bf16.mxu0 %v876
        %1069 = vmatpush1.bf16.msra.mxu0 %v875
        %1070 = vmatprep.subr.bf16.mxu0 0
        %1071 = vmatpush2.bf16.msra.mxu0 0
        %1072 = vmatprep.subr.bf16.mxu0 0
        %1073 = vmatpush2.bf16.msra.mxu0 0
        %1074 = vmatprep.subr.bf16.mxu0 0
        %1075 = vmatpush2.bf16.msra.mxu0 0
        %1076 = vmatprep.subr.bf16.mxu0 0
        %1077 = vmatpush2.bf16.msra.mxu0 0
        %1078 = vmatprep.subr.bf16.mxu0 0
        %1079 = vmatpush2.bf16.msra.mxu0 0
        %1080 = vmatprep.subr.bf16.mxu0 0
        %1081 = vmatpush2.bf16.msra.mxu0 0
        %1082 = vmatprep.subr.bf16.mxu0 0
        %1083 = vmatpush2.bf16.msra.mxu0 0
        %1084 = vmatprep.subr.bf16.mxu0 0
        %1085 = vmatpush2.bf16.msra.mxu0 0
        %1086 = vmatprep.mubr.bf16.mxu0 0
        %1087 = vmatmul.mubr.bf16.gmra.mxu0 %v573
        %v1088 = vpop.f32.mrf.mxu0
        %v1089 = vadd.f32 %v652, %v1088
        %v1090 = vpop.f32.mrf.mxu0
        %v1091 = vadd.f32 %v656, %v1090
        %v1092 = vpop.f32.mrf.mxu0
        %v1093 = vadd.f32 %v652, %v1092
        %v1094 = vpop.f32.mrf.mxu0
        %v1095 = vadd.f32 %v656, %v1094
        %1096 = vmatprep.mubr.bf16.mxu0 0
        %1097 = vmatmul.mubr.bf16.gmra.mxu0 %v574
        %v1098 = vpop.f32.mrf.mxu0
        %v1099 = vadd.f32 %v652, %v1098
        %v1100 = vpop.f32.mrf.mxu0
        %v1101 = vadd.f32 %v656, %v1100
        %v1102 = vpop.f32.mrf.mxu0
        %v1103 = vadd.f32 %v652, %v1102
        %v1104 = vpop.f32.mrf.mxu0
        %v1105 = vadd.f32 %v656, %v1104
        %1106 = vdwg.mxu0
        %1107 = vmatprep.subr.bf16.mxu0 %v934
        %1108 = vmatpush1.bf16.msra.mxu0 %v933
        %1109 = vmatprep.subr.bf16.mxu0 %v926
        %1110 = vmatpush1.bf16.msra.mxu0 %v925
        %1111 = vmatprep.subr.bf16.mxu0 %v918
        %1112 = vmatpush1.bf16.msra.mxu0 %v917
        %1113 = vmatprep.subr.bf16.mxu0 %v910
        %1114 = vmatpush1.bf16.msra.mxu0 %v909
        %1115 = vmatprep.subr.bf16.mxu0 %v902
        %1116 = vmatpush1.bf16.msra.mxu0 %v901
        %1117 = vmatprep.subr.bf16.mxu0 %v894
        %1118 = vmatpush1.bf16.msra.mxu0 %v893
        %1119 = vmatprep.subr.bf16.mxu0 %v886
        %1120 = vmatpush1.bf16.msra.mxu0 %v885
        %1121 = vmatprep.subr.bf16.mxu0 %v878
        %1122 = vmatpush1.bf16.msra.mxu0 %v877
        %1123 = vmatprep.subr.bf16.mxu0 0
        %1124 = vmatpush2.bf16.msra.mxu0 0
        %1125 = vmatprep.subr.bf16.mxu0 0
        %1126 = vmatpush2.bf16.msra.mxu0 0
        %1127 = vmatprep.subr.bf16.mxu0 0
        %1128 = vmatpush2.bf16.msra.mxu0 0
        %1129 = vmatprep.subr.bf16.mxu0 0
        %1130 = vmatpush2.bf16.msra.mxu0 0
        %1131 = vmatprep.subr.bf16.mxu0 0
        %1132 = vmatpush2.bf16.msra.mxu0 0
        %1133 = vmatprep.subr.bf16.mxu0 0
        %1134 = vmatpush2.bf16.msra.mxu0 0
        %1135 = vmatprep.subr.bf16.mxu0 0
        %1136 = vmatpush2.bf16.msra.mxu0 0
        %1137 = vmatprep.subr.bf16.mxu0 0
        %1138 = vmatpush2.bf16.msra.mxu0 0
        %1139 = vmatprep.mubr.bf16.mxu0 0
        %1140 = vmatmul.mubr.bf16.gmra.mxu0 %v573
        %v1141 = vpop.f32.mrf.mxu0
        %v1142 = vadd.f32 %v660, %v1141
        %v1143 = vpop.f32.mrf.mxu0
        %v1144 = vadd.f32 %v664, %v1143
        %v1145 = vpop.f32.mrf.mxu0
        %v1146 = vadd.f32 %v660, %v1145
        %v1147 = vpop.f32.mrf.mxu0
        %v1148 = vadd.f32 %v664, %v1147
        %1149 = vmatprep.mubr.bf16.mxu0 0
        %1150 = vmatmul.mubr.bf16.gmra.mxu0 %v574
        %v1151 = vpop.f32.mrf.mxu0
        %v1152 = vadd.f32 %v660, %v1151
        %v1153 = vpop.f32.mrf.mxu0
        %v1154 = vadd.f32 %v664, %v1153
        %v1155 = vpop.f32.mrf.mxu0
        %v1156 = vadd.f32 %v660, %v1155
        %v1157 = vpop.f32.mrf.mxu0
        %v1158 = vadd.f32 %v664, %v1157
        %1159 = vdwg.mxu0
        %1160 = vmatprep.subr.bf16.mxu0 %v936
        %1161 = vmatpush1.bf16.msra.mxu0 %v935
        %1162 = vmatprep.subr.bf16.mxu0 %v928
        %1163 = vmatpush1.bf16.msra.mxu0 %v927
        %1164 = vmatprep.subr.bf16.mxu0 %v920
        %1165 = vmatpush1.bf16.msra.mxu0 %v919
        %1166 = vmatprep.subr.bf16.mxu0 %v912
        %1167 = vmatpush1.bf16.msra.mxu0 %v911
        %1168 = vmatprep.subr.bf16.mxu0 %v904
        %1169 = vmatpush1.bf16.msra.mxu0 %v903
        %1170 = vmatprep.subr.bf16.mxu0 %v896
        %1171 = vmatpush1.bf16.msra.mxu0 %v895
        %1172 = vmatprep.subr.bf16.mxu0 %v888
        %1173 = vmatpush1.bf16.msra.mxu0 %v887
        %1174 = vmatprep.subr.bf16.mxu0 %v880
        %1175 = vmatpush1.bf16.msra.mxu0 %v879
        %1176 = vmatprep.subr.bf16.mxu0 0
        %1177 = vmatpush2.bf16.msra.mxu0 0
        %1178 = vmatprep.subr.bf16.mxu0 0
        %1179 = vmatpush2.bf16.msra.mxu0 0
        %1180 = vmatprep.subr.bf16.mxu0 0
        %1181 = vmatpush2.bf16.msra.mxu0 0
        %1182 = vmatprep.subr.bf16.mxu0 0
        %1183 = vmatpush2.bf16.msra.mxu0 0
        %1184 = vmatprep.subr.bf16.mxu0 0
        %1185 = vmatpush2.bf16.msra.mxu0 0
        %1186 = vmatprep.subr.bf16.mxu0 0
        %1187 = vmatpush2.bf16.msra.mxu0 0
        %1188 = vmatprep.subr.bf16.mxu0 0
        %1189 = vmatpush2.bf16.msra.mxu0 0
        %1190 = vmatprep.subr.bf16.mxu0 0
        %1191 = vmatpush2.bf16.msra.mxu0 0
        %1192 = vmatprep.mubr.bf16.mxu0 0
        %1193 = vmatmul.mubr.bf16.gmra.mxu0 %v573
        %v1194 = vpop.f32.mrf.mxu0
        %v1195 = vadd.f32 %v668, %v1194
        %v1196 = vpop.f32.mrf.mxu0
        %v1197 = vadd.f32 %v672, %v1196
        %v1198 = vpop.f32.mrf.mxu0
        %v1199 = vadd.f32 %v668, %v1198
        %v1200 = vpop.f32.mrf.mxu0
        %v1201 = vadd.f32 %v672, %v1200
        %1202 = vmatprep.mubr.bf16.mxu0 0
        %1203 = vmatmul.mubr.bf16.gmra.mxu0 %v574
        %v1204 = vpop.f32.mrf.mxu0
        %v1205 = vadd.f32 %v668, %v1204
        %v1206 = vpop.f32.mrf.mxu0
        %v1207 = vadd.f32 %v672, %v1206
        %v1208 = vpop.f32.mrf.mxu0
        %v1209 = vadd.f32 %v668, %v1208
        %v1210 = vpop.f32.mrf.mxu0
        %v1211 = vadd.f32 %v672, %v1210
        %1212 = vdwg.mxu0
        %vm1213 = vcmp.ge.f32.partialorder %v1036, 0.0
        %vm1214 = vcmp.ge.f32.partialorder %v1038, 0.0
        %vm1215 = vcmp.ge.f32.partialorder %v1089, 0.0
        %vm1216 = vcmp.ge.f32.partialorder %v1091, 0.0
        %vm1217 = vcmp.ge.f32.partialorder %v1142, 0.0
        %vm1218 = vcmp.ge.f32.partialorder %v1144, 0.0
        %vm1219 = vcmp.ge.f32.partialorder %v1195, 0.0
        %vm1220 = vcmp.ge.f32.partialorder %v1197, 0.0
        %vm1221 = vcmp.ge.f32.partialorder %v1040, 0.0
        %vm1222 = vcmp.ge.f32.partialorder %v1042, 0.0
        %vm1223 = vcmp.ge.f32.partialorder %v1093, 0.0
        %vm1224 = vcmp.ge.f32.partialorder %v1095, 0.0
        %vm1225 = vcmp.ge.f32.partialorder %v1146, 0.0
        %vm1226 = vcmp.ge.f32.partialorder %v1148, 0.0
        %vm1227 = vcmp.ge.f32.partialorder %v1199, 0.0
        %vm1228 = vcmp.ge.f32.partialorder %v1201, 0.0
        %vm1229 = vcmp.ge.f32.partialorder %v1046, 0.0
        %vm1230 = vcmp.ge.f32.partialorder %v1048, 0.0
        %vm1231 = vcmp.ge.f32.partialorder %v1099, 0.0
        %vm1232 = vcmp.ge.f32.partialorder %v1101, 0.0
        %vm1233 = vcmp.ge.f32.partialorder %v1152, 0.0
        %vm1234 = vcmp.ge.f32.partialorder %v1154, 0.0
        %vm1235 = vcmp.ge.f32.partialorder %v1205, 0.0
        %vm1236 = vcmp.ge.f32.partialorder %v1207, 0.0
        %vm1237 = vcmp.ge.f32.partialorder %v1050, 0.0
        %vm1238 = vcmp.ge.f32.partialorder %v1052, 0.0
        %vm1239 = vcmp.ge.f32.partialorder %v1103, 0.0
        %vm1240 = vcmp.ge.f32.partialorder %v1105, 0.0
        %vm1241 = vcmp.ge.f32.partialorder %v1156, 0.0
        %vm1242 = vcmp.ge.f32.partialorder %v1158, 0.0
        %vm1243 = vcmp.ge.f32.partialorder %v1209, 0.0
        %vm1244 = vcmp.ge.f32.partialorder %v1211, 0.0
        %v1245 = vmul.f32 %v1036, 0.01
        %v1246 = vmul.f32 %v1038, 0.01
        %v1247 = vmul.f32 %v1089, 0.01
        %v1248 = vmul.f32 %v1091, 0.01
        %v1249 = vmul.f32 %v1142, 0.01
        %v1250 = vmul.f32 %v1144, 0.01
        %v1251 = vmul.f32 %v1195, 0.01
        %v1252 = vmul.f32 %v1197, 0.01
        %v1253 = vmul.f32 %v1040, 0.01
        %v1254 = vmul.f32 %v1042, 0.01
        %v1255 = vmul.f32 %v1093, 0.01
        %v1256 = vmul.f32 %v1095, 0.01
        %v1257 = vmul.f32 %v1146, 0.01
        %v1258 = vmul.f32 %v1148, 0.01
        %v1259 = vmul.f32 %v1199, 0.01
        %v1260 = vmul.f32 %v1201, 0.01
        %v1261 = vmul.f32 %v1046, 0.01
        %v1262 = vmul.f32 %v1048, 0.01
        %v1263 = vmul.f32 %v1099, 0.01
        %v1264 = vmul.f32 %v1101, 0.01
        %v1265 = vmul.f32 %v1152, 0.01
        %v1266 = vmul.f32 %v1154, 0.01
        %v1267 = vmul.f32 %v1205, 0.01
        %v1268 = vmul.f32 %v1207, 0.01
        %v1269 = vmul.f32 %v1050, 0.01
        %v1270 = vmul.f32 %v1052, 0.01
        %v1271 = vmul.f32 %v1103, 0.01
        %v1272 = vmul.f32 %v1105, 0.01
        %v1273 = vmul.f32 %v1156, 0.01
        %v1274 = vmul.f32 %v1158, 0.01
        %v1275 = vmul.f32 %v1209, 0.01
        %v1276 = vmul.f32 %v1211, 0.01
        %v1277 = vsel %vm1213, %v1036, %v1245
        %v1278 = vsel %vm1214, %v1038, %v1246
        %v1279 = vsel %vm1215, %v1089, %v1247
        %v1280 = vsel %vm1216, %v1091, %v1248
        %v1281 = vsel %vm1217, %v1142, %v1249
        %v1282 = vsel %vm1218, %v1144, %v1250
        %v1283 = vsel %vm1219, %v1195, %v1251
        %v1284 = vsel %vm1220, %v1197, %v1252
        %v1285 = vsel %vm1221, %v1040, %v1253
        %v1286 = vsel %vm1222, %v1042, %v1254
        %v1287 = vsel %vm1223, %v1093, %v1255
        %v1288 = vsel %vm1224, %v1095, %v1256
        %v1289 = vsel %vm1225, %v1146, %v1257
        %v1290 = vsel %vm1226, %v1148, %v1258
        %v1291 = vsel %vm1227, %v1199, %v1259
        %v1292 = vsel %vm1228, %v1201, %v1260
        %v1293 = vsel %vm1229, %v1046, %v1261
        %v1294 = vsel %vm1230, %v1048, %v1262
        %v1295 = vsel %vm1231, %v1099, %v1263
        %v1296 = vsel %vm1232, %v1101, %v1264
        %v1297 = vsel %vm1233, %v1152, %v1265
        %v1298 = vsel %vm1234, %v1154, %v1266
        %v1299 = vsel %vm1235, %v1205, %v1267
        %v1300 = vsel %vm1236, %v1207, %v1268
        %v1301 = vsel %vm1237, %v1050, %v1269
        %v1302 = vsel %vm1238, %v1052, %v1270
        %v1303 = vsel %vm1239, %v1103, %v1271
        %v1304 = vsel %vm1240, %v1105, %v1272
        %v1305 = vsel %vm1241, %v1156, %v1273
        %v1306 = vsel %vm1242, %v1158, %v1274
        %v1307 = vsel %vm1243, %v1209, %v1275
        %v1308 = vsel %vm1244, %v1211, %v1276
        %v1309 = vpack.c.bf16 %v1285, %v1277
        %v1310 = vpack.c.bf16 %v1286, %v1278
        %v1311 = vpack.c.bf16 %v1287, %v1279
        %v1312 = vpack.c.bf16 %v1288, %v1280
        %v1313 = vpack.c.bf16 %v1289, %v1281
        %v1314 = vpack.c.bf16 %v1290, %v1282
        %v1315 = vpack.c.bf16 %v1291, %v1283
        %v1316 = vpack.c.bf16 %v1292, %v1284
        %v1317 = vpack.c.bf16 %v1301, %v1293
        %v1318 = vpack.c.bf16 %v1302, %v1294
        %v1319 = vpack.c.bf16 %v1303, %v1295
        %v1320 = vpack.c.bf16 %v1304, %v1296
        %v1321 = vpack.c.bf16 %v1305, %v1297
        %v1322 = vpack.c.bf16 %v1306, %v1298
        %v1323 = vpack.c.bf16 %v1307, %v1299
        %v1324 = vpack.c.bf16 %v1308, %v1300
        %v1325 = vld [vmem:[#allocation10] sm:$0xff]
        %v1326 = vld [vmem:[#allocation10 + $0x8] sm:$0xff]
        %v1327 = vld [vmem:[#allocation10 + $0x10] sm:$0xff]
        %v1328 = vld [vmem:[#allocation10 + $0x18] sm:$0xff]
        %v1329 = vld [vmem:[#allocation10 + $0x20] sm:$0xff]
        %v1330 = vld [vmem:[#allocation10 + $0x28] sm:$0xff]
        %v1331 = vld [vmem:[#allocation10 + $0x30] sm:$0xff]
        %v1332 = vld [vmem:[#allocation10 + $0x38] sm:$0xff]
        %v1333 = vld [vmem:[#allocation10 + $0x40] sm:$0xff]
        %v1334 = vld [vmem:[#allocation10 + $0x48] sm:$0xff]
        %v1335 = vld [vmem:[#allocation10 + $0x50] sm:$0xff]
        %v1336 = vld [vmem:[#allocation10 + $0x58] sm:$0xff]
        %v1337 = vld [vmem:[#allocation10 + $0x60] sm:$0xff]
        %v1338 = vld [vmem:[#allocation10 + $0x68] sm:$0xff]
        %v1339 = vld [vmem:[#allocation10 + $0x70] sm:$0xff]
        %v1340 = vld [vmem:[#allocation10 + $0x78] sm:$0xff]
        %v1341 = vld [vmem:[#allocation10 + $0x80] sm:$0xff]
        %v1342 = vld [vmem:[#allocation10 + $0x88] sm:$0xff]
        %v1343 = vld [vmem:[#allocation10 + $0x90] sm:$0xff]
        %v1344 = vld [vmem:[#allocation10 + $0x98] sm:$0xff]
        %v1345 = vld [vmem:[#allocation10 + $0xa0] sm:$0xff]
        %v1346 = vld [vmem:[#allocation10 + $0xa8] sm:$0xff]
        %v1347 = vld [vmem:[#allocation10 + $0xb0] sm:$0xff]
        %v1348 = vld [vmem:[#allocation10 + $0xb8] sm:$0xff]
        %v1349 = vld [vmem:[#allocation10 + $0xc0] sm:$0xff]
        %v1350 = vld [vmem:[#allocation10 + $0xc8] sm:$0xff]
        %v1351 = vld [vmem:[#allocation10 + $0xd0] sm:$0xff]
        %v1352 = vld [vmem:[#allocation10 + $0xd8] sm:$0xff]
        %v1353 = vld [vmem:[#allocation10 + $0xe0] sm:$0xff]
        %v1354 = vld [vmem:[#allocation10 + $0xe8] sm:$0xff]
        %v1355 = vld [vmem:[#allocation10 + $0xf0] sm:$0xff]
        %v1356 = vld [vmem:[#allocation10 + $0xf8] sm:$0xff]
        %v1357 = vld [vmem:[#allocation10 + $0x100] sm:$0xff]
        %v1358 = vld [vmem:[#allocation10 + $0x108] sm:$0xff]
        %v1359 = vld [vmem:[#allocation10 + $0x110] sm:$0xff]
        %v1360 = vld [vmem:[#allocation10 + $0x118] sm:$0xff]
        %v1361 = vld [vmem:[#allocation10 + $0x120] sm:$0xff]
        %v1362 = vld [vmem:[#allocation10 + $0x128] sm:$0xff]
        %v1363 = vld [vmem:[#allocation10 + $0x130] sm:$0xff]
        %v1364 = vld [vmem:[#allocation10 + $0x138] sm:$0xff]
        %v1365 = vld [vmem:[#allocation10 + $0x140] sm:$0xff]
        %v1366 = vld [vmem:[#allocation10 + $0x148] sm:$0xff]
        %v1367 = vld [vmem:[#allocation10 + $0x150] sm:$0xff]
        %v1368 = vld [vmem:[#allocation10 + $0x158] sm:$0xff]
        %v1369 = vld [vmem:[#allocation10 + $0x160] sm:$0xff]
        %v1370 = vld [vmem:[#allocation10 + $0x168] sm:$0xff]
        %v1371 = vld [vmem:[#allocation10 + $0x170] sm:$0xff]
        %v1372 = vld [vmem:[#allocation10 + $0x178] sm:$0xff]
        %v1373 = vld [vmem:[#allocation10 + $0x180] sm:$0xff]
        %v1374 = vld [vmem:[#allocation10 + $0x188] sm:$0xff]
        %v1375 = vld [vmem:[#allocation10 + $0x190] sm:$0xff]
        %v1376 = vld [vmem:[#allocation10 + $0x198] sm:$0xff]
        %v1377 = vld [vmem:[#allocation10 + $0x1a0] sm:$0xff]
        %v1378 = vld [vmem:[#allocation10 + $0x1a8] sm:$0xff]
        %v1379 = vld [vmem:[#allocation10 + $0x1b0] sm:$0xff]
        %v1380 = vld [vmem:[#allocation10 + $0x1b8] sm:$0xff]
        %v1381 = vld [vmem:[#allocation10 + $0x1c0] sm:$0xff]
        %v1382 = vld [vmem:[#allocation10 + $0x1c8] sm:$0xff]
        %v1383 = vld [vmem:[#allocation10 + $0x1d0] sm:$0xff]
        %v1384 = vld [vmem:[#allocation10 + $0x1d8] sm:$0xff]
        %v1385 = vld [vmem:[#allocation10 + $0x1e0] sm:$0xff]
        %v1386 = vld [vmem:[#allocation10 + $0x1e8] sm:$0xff]
        %v1387 = vld [vmem:[#allocation10 + $0x1f0] sm:$0xff]
        %v1388 = vld [vmem:[#allocation10 + $0x1f8] sm:$0xff]
        %v1389 = vld [vmem:[#allocation10 + $0x200] sm:$0xff]
        %v1390 = vld [vmem:[#allocation10 + $0x208] sm:$0xff]
        %v1391 = vld [vmem:[#allocation10 + $0x210] sm:$0xff]
        %v1392 = vld [vmem:[#allocation10 + $0x218] sm:$0xff]
        %v1393 = vld [vmem:[#allocation10 + $0x220] sm:$0xff]
        %v1394 = vld [vmem:[#allocation10 + $0x228] sm:$0xff]
        %v1395 = vld [vmem:[#allocation10 + $0x230] sm:$0xff]
        %v1396 = vld [vmem:[#allocation10 + $0x238] sm:$0xff]
        %v1397 = vld [vmem:[#allocation10 + $0x240] sm:$0xff]
        %v1398 = vld [vmem:[#allocation10 + $0x248] sm:$0xff]
        %v1399 = vld [vmem:[#allocation10 + $0x250] sm:$0xff]
        %v1400 = vld [vmem:[#allocation10 + $0x258] sm:$0xff]
        %v1401 = vld [vmem:[#allocation10 + $0x260] sm:$0xff]
        %v1402 = vld [vmem:[#allocation10 + $0x268] sm:$0xff]
        %v1403 = vld [vmem:[#allocation10 + $0x270] sm:$0xff]
        %v1404 = vld [vmem:[#allocation10 + $0x278] sm:$0xff]
        %v1405 = vld [vmem:[#allocation10 + $0x280] sm:$0xff]
        %v1406 = vld [vmem:[#allocation10 + $0x288] sm:$0xff]
        %v1407 = vld [vmem:[#allocation10 + $0x290] sm:$0xff]
        %v1408 = vld [vmem:[#allocation10 + $0x298] sm:$0xff]
        %v1409 = vld [vmem:[#allocation10 + $0x2a0] sm:$0xff]
        %v1410 = vld [vmem:[#allocation10 + $0x2a8] sm:$0xff]
        %v1411 = vld [vmem:[#allocation10 + $0x2b0] sm:$0xff]
        %v1412 = vld [vmem:[#allocation10 + $0x2b8] sm:$0xff]
        %v1413 = vld [vmem:[#allocation10 + $0x2c0] sm:$0xff]
        %v1414 = vld [vmem:[#allocation10 + $0x2c8] sm:$0xff]
        %v1415 = vld [vmem:[#allocation10 + $0x2d0] sm:$0xff]
        %v1416 = vld [vmem:[#allocation10 + $0x2d8] sm:$0xff]
        %v1417 = vld [vmem:[#allocation10 + $0x2e0] sm:$0xff]
        %v1418 = vld [vmem:[#allocation10 + $0x2e8] sm:$0xff]
        %v1419 = vld [vmem:[#allocation10 + $0x2f0] sm:$0xff]
        %v1420 = vld [vmem:[#allocation10 + $0x2f8] sm:$0xff]
        %v1421 = vld [vmem:[#allocation10 + $0x300] sm:$0xff]
        %v1422 = vld [vmem:[#allocation10 + $0x308] sm:$0xff]
        %v1423 = vld [vmem:[#allocation10 + $0x310] sm:$0xff]
        %v1424 = vld [vmem:[#allocation10 + $0x318] sm:$0xff]
        %v1425 = vld [vmem:[#allocation10 + $0x320] sm:$0xff]
        %v1426 = vld [vmem:[#allocation10 + $0x328] sm:$0xff]
        %v1427 = vld [vmem:[#allocation10 + $0x330] sm:$0xff]
        %v1428 = vld [vmem:[#allocation10 + $0x338] sm:$0xff]
        %v1429 = vld [vmem:[#allocation10 + $0x340] sm:$0xff]
        %v1430 = vld [vmem:[#allocation10 + $0x348] sm:$0xff]
        %v1431 = vld [vmem:[#allocation10 + $0x350] sm:$0xff]
        %v1432 = vld [vmem:[#allocation10 + $0x358] sm:$0xff]
        %v1433 = vld [vmem:[#allocation10 + $0x360] sm:$0xff]
        %v1434 = vld [vmem:[#allocation10 + $0x368] sm:$0xff]
        %v1435 = vld [vmem:[#allocation10 + $0x370] sm:$0xff]
        %v1436 = vld [vmem:[#allocation10 + $0x378] sm:$0xff]
        %v1437 = vld [vmem:[#allocation10 + $0x380] sm:$0xff]
        %v1438 = vld [vmem:[#allocation10 + $0x388] sm:$0xff]
        %v1439 = vld [vmem:[#allocation10 + $0x390] sm:$0xff]
        %v1440 = vld [vmem:[#allocation10 + $0x398] sm:$0xff]
        %v1441 = vld [vmem:[#allocation10 + $0x3a0] sm:$0xff]
        %v1442 = vld [vmem:[#allocation10 + $0x3a8] sm:$0xff]
        %v1443 = vld [vmem:[#allocation10 + $0x3b0] sm:$0xff]
        %v1444 = vld [vmem:[#allocation10 + $0x3b8] sm:$0xff]
        %v1445 = vld [vmem:[#allocation10 + $0x3c0] sm:$0xff]
        %v1446 = vld [vmem:[#allocation10 + $0x3c8] sm:$0xff]
        %v1447 = vld [vmem:[#allocation10 + $0x3d0] sm:$0xff]
        %v1448 = vld [vmem:[#allocation10 + $0x3d8] sm:$0xff]
        %v1449 = vld [vmem:[#allocation10 + $0x3e0] sm:$0xff]
        %v1450 = vld [vmem:[#allocation10 + $0x3e8] sm:$0xff]
        %v1451 = vld [vmem:[#allocation10 + $0x3f0] sm:$0xff]
        %v1452 = vld [vmem:[#allocation10 + $0x3f8] sm:$0xff]
        %v1453 = vld [vmem:[#allocation10 + $0x400] sm:$0xff]
        %v1454 = vld [vmem:[#allocation10 + $0x408] sm:$0xff]
        %v1455 = vld [vmem:[#allocation10 + $0x410] sm:$0xff]
        %v1456 = vld [vmem:[#allocation10 + $0x418] sm:$0xff]
        %v1457 = vld [vmem:[#allocation10 + $0x420] sm:$0xff]
        %v1458 = vld [vmem:[#allocation10 + $0x428] sm:$0xff]
        %v1459 = vld [vmem:[#allocation10 + $0x430] sm:$0xff]
        %v1460 = vld [vmem:[#allocation10 + $0x438] sm:$0xff]
        %v1461 = vld [vmem:[#allocation10 + $0x440] sm:$0xff]
        %v1462 = vld [vmem:[#allocation10 + $0x448] sm:$0xff]
        %v1463 = vld [vmem:[#allocation10 + $0x450] sm:$0xff]
        %v1464 = vld [vmem:[#allocation10 + $0x458] sm:$0xff]
        %v1465 = vld [vmem:[#allocation10 + $0x460] sm:$0xff]
        %v1466 = vld [vmem:[#allocation10 + $0x468] sm:$0xff]
        %v1467 = vld [vmem:[#allocation10 + $0x470] sm:$0xff]
        %v1468 = vld [vmem:[#allocation10 + $0x478] sm:$0xff]
        %v1469 = vld [vmem:[#allocation10 + $0x480] sm:$0xff]
        %v1470 = vld [vmem:[#allocation10 + $0x488] sm:$0xff]
        %v1471 = vld [vmem:[#allocation10 + $0x490] sm:$0xff]
        %v1472 = vld [vmem:[#allocation10 + $0x498] sm:$0xff]
        %v1473 = vld [vmem:[#allocation10 + $0x4a0] sm:$0xff]
        %v1474 = vld [vmem:[#allocation10 + $0x4a8] sm:$0xff]
        %v1475 = vld [vmem:[#allocation10 + $0x4b0] sm:$0xff]
        %v1476 = vld [vmem:[#allocation10 + $0x4b8] sm:$0xff]
        %v1477 = vld [vmem:[#allocation10 + $0x4c0] sm:$0xff]
        %v1478 = vld [vmem:[#allocation10 + $0x4c8] sm:$0xff]
        %v1479 = vld [vmem:[#allocation10 + $0x4d0] sm:$0xff]
        %v1480 = vld [vmem:[#allocation10 + $0x4d8] sm:$0xff]
        %v1481 = vld [vmem:[#allocation10 + $0x4e0] sm:$0xff]
        %v1482 = vld [vmem:[#allocation10 + $0x4e8] sm:$0xff]
        %v1483 = vld [vmem:[#allocation10 + $0x4f0] sm:$0xff]
        %v1484 = vld [vmem:[#allocation10 + $0x4f8] sm:$0xff]
        %v1485 = vld [vmem:[#allocation10 + $0x500] sm:$0xff]
        %v1486 = vld [vmem:[#allocation10 + $0x508] sm:$0xff]
        %v1487 = vld [vmem:[#allocation10 + $0x510] sm:$0xff]
        %v1488 = vld [vmem:[#allocation10 + $0x518] sm:$0xff]
        %v1489 = vld [vmem:[#allocation10 + $0x520] sm:$0xff]
        %v1490 = vld [vmem:[#allocation10 + $0x528] sm:$0xff]
        %v1491 = vld [vmem:[#allocation10 + $0x530] sm:$0xff]
        %v1492 = vld [vmem:[#allocation10 + $0x538] sm:$0xff]
        %v1493 = vld [vmem:[#allocation10 + $0x540] sm:$0xff]
        %v1494 = vld [vmem:[#allocation10 + $0x548] sm:$0xff]
        %v1495 = vld [vmem:[#allocation10 + $0x550] sm:$0xff]
        %v1496 = vld [vmem:[#allocation10 + $0x558] sm:$0xff]
        %v1497 = vld [vmem:[#allocation10 + $0x560] sm:$0xff]
        %v1498 = vld [vmem:[#allocation10 + $0x568] sm:$0xff]
        %v1499 = vld [vmem:[#allocation10 + $0x570] sm:$0xff]
        %v1500 = vld [vmem:[#allocation10 + $0x578] sm:$0xff]
        %v1501 = vld [vmem:[#allocation10 + $0x580] sm:$0xff]
        %v1502 = vld [vmem:[#allocation10 + $0x588] sm:$0xff]
        %v1503 = vld [vmem:[#allocation10 + $0x590] sm:$0xff]
        %v1504 = vld [vmem:[#allocation10 + $0x598] sm:$0xff]
        %v1505 = vld [vmem:[#allocation10 + $0x5a0] sm:$0xff]
        %v1506 = vld [vmem:[#allocation10 + $0x5a8] sm:$0xff]
        %v1507 = vld [vmem:[#allocation10 + $0x5b0] sm:$0xff]
        %v1508 = vld [vmem:[#allocation10 + $0x5b8] sm:$0xff]
        %v1509 = vld [vmem:[#allocation10 + $0x5c0] sm:$0xff]
        %v1510 = vld [vmem:[#allocation10 + $0x5c8] sm:$0xff]
        %v1511 = vld [vmem:[#allocation10 + $0x5d0] sm:$0xff]
        %v1512 = vld [vmem:[#allocation10 + $0x5d8] sm:$0xff]
        %v1513 = vld [vmem:[#allocation10 + $0x5e0] sm:$0xff]
        %v1514 = vld [vmem:[#allocation10 + $0x5e8] sm:$0xff]
        %v1515 = vld [vmem:[#allocation10 + $0x5f0] sm:$0xff]
        %v1516 = vld [vmem:[#allocation10 + $0x5f8] sm:$0xff]
        %v1517 = vld [vmem:[#allocation10 + $0x600] sm:$0xff]
        %v1518 = vld [vmem:[#allocation10 + $0x608] sm:$0xff]
        %v1519 = vld [vmem:[#allocation10 + $0x610] sm:$0xff]
        %v1520 = vld [vmem:[#allocation10 + $0x618] sm:$0xff]
        %v1521 = vld [vmem:[#allocation10 + $0x620] sm:$0xff]
        %v1522 = vld [vmem:[#allocation10 + $0x628] sm:$0xff]
        %v1523 = vld [vmem:[#allocation10 + $0x630] sm:$0xff]
        %v1524 = vld [vmem:[#allocation10 + $0x638] sm:$0xff]
        %v1525 = vld [vmem:[#allocation10 + $0x640] sm:$0xff]
        %v1526 = vld [vmem:[#allocation10 + $0x648] sm:$0xff]
        %v1527 = vld [vmem:[#allocation10 + $0x650] sm:$0xff]
        %v1528 = vld [vmem:[#allocation10 + $0x658] sm:$0xff]
        %v1529 = vld [vmem:[#allocation10 + $0x660] sm:$0xff]
        %v1530 = vld [vmem:[#allocation10 + $0x668] sm:$0xff]
        %v1531 = vld [vmem:[#allocation10 + $0x670] sm:$0xff]
        %v1532 = vld [vmem:[#allocation10 + $0x678] sm:$0xff]
        %v1533 = vld [vmem:[#allocation10 + $0x680] sm:$0xff]
        %v1534 = vld [vmem:[#allocation10 + $0x688] sm:$0xff]
        %v1535 = vld [vmem:[#allocation10 + $0x690] sm:$0xff]
        %v1536 = vld [vmem:[#allocation10 + $0x698] sm:$0xff]
        %v1537 = vld [vmem:[#allocation10 + $0x6a0] sm:$0xff]
        %v1538 = vld [vmem:[#allocation10 + $0x6a8] sm:$0xff]
        %v1539 = vld [vmem:[#allocation10 + $0x6b0] sm:$0xff]
        %v1540 = vld [vmem:[#allocation10 + $0x6b8] sm:$0xff]
        %v1541 = vld [vmem:[#allocation10 + $0x6c0] sm:$0xff]
        %v1542 = vld [vmem:[#allocation10 + $0x6c8] sm:$0xff]
        %v1543 = vld [vmem:[#allocation10 + $0x6d0] sm:$0xff]
        %v1544 = vld [vmem:[#allocation10 + $0x6d8] sm:$0xff]
        %v1545 = vld [vmem:[#allocation10 + $0x6e0] sm:$0xff]
        %v1546 = vld [vmem:[#allocation10 + $0x6e8] sm:$0xff]
        %v1547 = vld [vmem:[#allocation10 + $0x6f0] sm:$0xff]
        %v1548 = vld [vmem:[#allocation10 + $0x6f8] sm:$0xff]
        %v1549 = vld [vmem:[#allocation10 + $0x700] sm:$0xff]
        %v1550 = vld [vmem:[#allocation10 + $0x708] sm:$0xff]
        %v1551 = vld [vmem:[#allocation10 + $0x710] sm:$0xff]
        %v1552 = vld [vmem:[#allocation10 + $0x718] sm:$0xff]
        %v1553 = vld [vmem:[#allocation10 + $0x720] sm:$0xff]
        %v1554 = vld [vmem:[#allocation10 + $0x728] sm:$0xff]
        %v1555 = vld [vmem:[#allocation10 + $0x730] sm:$0xff]
        %v1556 = vld [vmem:[#allocation10 + $0x738] sm:$0xff]
        %v1557 = vld [vmem:[#allocation10 + $0x740] sm:$0xff]
        %v1558 = vld [vmem:[#allocation10 + $0x748] sm:$0xff]
        %v1559 = vld [vmem:[#allocation10 + $0x750] sm:$0xff]
        %v1560 = vld [vmem:[#allocation10 + $0x758] sm:$0xff]
        %v1561 = vld [vmem:[#allocation10 + $0x760] sm:$0xff]
        %v1562 = vld [vmem:[#allocation10 + $0x768] sm:$0xff]
        %v1563 = vld [vmem:[#allocation10 + $0x770] sm:$0xff]
        %v1564 = vld [vmem:[#allocation10 + $0x778] sm:$0xff]
        %v1565 = vld [vmem:[#allocation10 + $0x780] sm:$0xff]
        %v1566 = vld [vmem:[#allocation10 + $0x788] sm:$0xff]
        %v1567 = vld [vmem:[#allocation10 + $0x790] sm:$0xff]
        %v1568 = vld [vmem:[#allocation10 + $0x798] sm:$0xff]
        %v1569 = vld [vmem:[#allocation10 + $0x7a0] sm:$0xff]
        %v1570 = vld [vmem:[#allocation10 + $0x7a8] sm:$0xff]
        %v1571 = vld [vmem:[#allocation10 + $0x7b0] sm:$0xff]
        %v1572 = vld [vmem:[#allocation10 + $0x7b8] sm:$0xff]
        %v1573 = vld [vmem:[#allocation10 + $0x7c0] sm:$0xff]
        %v1574 = vld [vmem:[#allocation10 + $0x7c8] sm:$0xff]
        %v1575 = vld [vmem:[#allocation10 + $0x7d0] sm:$0xff]
        %v1576 = vld [vmem:[#allocation10 + $0x7d8] sm:$0xff]
        %v1577 = vld [vmem:[#allocation10 + $0x7e0] sm:$0xff]
        %v1578 = vld [vmem:[#allocation10 + $0x7e8] sm:$0xff]
        %v1579 = vld [vmem:[#allocation10 + $0x7f0] sm:$0xff]
        %v1580 = vld [vmem:[#allocation10 + $0x7f8] sm:$0xff]
        %v1581 = vld [vmem:[%s6] sm:$0xf]
        %v1583 = vlaneseq
        %v1584 = vshrl.u32 %v1583, 7
        %v1585 = vsub.s32 0, %v1584
        %v1586 = vrot.slane %v1581, %v1585
        %v1587 = vlaneseq
        %v1588 = vshrl.u32 %v1587, 7
        %v1589 = vsub.s32 1, %v1588
        %v1590 = vrot.slane %v1581, %v1589
        %v1591 = vlaneseq
        %v1592 = vshrl.u32 %v1591, 7
        %v1593 = vsub.s32 2, %v1592
        %v1594 = vrot.slane %v1581, %v1593
        %v1595 = vlaneseq
        %v1596 = vshrl.u32 %v1595, 7
        %v1597 = vsub.s32 3, %v1596
        %v1598 = vrot.slane %v1581, %v1597
        %v1859 = vunpack.c.l.b16 %v1325
        %v1860 = vunpack.c.h.b16 %v1325
        %v1861 = vunpack.c.l.b16 %v1326
        %v1862 = vunpack.c.h.b16 %v1326
        %v1863 = vunpack.c.l.b16 %v1327
        %v1864 = vunpack.c.h.b16 %v1327
        %v1865 = vunpack.c.l.b16 %v1328
        %v1866 = vunpack.c.h.b16 %v1328
        %v1867 = vunpack.c.l.b16 %v1329
        %v1868 = vunpack.c.h.b16 %v1329
        %v1869 = vunpack.c.l.b16 %v1330
        %v1870 = vunpack.c.h.b16 %v1330
        %v1871 = vunpack.c.l.b16 %v1331
        %v1872 = vunpack.c.h.b16 %v1331
        %v1873 = vunpack.c.l.b16 %v1332
        %v1874 = vunpack.c.h.b16 %v1332
        %v1875 = vunpack.c.l.b16 %v1333
        %v1876 = vunpack.c.h.b16 %v1333
        %v1877 = vunpack.c.l.b16 %v1334
        %v1878 = vunpack.c.h.b16 %v1334
        %v1879 = vunpack.c.l.b16 %v1335
        %v1880 = vunpack.c.h.b16 %v1335
        %v1881 = vunpack.c.l.b16 %v1336
        %v1882 = vunpack.c.h.b16 %v1336
        %v1883 = vunpack.c.l.b16 %v1337
        %v1884 = vunpack.c.h.b16 %v1337
        %v1885 = vunpack.c.l.b16 %v1338
        %v1886 = vunpack.c.h.b16 %v1338
        %v1887 = vunpack.c.l.b16 %v1339
        %v1888 = vunpack.c.h.b16 %v1339
        %v1889 = vunpack.c.l.b16 %v1340
        %v1890 = vunpack.c.h.b16 %v1340
        %v1891 = vunpack.c.l.b16 %v1341
        %v1892 = vunpack.c.h.b16 %v1341
        %v1893 = vunpack.c.l.b16 %v1342
        %v1894 = vunpack.c.h.b16 %v1342
        %v1895 = vunpack.c.l.b16 %v1343
        %v1896 = vunpack.c.h.b16 %v1343
        %v1897 = vunpack.c.l.b16 %v1344
        %v1898 = vunpack.c.h.b16 %v1344
        %v1899 = vunpack.c.l.b16 %v1345
        %v1900 = vunpack.c.h.b16 %v1345
        %v1901 = vunpack.c.l.b16 %v1346
        %v1902 = vunpack.c.h.b16 %v1346
        %v1903 = vunpack.c.l.b16 %v1347
        %v1904 = vunpack.c.h.b16 %v1347
        %v1905 = vunpack.c.l.b16 %v1348
        %v1906 = vunpack.c.h.b16 %v1348
        %v1907 = vunpack.c.l.b16 %v1349
        %v1908 = vunpack.c.h.b16 %v1349
        %v1909 = vunpack.c.l.b16 %v1350
        %v1910 = vunpack.c.h.b16 %v1350
        %v1911 = vunpack.c.l.b16 %v1351
        %v1912 = vunpack.c.h.b16 %v1351
        %v1913 = vunpack.c.l.b16 %v1352
        %v1914 = vunpack.c.h.b16 %v1352
        %v1915 = vunpack.c.l.b16 %v1353
        %v1916 = vunpack.c.h.b16 %v1353
        %v1917 = vunpack.c.l.b16 %v1354
        %v1918 = vunpack.c.h.b16 %v1354
        %v1919 = vunpack.c.l.b16 %v1355
        %v1920 = vunpack.c.h.b16 %v1355
        %v1921 = vunpack.c.l.b16 %v1356
        %v1922 = vunpack.c.h.b16 %v1356
        %v1923 = vunpack.c.l.b16 %v1357
        %v1924 = vunpack.c.h.b16 %v1357
        %v1925 = vunpack.c.l.b16 %v1358
        %v1926 = vunpack.c.h.b16 %v1358
        %v1927 = vunpack.c.l.b16 %v1359
        %v1928 = vunpack.c.h.b16 %v1359
        %v1929 = vunpack.c.l.b16 %v1360
        %v1930 = vunpack.c.h.b16 %v1360
        %v1931 = vunpack.c.l.b16 %v1361
        %v1932 = vunpack.c.h.b16 %v1361
        %v1933 = vunpack.c.l.b16 %v1362
        %v1934 = vunpack.c.h.b16 %v1362
        %v1935 = vunpack.c.l.b16 %v1363
        %v1936 = vunpack.c.h.b16 %v1363
        %v1937 = vunpack.c.l.b16 %v1364
        %v1938 = vunpack.c.h.b16 %v1364
        %v1939 = vunpack.c.l.b16 %v1365
        %v1940 = vunpack.c.h.b16 %v1365
        %v1941 = vunpack.c.l.b16 %v1366
        %v1942 = vunpack.c.h.b16 %v1366
        %v1943 = vunpack.c.l.b16 %v1367
        %v1944 = vunpack.c.h.b16 %v1367
        %v1945 = vunpack.c.l.b16 %v1368
        %v1946 = vunpack.c.h.b16 %v1368
        %v1947 = vunpack.c.l.b16 %v1369
        %v1948 = vunpack.c.h.b16 %v1369
        %v1949 = vunpack.c.l.b16 %v1370
        %v1950 = vunpack.c.h.b16 %v1370
        %v1951 = vunpack.c.l.b16 %v1371
        %v1952 = vunpack.c.h.b16 %v1371
        %v1953 = vunpack.c.l.b16 %v1372
        %v1954 = vunpack.c.h.b16 %v1372
        %v1955 = vunpack.c.l.b16 %v1373
        %v1956 = vunpack.c.h.b16 %v1373
        %v1957 = vunpack.c.l.b16 %v1374
        %v1958 = vunpack.c.h.b16 %v1374
        %v1959 = vunpack.c.l.b16 %v1375
        %v1960 = vunpack.c.h.b16 %v1375
        %v1961 = vunpack.c.l.b16 %v1376
        %v1962 = vunpack.c.h.b16 %v1376
        %v1963 = vunpack.c.l.b16 %v1377
        %v1964 = vunpack.c.h.b16 %v1377
        %v1965 = vunpack.c.l.b16 %v1378
        %v1966 = vunpack.c.h.b16 %v1378
        %v1967 = vunpack.c.l.b16 %v1379
        %v1968 = vunpack.c.h.b16 %v1379
        %v1969 = vunpack.c.l.b16 %v1380
        %v1970 = vunpack.c.h.b16 %v1380
        %v1971 = vunpack.c.l.b16 %v1381
        %v1972 = vunpack.c.h.b16 %v1381
        %v1973 = vunpack.c.l.b16 %v1382
        %v1974 = vunpack.c.h.b16 %v1382
        %v1975 = vunpack.c.l.b16 %v1383
        %v1976 = vunpack.c.h.b16 %v1383
        %v1977 = vunpack.c.l.b16 %v1384
        %v1978 = vunpack.c.h.b16 %v1384
        %v1979 = vunpack.c.l.b16 %v1385
        %v1980 = vunpack.c.h.b16 %v1385
        %v1981 = vunpack.c.l.b16 %v1386
        %v1982 = vunpack.c.h.b16 %v1386
        %v1983 = vunpack.c.l.b16 %v1387
        %v1984 = vunpack.c.h.b16 %v1387
        %v1985 = vunpack.c.l.b16 %v1388
        %v1986 = vunpack.c.h.b16 %v1388
        %v1987 = vunpack.c.l.b16 %v1389
        %v1988 = vunpack.c.h.b16 %v1389
        %v1989 = vunpack.c.l.b16 %v1390
        %v1990 = vunpack.c.h.b16 %v1390
        %v1991 = vunpack.c.l.b16 %v1391
        %v1992 = vunpack.c.h.b16 %v1391
        %v1993 = vunpack.c.l.b16 %v1392
        %v1994 = vunpack.c.h.b16 %v1392
        %v1995 = vunpack.c.l.b16 %v1393
        %v1996 = vunpack.c.h.b16 %v1393
        %v1997 = vunpack.c.l.b16 %v1394
        %v1998 = vunpack.c.h.b16 %v1394
        %v1999 = vunpack.c.l.b16 %v1395
        %v2000 = vunpack.c.h.b16 %v1395
        %v2001 = vunpack.c.l.b16 %v1396
        %v2002 = vunpack.c.h.b16 %v1396
        %v2003 = vunpack.c.l.b16 %v1397
        %v2004 = vunpack.c.h.b16 %v1397
        %v2005 = vunpack.c.l.b16 %v1398
        %v2006 = vunpack.c.h.b16 %v1398
        %v2007 = vunpack.c.l.b16 %v1399
        %v2008 = vunpack.c.h.b16 %v1399
        %v2009 = vunpack.c.l.b16 %v1400
        %v2010 = vunpack.c.h.b16 %v1400
        %v2011 = vunpack.c.l.b16 %v1401
        %v2012 = vunpack.c.h.b16 %v1401
        %v2013 = vunpack.c.l.b16 %v1402
        %v2014 = vunpack.c.h.b16 %v1402
        %v2015 = vunpack.c.l.b16 %v1403
        %v2016 = vunpack.c.h.b16 %v1403
        %v2017 = vunpack.c.l.b16 %v1404
        %v2018 = vunpack.c.h.b16 %v1404
        %v2019 = vunpack.c.l.b16 %v1405
        %v2020 = vunpack.c.h.b16 %v1405
        %v2021 = vunpack.c.l.b16 %v1406
        %v2022 = vunpack.c.h.b16 %v1406
        %v2023 = vunpack.c.l.b16 %v1407
        %v2024 = vunpack.c.h.b16 %v1407
        %v2025 = vunpack.c.l.b16 %v1408
        %v2026 = vunpack.c.h.b16 %v1408
        %v2027 = vunpack.c.l.b16 %v1409
        %v2028 = vunpack.c.h.b16 %v1409
        %v2029 = vunpack.c.l.b16 %v1410
        %v2030 = vunpack.c.h.b16 %v1410
        %v2031 = vunpack.c.l.b16 %v1411
        %v2032 = vunpack.c.h.b16 %v1411
        %v2033 = vunpack.c.l.b16 %v1412
        %v2034 = vunpack.c.h.b16 %v1412
        %v2035 = vunpack.c.l.b16 %v1413
        %v2036 = vunpack.c.h.b16 %v1413
        %v2037 = vunpack.c.l.b16 %v1414
        %v2038 = vunpack.c.h.b16 %v1414
        %v2039 = vunpack.c.l.b16 %v1415
        %v2040 = vunpack.c.h.b16 %v1415
        %v2041 = vunpack.c.l.b16 %v1416
        %v2042 = vunpack.c.h.b16 %v1416
        %v2043 = vunpack.c.l.b16 %v1417
        %v2044 = vunpack.c.h.b16 %v1417
        %v2045 = vunpack.c.l.b16 %v1418
        %v2046 = vunpack.c.h.b16 %v1418
        %v2047 = vunpack.c.l.b16 %v1419
        %v2048 = vunpack.c.h.b16 %v1419
        %v2049 = vunpack.c.l.b16 %v1420
        %v2050 = vunpack.c.h.b16 %v1420
        %v2051 = vunpack.c.l.b16 %v1421
        %v2052 = vunpack.c.h.b16 %v1421
        %v2053 = vunpack.c.l.b16 %v1422
        %v2054 = vunpack.c.h.b16 %v1422
        %v2055 = vunpack.c.l.b16 %v1423
        %v2056 = vunpack.c.h.b16 %v1423
        %v2057 = vunpack.c.l.b16 %v1424
        %v2058 = vunpack.c.h.b16 %v1424
        %v2059 = vunpack.c.l.b16 %v1425
        %v2060 = vunpack.c.h.b16 %v1425
        %v2061 = vunpack.c.l.b16 %v1426
        %v2062 = vunpack.c.h.b16 %v1426
        %v2063 = vunpack.c.l.b16 %v1427
        %v2064 = vunpack.c.h.b16 %v1427
        %v2065 = vunpack.c.l.b16 %v1428
        %v2066 = vunpack.c.h.b16 %v1428
        %v2067 = vunpack.c.l.b16 %v1429
        %v2068 = vunpack.c.h.b16 %v1429
        %v2069 = vunpack.c.l.b16 %v1430
        %v2070 = vunpack.c.h.b16 %v1430
        %v2071 = vunpack.c.l.b16 %v1431
        %v2072 = vunpack.c.h.b16 %v1431
        %v2073 = vunpack.c.l.b16 %v1432
        %v2074 = vunpack.c.h.b16 %v1432
        %v2075 = vunpack.c.l.b16 %v1433
        %v2076 = vunpack.c.h.b16 %v1433
        %v2077 = vunpack.c.l.b16 %v1434
        %v2078 = vunpack.c.h.b16 %v1434
        %v2079 = vunpack.c.l.b16 %v1435
        %v2080 = vunpack.c.h.b16 %v1435
        %v2081 = vunpack.c.l.b16 %v1436
        %v2082 = vunpack.c.h.b16 %v1436
        %v2083 = vunpack.c.l.b16 %v1437
        %v2084 = vunpack.c.h.b16 %v1437
        %v2085 = vunpack.c.l.b16 %v1438
        %v2086 = vunpack.c.h.b16 %v1438
        %v2087 = vunpack.c.l.b16 %v1439
        %v2088 = vunpack.c.h.b16 %v1439
        %v2089 = vunpack.c.l.b16 %v1440
        %v2090 = vunpack.c.h.b16 %v1440
        %v2091 = vunpack.c.l.b16 %v1441
        %v2092 = vunpack.c.h.b16 %v1441
        %v2093 = vunpack.c.l.b16 %v1442
        %v2094 = vunpack.c.h.b16 %v1442
        %v2095 = vunpack.c.l.b16 %v1443
        %v2096 = vunpack.c.h.b16 %v1443
        %v2097 = vunpack.c.l.b16 %v1444
        %v2098 = vunpack.c.h.b16 %v1444
        %v2099 = vunpack.c.l.b16 %v1445
        %v2100 = vunpack.c.h.b16 %v1445
        %v2101 = vunpack.c.l.b16 %v1446
        %v2102 = vunpack.c.h.b16 %v1446
        %v2103 = vunpack.c.l.b16 %v1447
        %v2104 = vunpack.c.h.b16 %v1447
        %v2105 = vunpack.c.l.b16 %v1448
        %v2106 = vunpack.c.h.b16 %v1448
        %v2107 = vunpack.c.l.b16 %v1449
        %v2108 = vunpack.c.h.b16 %v1449
        %v2109 = vunpack.c.l.b16 %v1450
        %v2110 = vunpack.c.h.b16 %v1450
        %v2111 = vunpack.c.l.b16 %v1451
        %v2112 = vunpack.c.h.b16 %v1451
        %v2113 = vunpack.c.l.b16 %v1452
        %v2114 = vunpack.c.h.b16 %v1452
        %v2115 = vunpack.c.l.b16 %v1453
        %v2116 = vunpack.c.h.b16 %v1453
        %v2117 = vunpack.c.l.b16 %v1454
        %v2118 = vunpack.c.h.b16 %v1454
        %v2119 = vunpack.c.l.b16 %v1455
        %v2120 = vunpack.c.h.b16 %v1455
        %v2121 = vunpack.c.l.b16 %v1456
        %v2122 = vunpack.c.h.b16 %v1456
        %v2123 = vunpack.c.l.b16 %v1457
        %v2124 = vunpack.c.h.b16 %v1457
        %v2125 = vunpack.c.l.b16 %v1458
        %v2126 = vunpack.c.h.b16 %v1458
        %v2127 = vunpack.c.l.b16 %v1459
        %v2128 = vunpack.c.h.b16 %v1459
        %v2129 = vunpack.c.l.b16 %v1460
        %v2130 = vunpack.c.h.b16 %v1460
        %v2131 = vunpack.c.l.b16 %v1461
        %v2132 = vunpack.c.h.b16 %v1461
        %v2133 = vunpack.c.l.b16 %v1462
        %v2134 = vunpack.c.h.b16 %v1462
        %v2135 = vunpack.c.l.b16 %v1463
        %v2136 = vunpack.c.h.b16 %v1463
        %v2137 = vunpack.c.l.b16 %v1464
        %v2138 = vunpack.c.h.b16 %v1464
        %v2139 = vunpack.c.l.b16 %v1465
        %v2140 = vunpack.c.h.b16 %v1465
        %v2141 = vunpack.c.l.b16 %v1466
        %v2142 = vunpack.c.h.b16 %v1466
        %v2143 = vunpack.c.l.b16 %v1467
        %v2144 = vunpack.c.h.b16 %v1467
        %v2145 = vunpack.c.l.b16 %v1468
        %v2146 = vunpack.c.h.b16 %v1468
        %v2147 = vunpack.c.l.b16 %v1469
        %v2148 = vunpack.c.h.b16 %v1469
        %v2149 = vunpack.c.l.b16 %v1470
        %v2150 = vunpack.c.h.b16 %v1470
        %v2151 = vunpack.c.l.b16 %v1471
        %v2152 = vunpack.c.h.b16 %v1471
        %v2153 = vunpack.c.l.b16 %v1472
        %v2154 = vunpack.c.h.b16 %v1472
        %v2155 = vunpack.c.l.b16 %v1473
        %v2156 = vunpack.c.h.b16 %v1473
        %v2157 = vunpack.c.l.b16 %v1474
        %v2158 = vunpack.c.h.b16 %v1474
        %v2159 = vunpack.c.l.b16 %v1475
        %v2160 = vunpack.c.h.b16 %v1475
        %v2161 = vunpack.c.l.b16 %v1476
        %v2162 = vunpack.c.h.b16 %v1476
        %v2163 = vunpack.c.l.b16 %v1477
        %v2164 = vunpack.c.h.b16 %v1477
        %v2165 = vunpack.c.l.b16 %v1478
        %v2166 = vunpack.c.h.b16 %v1478
        %v2167 = vunpack.c.l.b16 %v1479
        %v2168 = vunpack.c.h.b16 %v1479
        %v2169 = vunpack.c.l.b16 %v1480
        %v2170 = vunpack.c.h.b16 %v1480
        %v2171 = vunpack.c.l.b16 %v1481
        %v2172 = vunpack.c.h.b16 %v1481
        %v2173 = vunpack.c.l.b16 %v1482
        %v2174 = vunpack.c.h.b16 %v1482
        %v2175 = vunpack.c.l.b16 %v1483
        %v2176 = vunpack.c.h.b16 %v1483
        %v2177 = vunpack.c.l.b16 %v1484
        %v2178 = vunpack.c.h.b16 %v1484
        %v2179 = vunpack.c.l.b16 %v1485
        %v2180 = vunpack.c.h.b16 %v1485
        %v2181 = vunpack.c.l.b16 %v1486
        %v2182 = vunpack.c.h.b16 %v1486
        %v2183 = vunpack.c.l.b16 %v1487
        %v2184 = vunpack.c.h.b16 %v1487
        %v2185 = vunpack.c.l.b16 %v1488
        %v2186 = vunpack.c.h.b16 %v1488
        %v2187 = vunpack.c.l.b16 %v1489
        %v2188 = vunpack.c.h.b16 %v1489
        %v2189 = vunpack.c.l.b16 %v1490
        %v2190 = vunpack.c.h.b16 %v1490
        %v2191 = vunpack.c.l.b16 %v1491
        %v2192 = vunpack.c.h.b16 %v1491
        %v2193 = vunpack.c.l.b16 %v1492
        %v2194 = vunpack.c.h.b16 %v1492
        %v2195 = vunpack.c.l.b16 %v1493
        %v2196 = vunpack.c.h.b16 %v1493
        %v2197 = vunpack.c.l.b16 %v1494
        %v2198 = vunpack.c.h.b16 %v1494
        %v2199 = vunpack.c.l.b16 %v1495
        %v2200 = vunpack.c.h.b16 %v1495
        %v2201 = vunpack.c.l.b16 %v1496
        %v2202 = vunpack.c.h.b16 %v1496
        %v2203 = vunpack.c.l.b16 %v1497
        %v2204 = vunpack.c.h.b16 %v1497
        %v2205 = vunpack.c.l.b16 %v1498
        %v2206 = vunpack.c.h.b16 %v1498
        %v2207 = vunpack.c.l.b16 %v1499
        %v2208 = vunpack.c.h.b16 %v1499
        %v2209 = vunpack.c.l.b16 %v1500
        %v2210 = vunpack.c.h.b16 %v1500
        %v2211 = vunpack.c.l.b16 %v1501
        %v2212 = vunpack.c.h.b16 %v1501
        %v2213 = vunpack.c.l.b16 %v1502
        %v2214 = vunpack.c.h.b16 %v1502
        %v2215 = vunpack.c.l.b16 %v1503
        %v2216 = vunpack.c.h.b16 %v1503
        %v2217 = vunpack.c.l.b16 %v1504
        %v2218 = vunpack.c.h.b16 %v1504
        %v2219 = vunpack.c.l.b16 %v1505
        %v2220 = vunpack.c.h.b16 %v1505
        %v2221 = vunpack.c.l.b16 %v1506
        %v2222 = vunpack.c.h.b16 %v1506
        %v2223 = vunpack.c.l.b16 %v1507
        %v2224 = vunpack.c.h.b16 %v1507
        %v2225 = vunpack.c.l.b16 %v1508
        %v2226 = vunpack.c.h.b16 %v1508
        %v2227 = vunpack.c.l.b16 %v1509
        %v2228 = vunpack.c.h.b16 %v1509
        %v2229 = vunpack.c.l.b16 %v1510
        %v2230 = vunpack.c.h.b16 %v1510
        %v2231 = vunpack.c.l.b16 %v1511
        %v2232 = vunpack.c.h.b16 %v1511
        %v2233 = vunpack.c.l.b16 %v1512
        %v2234 = vunpack.c.h.b16 %v1512
        %v2235 = vunpack.c.l.b16 %v1513
        %v2236 = vunpack.c.h.b16 %v1513
        %v2237 = vunpack.c.l.b16 %v1514
        %v2238 = vunpack.c.h.b16 %v1514
        %v2239 = vunpack.c.l.b16 %v1515
        %v2240 = vunpack.c.h.b16 %v1515
        %v2241 = vunpack.c.l.b16 %v1516
        %v2242 = vunpack.c.h.b16 %v1516
        %v2243 = vunpack.c.l.b16 %v1517
        %v2244 = vunpack.c.h.b16 %v1517
        %v2245 = vunpack.c.l.b16 %v1518
        %v2246 = vunpack.c.h.b16 %v1518
        %v2247 = vunpack.c.l.b16 %v1519
        %v2248 = vunpack.c.h.b16 %v1519
        %v2249 = vunpack.c.l.b16 %v1520
        %v2250 = vunpack.c.h.b16 %v1520
        %v2251 = vunpack.c.l.b16 %v1521
        %v2252 = vunpack.c.h.b16 %v1521
        %v2253 = vunpack.c.l.b16 %v1522
        %v2254 = vunpack.c.h.b16 %v1522
        %v2255 = vunpack.c.l.b16 %v1523
        %v2256 = vunpack.c.h.b16 %v1523
        %v2257 = vunpack.c.l.b16 %v1524
        %v2258 = vunpack.c.h.b16 %v1524
        %v2259 = vunpack.c.l.b16 %v1525
        %v2260 = vunpack.c.h.b16 %v1525
        %v2261 = vunpack.c.l.b16 %v1526
        %v2262 = vunpack.c.h.b16 %v1526
        %v2263 = vunpack.c.l.b16 %v1527
        %v2264 = vunpack.c.h.b16 %v1527
        %v2265 = vunpack.c.l.b16 %v1528
        %v2266 = vunpack.c.h.b16 %v1528
        %v2267 = vunpack.c.l.b16 %v1529
        %v2268 = vunpack.c.h.b16 %v1529
        %v2269 = vunpack.c.l.b16 %v1530
        %v2270 = vunpack.c.h.b16 %v1530
        %v2271 = vunpack.c.l.b16 %v1531
        %v2272 = vunpack.c.h.b16 %v1531
        %v2273 = vunpack.c.l.b16 %v1532
        %v2274 = vunpack.c.h.b16 %v1532
        %v2275 = vunpack.c.l.b16 %v1533
        %v2276 = vunpack.c.h.b16 %v1533
        %v2277 = vunpack.c.l.b16 %v1534
        %v2278 = vunpack.c.h.b16 %v1534
        %v2279 = vunpack.c.l.b16 %v1535
        %v2280 = vunpack.c.h.b16 %v1535
        %v2281 = vunpack.c.l.b16 %v1536
        %v2282 = vunpack.c.h.b16 %v1536
        %v2283 = vunpack.c.l.b16 %v1537
        %v2284 = vunpack.c.h.b16 %v1537
        %v2285 = vunpack.c.l.b16 %v1538
        %v2286 = vunpack.c.h.b16 %v1538
        %v2287 = vunpack.c.l.b16 %v1539
        %v2288 = vunpack.c.h.b16 %v1539
        %v2289 = vunpack.c.l.b16 %v1540
        %v2290 = vunpack.c.h.b16 %v1540
        %v2291 = vunpack.c.l.b16 %v1541
        %v2292 = vunpack.c.h.b16 %v1541
        %v2293 = vunpack.c.l.b16 %v1542
        %v2294 = vunpack.c.h.b16 %v1542
        %v2295 = vunpack.c.l.b16 %v1543
        %v2296 = vunpack.c.h.b16 %v1543
        %v2297 = vunpack.c.l.b16 %v1544
        %v2298 = vunpack.c.h.b16 %v1544
        %v2299 = vunpack.c.l.b16 %v1545
        %v2300 = vunpack.c.h.b16 %v1545
        %v2301 = vunpack.c.l.b16 %v1546
        %v2302 = vunpack.c.h.b16 %v1546
        %v2303 = vunpack.c.l.b16 %v1547
        %v2304 = vunpack.c.h.b16 %v1547
        %v2305 = vunpack.c.l.b16 %v1548
        %v2306 = vunpack.c.h.b16 %v1548
        %v2307 = vunpack.c.l.b16 %v1549
        %v2308 = vunpack.c.h.b16 %v1549
        %v2309 = vunpack.c.l.b16 %v1550
        %v2310 = vunpack.c.h.b16 %v1550
        %v2311 = vunpack.c.l.b16 %v1551
        %v2312 = vunpack.c.h.b16 %v1551
        %v2313 = vunpack.c.l.b16 %v1552
        %v2314 = vunpack.c.h.b16 %v1552
        %v2315 = vunpack.c.l.b16 %v1553
        %v2316 = vunpack.c.h.b16 %v1553
        %v2317 = vunpack.c.l.b16 %v1554
        %v2318 = vunpack.c.h.b16 %v1554
        %v2319 = vunpack.c.l.b16 %v1555
        %v2320 = vunpack.c.h.b16 %v1555
        %v2321 = vunpack.c.l.b16 %v1556
        %v2322 = vunpack.c.h.b16 %v1556
        %v2323 = vunpack.c.l.b16 %v1557
        %v2324 = vunpack.c.h.b16 %v1557
        %v2325 = vunpack.c.l.b16 %v1558
        %v2326 = vunpack.c.h.b16 %v1558
        %v2327 = vunpack.c.l.b16 %v1559
        %v2328 = vunpack.c.h.b16 %v1559
        %v2329 = vunpack.c.l.b16 %v1560
        %v2330 = vunpack.c.h.b16 %v1560
        %v2331 = vunpack.c.l.b16 %v1561
        %v2332 = vunpack.c.h.b16 %v1561
        %v2333 = vunpack.c.l.b16 %v1562
        %v2334 = vunpack.c.h.b16 %v1562
        %v2335 = vunpack.c.l.b16 %v1563
        %v2336 = vunpack.c.h.b16 %v1563
        %v2337 = vunpack.c.l.b16 %v1564
        %v2338 = vunpack.c.h.b16 %v1564
        %v2339 = vunpack.c.l.b16 %v1565
        %v2340 = vunpack.c.h.b16 %v1565
        %v2341 = vunpack.c.l.b16 %v1566
        %v2342 = vunpack.c.h.b16 %v1566
        %v2343 = vunpack.c.l.b16 %v1567
        %v2344 = vunpack.c.h.b16 %v1567
        %v2345 = vunpack.c.l.b16 %v1568
        %v2346 = vunpack.c.h.b16 %v1568
        %v2347 = vunpack.c.l.b16 %v1569
        %v2348 = vunpack.c.h.b16 %v1569
        %v2349 = vunpack.c.l.b16 %v1570
        %v2350 = vunpack.c.h.b16 %v1570
        %v2351 = vunpack.c.l.b16 %v1571
        %v2352 = vunpack.c.h.b16 %v1571
        %v2353 = vunpack.c.l.b16 %v1572
        %v2354 = vunpack.c.h.b16 %v1572
        %v2355 = vunpack.c.l.b16 %v1573
        %v2356 = vunpack.c.h.b16 %v1573
        %v2357 = vunpack.c.l.b16 %v1574
        %v2358 = vunpack.c.h.b16 %v1574
        %v2359 = vunpack.c.l.b16 %v1575
        %v2360 = vunpack.c.h.b16 %v1575
        %v2361 = vunpack.c.l.b16 %v1576
        %v2362 = vunpack.c.h.b16 %v1576
        %v2363 = vunpack.c.l.b16 %v1577
        %v2364 = vunpack.c.h.b16 %v1577
        %v2365 = vunpack.c.l.b16 %v1578
        %v2366 = vunpack.c.h.b16 %v1578
        %v2367 = vunpack.c.l.b16 %v1579
        %v2368 = vunpack.c.h.b16 %v1579
        %v2369 = vunpack.c.l.b16 %v1580
        %v2370 = vunpack.c.h.b16 %v1580
        %v2371 = vpack.c.b16 %v1863, %v1859
        %v2372 = vpack.c.b16 %v1864, %v1860
        %v2373 = vpack.c.b16 %v1865, %v1861
        %v2374 = vpack.c.b16 %v1866, %v1862
        %v2375 = vpack.c.b16 %v1871, %v1867
        %v2376 = vpack.c.b16 %v1872, %v1868
        %v2377 = vpack.c.b16 %v1873, %v1869
        %v2378 = vpack.c.b16 %v1874, %v1870
        %v2379 = vpack.c.b16 %v1879, %v1875
        %v2380 = vpack.c.b16 %v1880, %v1876
        %v2381 = vpack.c.b16 %v1881, %v1877
        %v2382 = vpack.c.b16 %v1882, %v1878
        %v2383 = vpack.c.b16 %v1887, %v1883
        %v2384 = vpack.c.b16 %v1888, %v1884
        %v2385 = vpack.c.b16 %v1889, %v1885
        %v2386 = vpack.c.b16 %v1890, %v1886
        %v2387 = vpack.c.b16 %v1895, %v1891
        %v2388 = vpack.c.b16 %v1896, %v1892
        %v2389 = vpack.c.b16 %v1897, %v1893
        %v2390 = vpack.c.b16 %v1898, %v1894
        %v2391 = vpack.c.b16 %v1903, %v1899
        %v2392 = vpack.c.b16 %v1904, %v1900
        %v2393 = vpack.c.b16 %v1905, %v1901
        %v2394 = vpack.c.b16 %v1906, %v1902
        %v2395 = vpack.c.b16 %v1911, %v1907
        %v2396 = vpack.c.b16 %v1912, %v1908
        %v2397 = vpack.c.b16 %v1913, %v1909
        %v2398 = vpack.c.b16 %v1914, %v1910
        %v2399 = vpack.c.b16 %v1919, %v1915
        %v2400 = vpack.c.b16 %v1920, %v1916
        %v2401 = vpack.c.b16 %v1921, %v1917
        %v2402 = vpack.c.b16 %v1922, %v1918
        %v2403 = vpack.c.b16 %v1927, %v1923
        %v2404 = vpack.c.b16 %v1928, %v1924
        %v2405 = vpack.c.b16 %v1929, %v1925
        %v2406 = vpack.c.b16 %v1930, %v1926
        %v2407 = vpack.c.b16 %v1935, %v1931
        %v2408 = vpack.c.b16 %v1936, %v1932
        %v2409 = vpack.c.b16 %v1937, %v1933
        %v2410 = vpack.c.b16 %v1938, %v1934
        %v2411 = vpack.c.b16 %v1943, %v1939
        %v2412 = vpack.c.b16 %v1944, %v1940
        %v2413 = vpack.c.b16 %v1945, %v1941
        %v2414 = vpack.c.b16 %v1946, %v1942
        %v2415 = vpack.c.b16 %v1951, %v1947
        %v2416 = vpack.c.b16 %v1952, %v1948
        %v2417 = vpack.c.b16 %v1953, %v1949
        %v2418 = vpack.c.b16 %v1954, %v1950
        %v2419 = vpack.c.b16 %v1959, %v1955
        %v2420 = vpack.c.b16 %v1960, %v1956
        %v2421 = vpack.c.b16 %v1961, %v1957
        %v2422 = vpack.c.b16 %v1962, %v1958
        %v2423 = vpack.c.b16 %v1967, %v1963
        %v2424 = vpack.c.b16 %v1968, %v1964
        %v2425 = vpack.c.b16 %v1969, %v1965
        %v2426 = vpack.c.b16 %v1970, %v1966
        %v2427 = vpack.c.b16 %v1975, %v1971
        %v2428 = vpack.c.b16 %v1976, %v1972
        %v2429 = vpack.c.b16 %v1977, %v1973
        %v2430 = vpack.c.b16 %v1978, %v1974
        %v2431 = vpack.c.b16 %v1983, %v1979
        %v2432 = vpack.c.b16 %v1984, %v1980
        %v2433 = vpack.c.b16 %v1985, %v1981
        %v2434 = vpack.c.b16 %v1986, %v1982
        %v2435 = vpack.c.b16 %v1991, %v1987
        %v2436 = vpack.c.b16 %v1992, %v1988
        %v2437 = vpack.c.b16 %v1993, %v1989
        %v2438 = vpack.c.b16 %v1994, %v1990
        %v2439 = vpack.c.b16 %v1999, %v1995
        %v2440 = vpack.c.b16 %v2000, %v1996
        %v2441 = vpack.c.b16 %v2001, %v1997
        %v2442 = vpack.c.b16 %v2002, %v1998
        %v2443 = vpack.c.b16 %v2007, %v2003
        %v2444 = vpack.c.b16 %v2008, %v2004
        %v2445 = vpack.c.b16 %v2009, %v2005
        %v2446 = vpack.c.b16 %v2010, %v2006
        %v2447 = vpack.c.b16 %v2015, %v2011
        %v2448 = vpack.c.b16 %v2016, %v2012
        %v2449 = vpack.c.b16 %v2017, %v2013
        %v2450 = vpack.c.b16 %v2018, %v2014
        %v2451 = vpack.c.b16 %v2023, %v2019
        %v2452 = vpack.c.b16 %v2024, %v2020
        %v2453 = vpack.c.b16 %v2025, %v2021
        %v2454 = vpack.c.b16 %v2026, %v2022
        %v2455 = vpack.c.b16 %v2031, %v2027
        %v2456 = vpack.c.b16 %v2032, %v2028
        %v2457 = vpack.c.b16 %v2033, %v2029
        %v2458 = vpack.c.b16 %v2034, %v2030
        %v2459 = vpack.c.b16 %v2039, %v2035
        %v2460 = vpack.c.b16 %v2040, %v2036
        %v2461 = vpack.c.b16 %v2041, %v2037
        %v2462 = vpack.c.b16 %v2042, %v2038
        %v2463 = vpack.c.b16 %v2047, %v2043
        %v2464 = vpack.c.b16 %v2048, %v2044
        %v2465 = vpack.c.b16 %v2049, %v2045
        %v2466 = vpack.c.b16 %v2050, %v2046
        %v2467 = vpack.c.b16 %v2055, %v2051
        %v2468 = vpack.c.b16 %v2056, %v2052
        %v2469 = vpack.c.b16 %v2057, %v2053
        %v2470 = vpack.c.b16 %v2058, %v2054
        %v2471 = vpack.c.b16 %v2063, %v2059
        %v2472 = vpack.c.b16 %v2064, %v2060
        %v2473 = vpack.c.b16 %v2065, %v2061
        %v2474 = vpack.c.b16 %v2066, %v2062
        %v2475 = vpack.c.b16 %v2071, %v2067
        %v2476 = vpack.c.b16 %v2072, %v2068
        %v2477 = vpack.c.b16 %v2073, %v2069
        %v2478 = vpack.c.b16 %v2074, %v2070
        %v2479 = vpack.c.b16 %v2079, %v2075
        %v2480 = vpack.c.b16 %v2080, %v2076
        %v2481 = vpack.c.b16 %v2081, %v2077
        %v2482 = vpack.c.b16 %v2082, %v2078
        %v2483 = vpack.c.b16 %v2087, %v2083
        %v2484 = vpack.c.b16 %v2088, %v2084
        %v2485 = vpack.c.b16 %v2089, %v2085
        %v2486 = vpack.c.b16 %v2090, %v2086
        %v2487 = vpack.c.b16 %v2095, %v2091
        %v2488 = vpack.c.b16 %v2096, %v2092
        %v2489 = vpack.c.b16 %v2097, %v2093
        %v2490 = vpack.c.b16 %v2098, %v2094
        %v2491 = vpack.c.b16 %v2103, %v2099
        %v2492 = vpack.c.b16 %v2104, %v2100
        %v2493 = vpack.c.b16 %v2105, %v2101
        %v2494 = vpack.c.b16 %v2106, %v2102
        %v2495 = vpack.c.b16 %v2111, %v2107
        %v2496 = vpack.c.b16 %v2112, %v2108
        %v2497 = vpack.c.b16 %v2113, %v2109
        %v2498 = vpack.c.b16 %v2114, %v2110
        %v2499 = vpack.c.b16 %v2119, %v2115
        %v2500 = vpack.c.b16 %v2120, %v2116
        %v2501 = vpack.c.b16 %v2121, %v2117
        %v2502 = vpack.c.b16 %v2122, %v2118
        %v2503 = vpack.c.b16 %v2127, %v2123
        %v2504 = vpack.c.b16 %v2128, %v2124
        %v2505 = vpack.c.b16 %v2129, %v2125
        %v2506 = vpack.c.b16 %v2130, %v2126
        %v2507 = vpack.c.b16 %v2135, %v2131
        %v2508 = vpack.c.b16 %v2136, %v2132
        %v2509 = vpack.c.b16 %v2137, %v2133
        %v2510 = vpack.c.b16 %v2138, %v2134
        %v2511 = vpack.c.b16 %v2143, %v2139
        %v2512 = vpack.c.b16 %v2144, %v2140
        %v2513 = vpack.c.b16 %v2145, %v2141
        %v2514 = vpack.c.b16 %v2146, %v2142
        %v2515 = vpack.c.b16 %v2151, %v2147
        %v2516 = vpack.c.b16 %v2152, %v2148
        %v2517 = vpack.c.b16 %v2153, %v2149
        %v2518 = vpack.c.b16 %v2154, %v2150
        %v2519 = vpack.c.b16 %v2159, %v2155
        %v2520 = vpack.c.b16 %v2160, %v2156
        %v2521 = vpack.c.b16 %v2161, %v2157
        %v2522 = vpack.c.b16 %v2162, %v2158
        %v2523 = vpack.c.b16 %v2167, %v2163
        %v2524 = vpack.c.b16 %v2168, %v2164
        %v2525 = vpack.c.b16 %v2169, %v2165
        %v2526 = vpack.c.b16 %v2170, %v2166
        %v2527 = vpack.c.b16 %v2175, %v2171
        %v2528 = vpack.c.b16 %v2176, %v2172
        %v2529 = vpack.c.b16 %v2177, %v2173
        %v2530 = vpack.c.b16 %v2178, %v2174
        %v2531 = vpack.c.b16 %v2183, %v2179
        %v2532 = vpack.c.b16 %v2184, %v2180
        %v2533 = vpack.c.b16 %v2185, %v2181
        %v2534 = vpack.c.b16 %v2186, %v2182
        %v2535 = vpack.c.b16 %v2191, %v2187
        %v2536 = vpack.c.b16 %v2192, %v2188
        %v2537 = vpack.c.b16 %v2193, %v2189
        %v2538 = vpack.c.b16 %v2194, %v2190
        %v2539 = vpack.c.b16 %v2199, %v2195
        %v2540 = vpack.c.b16 %v2200, %v2196
        %v2541 = vpack.c.b16 %v2201, %v2197
        %v2542 = vpack.c.b16 %v2202, %v2198
        %v2543 = vpack.c.b16 %v2207, %v2203
        %v2544 = vpack.c.b16 %v2208, %v2204
        %v2545 = vpack.c.b16 %v2209, %v2205
        %v2546 = vpack.c.b16 %v2210, %v2206
        %v2547 = vpack.c.b16 %v2215, %v2211
        %v2548 = vpack.c.b16 %v2216, %v2212
        %v2549 = vpack.c.b16 %v2217, %v2213
        %v2550 = vpack.c.b16 %v2218, %v2214
        %v2551 = vpack.c.b16 %v2223, %v2219
        %v2552 = vpack.c.b16 %v2224, %v2220
        %v2553 = vpack.c.b16 %v2225, %v2221
        %v2554 = vpack.c.b16 %v2226, %v2222
        %v2555 = vpack.c.b16 %v2231, %v2227
        %v2556 = vpack.c.b16 %v2232, %v2228
        %v2557 = vpack.c.b16 %v2233, %v2229
        %v2558 = vpack.c.b16 %v2234, %v2230
        %v2559 = vpack.c.b16 %v2239, %v2235
        %v2560 = vpack.c.b16 %v2240, %v2236
        %v2561 = vpack.c.b16 %v2241, %v2237
        %v2562 = vpack.c.b16 %v2242, %v2238
        %v2563 = vpack.c.b16 %v2247, %v2243
        %v2564 = vpack.c.b16 %v2248, %v2244
        %v2565 = vpack.c.b16 %v2249, %v2245
        %v2566 = vpack.c.b16 %v2250, %v2246
        %v2567 = vpack.c.b16 %v2255, %v2251
        %v2568 = vpack.c.b16 %v2256, %v2252
        %v2569 = vpack.c.b16 %v2257, %v2253
        %v2570 = vpack.c.b16 %v2258, %v2254
        %v2571 = vpack.c.b16 %v2263, %v2259
        %v2572 = vpack.c.b16 %v2264, %v2260
        %v2573 = vpack.c.b16 %v2265, %v2261
        %v2574 = vpack.c.b16 %v2266, %v2262
        %v2575 = vpack.c.b16 %v2271, %v2267
        %v2576 = vpack.c.b16 %v2272, %v2268
        %v2577 = vpack.c.b16 %v2273, %v2269
        %v2578 = vpack.c.b16 %v2274, %v2270
        %v2579 = vpack.c.b16 %v2279, %v2275
        %v2580 = vpack.c.b16 %v2280, %v2276
        %v2581 = vpack.c.b16 %v2281, %v2277
        %v2582 = vpack.c.b16 %v2282, %v2278
        %v2583 = vpack.c.b16 %v2287, %v2283
        %v2584 = vpack.c.b16 %v2288, %v2284
        %v2585 = vpack.c.b16 %v2289, %v2285
        %v2586 = vpack.c.b16 %v2290, %v2286
        %v2587 = vpack.c.b16 %v2295, %v2291
        %v2588 = vpack.c.b16 %v2296, %v2292
        %v2589 = vpack.c.b16 %v2297, %v2293
        %v2590 = vpack.c.b16 %v2298, %v2294
        %v2591 = vpack.c.b16 %v2303, %v2299
        %v2592 = vpack.c.b16 %v2304, %v2300
        %v2593 = vpack.c.b16 %v2305, %v2301
        %v2594 = vpack.c.b16 %v2306, %v2302
        %v2595 = vpack.c.b16 %v2311, %v2307
        %v2596 = vpack.c.b16 %v2312, %v2308
        %v2597 = vpack.c.b16 %v2313, %v2309
        %v2598 = vpack.c.b16 %v2314, %v2310
        %v2599 = vpack.c.b16 %v2319, %v2315
        %v2600 = vpack.c.b16 %v2320, %v2316
        %v2601 = vpack.c.b16 %v2321, %v2317
        %v2602 = vpack.c.b16 %v2322, %v2318
        %v2603 = vpack.c.b16 %v2327, %v2323
        %v2604 = vpack.c.b16 %v2328, %v2324
        %v2605 = vpack.c.b16 %v2329, %v2325
        %v2606 = vpack.c.b16 %v2330, %v2326
        %v2607 = vpack.c.b16 %v2335, %v2331
        %v2608 = vpack.c.b16 %v2336, %v2332
        %v2609 = vpack.c.b16 %v2337, %v2333
        %v2610 = vpack.c.b16 %v2338, %v2334
        %v2611 = vpack.c.b16 %v2343, %v2339
        %v2612 = vpack.c.b16 %v2344, %v2340
        %v2613 = vpack.c.b16 %v2345, %v2341
        %v2614 = vpack.c.b16 %v2346, %v2342
        %v2615 = vpack.c.b16 %v2351, %v2347
        %v2616 = vpack.c.b16 %v2352, %v2348
        %v2617 = vpack.c.b16 %v2353, %v2349
        %v2618 = vpack.c.b16 %v2354, %v2350
        %v2619 = vpack.c.b16 %v2359, %v2355
        %v2620 = vpack.c.b16 %v2360, %v2356
        %v2621 = vpack.c.b16 %v2361, %v2357
        %v2622 = vpack.c.b16 %v2362, %v2358
        %v2623 = vpack.c.b16 %v2367, %v2363
        %v2624 = vpack.c.b16 %v2368, %v2364
        %v2625 = vpack.c.b16 %v2369, %v2365
        %v2626 = vpack.c.b16 %v2370, %v2366
        %2883 = vmatprep.subr.bf16.mxu0 %v2400
        %2884 = vmatpush1.bf16.msra.mxu0 %v2399
        %2885 = vmatprep.subr.bf16.mxu0 %v2396
        %2886 = vmatpush1.bf16.msra.mxu0 %v2395
        %2887 = vmatprep.subr.bf16.mxu0 %v2392
        %2888 = vmatpush1.bf16.msra.mxu0 %v2391
        %2889 = vmatprep.subr.bf16.mxu0 %v2388
        %2890 = vmatpush1.bf16.msra.mxu0 %v2387
        %2891 = vmatprep.subr.bf16.mxu0 %v2384
        %2892 = vmatpush1.bf16.msra.mxu0 %v2383
        %2893 = vmatprep.subr.bf16.mxu0 %v2380
        %2894 = vmatpush1.bf16.msra.mxu0 %v2379
        %2895 = vmatprep.subr.bf16.mxu0 %v2376
        %2896 = vmatpush1.bf16.msra.mxu0 %v2375
        %2897 = vmatprep.subr.bf16.mxu0 %v2372
        %2898 = vmatpush1.bf16.msra.mxu0 %v2371
        %2899 = vmatprep.subr.bf16.mxu0 %v2432
        %2900 = vmatpush2.bf16.msra.mxu0 %v2431
        %2901 = vmatprep.subr.bf16.mxu0 %v2428
        %2902 = vmatpush2.bf16.msra.mxu0 %v2427
        %2903 = vmatprep.subr.bf16.mxu0 %v2424
        %2904 = vmatpush2.bf16.msra.mxu0 %v2423
        %2905 = vmatprep.subr.bf16.mxu0 %v2420
        %2906 = vmatpush2.bf16.msra.mxu0 %v2419
        %2907 = vmatprep.subr.bf16.mxu0 %v2416
        %2908 = vmatpush2.bf16.msra.mxu0 %v2415
        %2909 = vmatprep.subr.bf16.mxu0 %v2412
        %2910 = vmatpush2.bf16.msra.mxu0 %v2411
        %2911 = vmatprep.subr.bf16.mxu0 %v2408
        %2912 = vmatpush2.bf16.msra.mxu0 %v2407
        %2913 = vmatprep.subr.bf16.mxu0 %v2404
        %2914 = vmatpush2.bf16.msra.mxu0 %v2403
        %2915 = vmatprep.mubr.bf16.mxu0 %v1310
        %2916 = vmatmul.mubr.bf16.gmra.mxu0 %v1309
        %v2917 = vpop.f32.mrf.mxu0
        %v2918 = vadd.f32 %v1586, %v2917
        %v2919 = vpop.f32.mrf.mxu0
        %v2920 = vadd.f32 %v1590, %v2919
        %v2921 = vpop.f32.mrf.mxu0
        %v2922 = vadd.f32 %v1586, %v2921
        %v2923 = vpop.f32.mrf.mxu0
        %v2924 = vadd.f32 %v1590, %v2923
        %2925 = vmatprep.mubr.bf16.mxu0 %v1318
        %2926 = vmatmul.mubr.bf16.gmra.mxu0 %v1317
        %v2927 = vpop.f32.mrf.mxu0
        %v2928 = vadd.f32 %v1586, %v2927
        %v2929 = vpop.f32.mrf.mxu0
        %v2930 = vadd.f32 %v1590, %v2929
        %v2931 = vpop.f32.mrf.mxu0
        %v2932 = vadd.f32 %v1586, %v2931
        %v2933 = vpop.f32.mrf.mxu0
        %v2934 = vadd.f32 %v1590, %v2933
        %2935 = vdwg.mxu0
        %2936 = vmatprep.subr.bf16.mxu0 %v2464
        %2937 = vmatpush1.bf16.msra.mxu0 %v2463
        %2938 = vmatprep.subr.bf16.mxu0 %v2460
        %2939 = vmatpush1.bf16.msra.mxu0 %v2459
        %2940 = vmatprep.subr.bf16.mxu0 %v2456
        %2941 = vmatpush1.bf16.msra.mxu0 %v2455
        %2942 = vmatprep.subr.bf16.mxu0 %v2452
        %2943 = vmatpush1.bf16.msra.mxu0 %v2451
        %2944 = vmatprep.subr.bf16.mxu0 %v2448
        %2945 = vmatpush1.bf16.msra.mxu0 %v2447
        %2946 = vmatprep.subr.bf16.mxu0 %v2444
        %2947 = vmatpush1.bf16.msra.mxu0 %v2443
        %2948 = vmatprep.subr.bf16.mxu0 %v2440
        %2949 = vmatpush1.bf16.msra.mxu0 %v2439
        %2950 = vmatprep.subr.bf16.mxu0 %v2436
        %2951 = vmatpush1.bf16.msra.mxu0 %v2435
        %2952 = vmatprep.subr.bf16.mxu0 %v2496
        %2953 = vmatpush2.bf16.msra.mxu0 %v2495
        %2954 = vmatprep.subr.bf16.mxu0 %v2492
        %2955 = vmatpush2.bf16.msra.mxu0 %v2491
        %2956 = vmatprep.subr.bf16.mxu0 %v2488
        %2957 = vmatpush2.bf16.msra.mxu0 %v2487
        %2958 = vmatprep.subr.bf16.mxu0 %v2484
        %2959 = vmatpush2.bf16.msra.mxu0 %v2483
        %2960 = vmatprep.subr.bf16.mxu0 %v2480
        %2961 = vmatpush2.bf16.msra.mxu0 %v2479
        %2962 = vmatprep.subr.bf16.mxu0 %v2476
        %2963 = vmatpush2.bf16.msra.mxu0 %v2475
        %2964 = vmatprep.subr.bf16.mxu0 %v2472
        %2965 = vmatpush2.bf16.msra.mxu0 %v2471
        %2966 = vmatprep.subr.bf16.mxu0 %v2468
        %2967 = vmatpush2.bf16.msra.mxu0 %v2467
        %2968 = vmatprep.mubr.bf16.mxu0 %v1312
        %2969 = vmatmul.mubr.bf16.gmra.mxu0 %v1311
        %v2970 = vpop.f32.mrf.mxu0
        %v2971 = vadd.f32 %v2918, %v2970
        %v2972 = vpop.f32.mrf.mxu0
        %v2973 = vadd.f32 %v2920, %v2972
        %v2974 = vpop.f32.mrf.mxu0
        %v2975 = vadd.f32 %v2922, %v2974
        %v2976 = vpop.f32.mrf.mxu0
        %v2977 = vadd.f32 %v2924, %v2976
        %2978 = vmatprep.mubr.bf16.mxu0 %v1320
        %2979 = vmatmul.mubr.bf16.gmra.mxu0 %v1319
        %v2980 = vpop.f32.mrf.mxu0
        %v2981 = vadd.f32 %v2928, %v2980
        %v2982 = vpop.f32.mrf.mxu0
        %v2983 = vadd.f32 %v2930, %v2982
        %v2984 = vpop.f32.mrf.mxu0
        %v2985 = vadd.f32 %v2932, %v2984
        %v2986 = vpop.f32.mrf.mxu0
        %v2987 = vadd.f32 %v2934, %v2986
        %2988 = vdwg.mxu0
        %2989 = vmatprep.subr.bf16.mxu0 %v2528
        %2990 = vmatpush1.bf16.msra.mxu0 %v2527
        %2991 = vmatprep.subr.bf16.mxu0 %v2524
        %2992 = vmatpush1.bf16.msra.mxu0 %v2523
        %2993 = vmatprep.subr.bf16.mxu0 %v2520
        %2994 = vmatpush1.bf16.msra.mxu0 %v2519
        %2995 = vmatprep.subr.bf16.mxu0 %v2516
        %2996 = vmatpush1.bf16.msra.mxu0 %v2515
        %2997 = vmatprep.subr.bf16.mxu0 %v2512
        %2998 = vmatpush1.bf16.msra.mxu0 %v2511
        %2999 = vmatprep.subr.bf16.mxu0 %v2508
        %3000 = vmatpush1.bf16.msra.mxu0 %v2507
        %3001 = vmatprep.subr.bf16.mxu0 %v2504
        %3002 = vmatpush1.bf16.msra.mxu0 %v2503
        %3003 = vmatprep.subr.bf16.mxu0 %v2500
        %3004 = vmatpush1.bf16.msra.mxu0 %v2499
        %3005 = vmatprep.subr.bf16.mxu0 %v2560
        %3006 = vmatpush2.bf16.msra.mxu0 %v2559
        %3007 = vmatprep.subr.bf16.mxu0 %v2556
        %3008 = vmatpush2.bf16.msra.mxu0 %v2555
        %3009 = vmatprep.subr.bf16.mxu0 %v2552
        %3010 = vmatpush2.bf16.msra.mxu0 %v2551
        %3011 = vmatprep.subr.bf16.mxu0 %v2548
        %3012 = vmatpush2.bf16.msra.mxu0 %v2547
        %3013 = vmatprep.subr.bf16.mxu0 %v2544
        %3014 = vmatpush2.bf16.msra.mxu0 %v2543
        %3015 = vmatprep.subr.bf16.mxu0 %v2540
        %3016 = vmatpush2.bf16.msra.mxu0 %v2539
        %3017 = vmatprep.subr.bf16.mxu0 %v2536
        %3018 = vmatpush2.bf16.msra.mxu0 %v2535
        %3019 = vmatprep.subr.bf16.mxu0 %v2532
        %3020 = vmatpush2.bf16.msra.mxu0 %v2531
        %3021 = vmatprep.mubr.bf16.mxu0 %v1314
        %3022 = vmatmul.mubr.bf16.gmra.mxu0 %v1313
        %v3023 = vpop.f32.mrf.mxu0
        %v3024 = vadd.f32 %v2971, %v3023
        %v3025 = vpop.f32.mrf.mxu0
        %v3026 = vadd.f32 %v2973, %v3025
        %v3027 = vpop.f32.mrf.mxu0
        %v3028 = vadd.f32 %v2975, %v3027
        %v3029 = vpop.f32.mrf.mxu0
        %v3030 = vadd.f32 %v2977, %v3029
        %3031 = vmatprep.mubr.bf16.mxu0 %v1322
        %3032 = vmatmul.mubr.bf16.gmra.mxu0 %v1321
        %v3033 = vpop.f32.mrf.mxu0
        %v3034 = vadd.f32 %v2981, %v3033
        %v3035 = vpop.f32.mrf.mxu0
        %v3036 = vadd.f32 %v2983, %v3035
        %v3037 = vpop.f32.mrf.mxu0
        %v3038 = vadd.f32 %v2985, %v3037
        %v3039 = vpop.f32.mrf.mxu0
        %v3040 = vadd.f32 %v2987, %v3039
        %3041 = vdwg.mxu0
        %3042 = vmatprep.subr.bf16.mxu0 %v2592
        %3043 = vmatpush1.bf16.msra.mxu0 %v2591
        %3044 = vmatprep.subr.bf16.mxu0 %v2588
        %3045 = vmatpush1.bf16.msra.mxu0 %v2587
        %3046 = vmatprep.subr.bf16.mxu0 %v2584
        %3047 = vmatpush1.bf16.msra.mxu0 %v2583
        %3048 = vmatprep.subr.bf16.mxu0 %v2580
        %3049 = vmatpush1.bf16.msra.mxu0 %v2579
        %3050 = vmatprep.subr.bf16.mxu0 %v2576
        %3051 = vmatpush1.bf16.msra.mxu0 %v2575
        %3052 = vmatprep.subr.bf16.mxu0 %v2572
        %3053 = vmatpush1.bf16.msra.mxu0 %v2571
        %3054 = vmatprep.subr.bf16.mxu0 %v2568
        %3055 = vmatpush1.bf16.msra.mxu0 %v2567
        %3056 = vmatprep.subr.bf16.mxu0 %v2564
        %3057 = vmatpush1.bf16.msra.mxu0 %v2563
        %3058 = vmatprep.subr.bf16.mxu0 %v2624
        %3059 = vmatpush2.bf16.msra.mxu0 %v2623
        %3060 = vmatprep.subr.bf16.mxu0 %v2620
        %3061 = vmatpush2.bf16.msra.mxu0 %v2619
        %3062 = vmatprep.subr.bf16.mxu0 %v2616
        %3063 = vmatpush2.bf16.msra.mxu0 %v2615
        %3064 = vmatprep.subr.bf16.mxu0 %v2612
        %3065 = vmatpush2.bf16.msra.mxu0 %v2611
        %3066 = vmatprep.subr.bf16.mxu0 %v2608
        %3067 = vmatpush2.bf16.msra.mxu0 %v2607
        %3068 = vmatprep.subr.bf16.mxu0 %v2604
        %3069 = vmatpush2.bf16.msra.mxu0 %v2603
        %3070 = vmatprep.subr.bf16.mxu0 %v2600
        %3071 = vmatpush2.bf16.msra.mxu0 %v2599
        %3072 = vmatprep.subr.bf16.mxu0 %v2596
        %3073 = vmatpush2.bf16.msra.mxu0 %v2595
        %3074 = vmatprep.mubr.bf16.mxu0 %v1316
        %3075 = vmatmul.mubr.bf16.gmra.mxu0 %v1315
        %v3076 = vpop.f32.mrf.mxu0
        %v3077 = vadd.f32 %v3024, %v3076
        %v3078 = vpop.f32.mrf.mxu0
        %v3079 = vadd.f32 %v3026, %v3078
        %v3080 = vpop.f32.mrf.mxu0
        %v3081 = vadd.f32 %v3028, %v3080
        %v3082 = vpop.f32.mrf.mxu0
        %v3083 = vadd.f32 %v3030, %v3082
        %3084 = vmatprep.mubr.bf16.mxu0 %v1324
        %3085 = vmatmul.mubr.bf16.gmra.mxu0 %v1323
        %v3086 = vpop.f32.mrf.mxu0
        %v3087 = vadd.f32 %v3034, %v3086
        %v3088 = vpop.f32.mrf.mxu0
        %v3089 = vadd.f32 %v3036, %v3088
        %v3090 = vpop.f32.mrf.mxu0
        %v3091 = vadd.f32 %v3038, %v3090
        %v3092 = vpop.f32.mrf.mxu0
        %v3093 = vadd.f32 %v3040, %v3092
        %3094 = vdwg.mxu0
        %3095 = vmatprep.subr.bf16.mxu0 %v2402
        %3096 = vmatpush1.bf16.msra.mxu0 %v2401
        %3097 = vmatprep.subr.bf16.mxu0 %v2398
        %3098 = vmatpush1.bf16.msra.mxu0 %v2397
        %3099 = vmatprep.subr.bf16.mxu0 %v2394
        %3100 = vmatpush1.bf16.msra.mxu0 %v2393
        %3101 = vmatprep.subr.bf16.mxu0 %v2390
        %3102 = vmatpush1.bf16.msra.mxu0 %v2389
        %3103 = vmatprep.subr.bf16.mxu0 %v2386
        %3104 = vmatpush1.bf16.msra.mxu0 %v2385
        %3105 = vmatprep.subr.bf16.mxu0 %v2382
        %3106 = vmatpush1.bf16.msra.mxu0 %v2381
        %3107 = vmatprep.subr.bf16.mxu0 %v2378
        %3108 = vmatpush1.bf16.msra.mxu0 %v2377
        %3109 = vmatprep.subr.bf16.mxu0 %v2374
        %3110 = vmatpush1.bf16.msra.mxu0 %v2373
        %3111 = vmatprep.subr.bf16.mxu0 %v2434
        %3112 = vmatpush2.bf16.msra.mxu0 %v2433
        %3113 = vmatprep.subr.bf16.mxu0 %v2430
        %3114 = vmatpush2.bf16.msra.mxu0 %v2429
        %3115 = vmatprep.subr.bf16.mxu0 %v2426
        %3116 = vmatpush2.bf16.msra.mxu0 %v2425
        %3117 = vmatprep.subr.bf16.mxu0 %v2422
        %3118 = vmatpush2.bf16.msra.mxu0 %v2421
        %3119 = vmatprep.subr.bf16.mxu0 %v2418
        %3120 = vmatpush2.bf16.msra.mxu0 %v2417
        %3121 = vmatprep.subr.bf16.mxu0 %v2414
        %3122 = vmatpush2.bf16.msra.mxu0 %v2413
        %3123 = vmatprep.subr.bf16.mxu0 %v2410
        %3124 = vmatpush2.bf16.msra.mxu0 %v2409
        %3125 = vmatprep.subr.bf16.mxu0 %v2406
        %3126 = vmatpush2.bf16.msra.mxu0 %v2405
        %3127 = vmatprep.mubr.bf16.mxu0 %v1310
        %3128 = vmatmul.mubr.bf16.gmra.mxu0 %v1309
        %v3129 = vpop.f32.mrf.mxu0
        %v3130 = vadd.f32 %v1594, %v3129
        %v3131 = vpop.f32.mrf.mxu0
        %v3132 = vadd.f32 %v1598, %v3131
        %v3133 = vpop.f32.mrf.mxu0
        %v3134 = vadd.f32 %v1594, %v3133
        %v3135 = vpop.f32.mrf.mxu0
        %v3136 = vadd.f32 %v1598, %v3135
        %3137 = vmatprep.mubr.bf16.mxu0 %v1318
        %3138 = vmatmul.mubr.bf16.gmra.mxu0 %v1317
        %v3139 = vpop.f32.mrf.mxu0
        %v3140 = vadd.f32 %v1594, %v3139
        %v3141 = vpop.f32.mrf.mxu0
        %v3142 = vadd.f32 %v1598, %v3141
        %v3143 = vpop.f32.mrf.mxu0
        %v3144 = vadd.f32 %v1594, %v3143
        %v3145 = vpop.f32.mrf.mxu0
        %v3146 = vadd.f32 %v1598, %v3145
        %3147 = vdwg.mxu0
        %3148 = vmatprep.subr.bf16.mxu0 %v2466
        %3149 = vmatpush1.bf16.msra.mxu0 %v2465
        %3150 = vmatprep.subr.bf16.mxu0 %v2462
        %3151 = vmatpush1.bf16.msra.mxu0 %v2461
        %3152 = vmatprep.subr.bf16.mxu0 %v2458
        %3153 = vmatpush1.bf16.msra.mxu0 %v2457
        %3154 = vmatprep.subr.bf16.mxu0 %v2454
        %3155 = vmatpush1.bf16.msra.mxu0 %v2453
        %3156 = vmatprep.subr.bf16.mxu0 %v2450
        %3157 = vmatpush1.bf16.msra.mxu0 %v2449
        %3158 = vmatprep.subr.bf16.mxu0 %v2446
        %3159 = vmatpush1.bf16.msra.mxu0 %v2445
        %3160 = vmatprep.subr.bf16.mxu0 %v2442
        %3161 = vmatpush1.bf16.msra.mxu0 %v2441
        %3162 = vmatprep.subr.bf16.mxu0 %v2438
        %3163 = vmatpush1.bf16.msra.mxu0 %v2437
        %3164 = vmatprep.subr.bf16.mxu0 %v2498
        %3165 = vmatpush2.bf16.msra.mxu0 %v2497
        %3166 = vmatprep.subr.bf16.mxu0 %v2494
        %3167 = vmatpush2.bf16.msra.mxu0 %v2493
        %3168 = vmatprep.subr.bf16.mxu0 %v2490
        %3169 = vmatpush2.bf16.msra.mxu0 %v2489
        %3170 = vmatprep.subr.bf16.mxu0 %v2486
        %3171 = vmatpush2.bf16.msra.mxu0 %v2485
        %3172 = vmatprep.subr.bf16.mxu0 %v2482
        %3173 = vmatpush2.bf16.msra.mxu0 %v2481
        %3174 = vmatprep.subr.bf16.mxu0 %v2478
        %3175 = vmatpush2.bf16.msra.mxu0 %v2477
        %3176 = vmatprep.subr.bf16.mxu0 %v2474
        %3177 = vmatpush2.bf16.msra.mxu0 %v2473
        %3178 = vmatprep.subr.bf16.mxu0 %v2470
        %3179 = vmatpush2.bf16.msra.mxu0 %v2469
        %3180 = vmatprep.mubr.bf16.mxu0 %v1312
        %3181 = vmatmul.mubr.bf16.gmra.mxu0 %v1311
        %v3182 = vpop.f32.mrf.mxu0
        %v3183 = vadd.f32 %v3130, %v3182
        %v3184 = vpop.f32.mrf.mxu0
        %v3185 = vadd.f32 %v3132, %v3184
        %v3186 = vpop.f32.mrf.mxu0
        %v3187 = vadd.f32 %v3134, %v3186
        %v3188 = vpop.f32.mrf.mxu0
        %v3189 = vadd.f32 %v3136, %v3188
        %3190 = vmatprep.mubr.bf16.mxu0 %v1320
        %3191 = vmatmul.mubr.bf16.gmra.mxu0 %v1319
        %v3192 = vpop.f32.mrf.mxu0
        %v3193 = vadd.f32 %v3140, %v3192
        %v3194 = vpop.f32.mrf.mxu0
        %v3195 = vadd.f32 %v3142, %v3194
        %v3196 = vpop.f32.mrf.mxu0
        %v3197 = vadd.f32 %v3144, %v3196
        %v3198 = vpop.f32.mrf.mxu0
        %v3199 = vadd.f32 %v3146, %v3198
        %3200 = vdwg.mxu0
        %3201 = vmatprep.subr.bf16.mxu0 %v2530
        %3202 = vmatpush1.bf16.msra.mxu0 %v2529
        %3203 = vmatprep.subr.bf16.mxu0 %v2526
        %3204 = vmatpush1.bf16.msra.mxu0 %v2525
        %3205 = vmatprep.subr.bf16.mxu0 %v2522
        %3206 = vmatpush1.bf16.msra.mxu0 %v2521
        %3207 = vmatprep.subr.bf16.mxu0 %v2518
        %3208 = vmatpush1.bf16.msra.mxu0 %v2517
        %3209 = vmatprep.subr.bf16.mxu0 %v2514
        %3210 = vmatpush1.bf16.msra.mxu0 %v2513
        %3211 = vmatprep.subr.bf16.mxu0 %v2510
        %3212 = vmatpush1.bf16.msra.mxu0 %v2509
        %3213 = vmatprep.subr.bf16.mxu0 %v2506
        %3214 = vmatpush1.bf16.msra.mxu0 %v2505
        %3215 = vmatprep.subr.bf16.mxu0 %v2502
        %3216 = vmatpush1.bf16.msra.mxu0 %v2501
        %3217 = vmatprep.subr.bf16.mxu0 %v2562
        %3218 = vmatpush2.bf16.msra.mxu0 %v2561
        %3219 = vmatprep.subr.bf16.mxu0 %v2558
        %3220 = vmatpush2.bf16.msra.mxu0 %v2557
        %3221 = vmatprep.subr.bf16.mxu0 %v2554
        %3222 = vmatpush2.bf16.msra.mxu0 %v2553
        %3223 = vmatprep.subr.bf16.mxu0 %v2550
        %3224 = vmatpush2.bf16.msra.mxu0 %v2549
        %3225 = vmatprep.subr.bf16.mxu0 %v2546
        %3226 = vmatpush2.bf16.msra.mxu0 %v2545
        %3227 = vmatprep.subr.bf16.mxu0 %v2542
        %3228 = vmatpush2.bf16.msra.mxu0 %v2541
        %3229 = vmatprep.subr.bf16.mxu0 %v2538
        %3230 = vmatpush2.bf16.msra.mxu0 %v2537
        %3231 = vmatprep.subr.bf16.mxu0 %v2534
        %3232 = vmatpush2.bf16.msra.mxu0 %v2533
        %3233 = vmatprep.mubr.bf16.mxu0 %v1314
        %3234 = vmatmul.mubr.bf16.gmra.mxu0 %v1313
        %v3235 = vpop.f32.mrf.mxu0
        %v3236 = vadd.f32 %v3183, %v3235
        %v3237 = vpop.f32.mrf.mxu0
        %v3238 = vadd.f32 %v3185, %v3237
        %v3239 = vpop.f32.mrf.mxu0
        %v3240 = vadd.f32 %v3187, %v3239
        %v3241 = vpop.f32.mrf.mxu0
        %v3242 = vadd.f32 %v3189, %v3241
        %3243 = vmatprep.mubr.bf16.mxu0 %v1322
        %3244 = vmatmul.mubr.bf16.gmra.mxu0 %v1321
        %v3245 = vpop.f32.mrf.mxu0
        %v3246 = vadd.f32 %v3193, %v3245
        %v3247 = vpop.f32.mrf.mxu0
        %v3248 = vadd.f32 %v3195, %v3247
        %v3249 = vpop.f32.mrf.mxu0
        %v3250 = vadd.f32 %v3197, %v3249
        %v3251 = vpop.f32.mrf.mxu0
        %v3252 = vadd.f32 %v3199, %v3251
        %3253 = vdwg.mxu0
        %3254 = vmatprep.subr.bf16.mxu0 %v2594
        %3255 = vmatpush1.bf16.msra.mxu0 %v2593
        %3256 = vmatprep.subr.bf16.mxu0 %v2590
        %3257 = vmatpush1.bf16.msra.mxu0 %v2589
        %3258 = vmatprep.subr.bf16.mxu0 %v2586
        %3259 = vmatpush1.bf16.msra.mxu0 %v2585
        %3260 = vmatprep.subr.bf16.mxu0 %v2582
        %3261 = vmatpush1.bf16.msra.mxu0 %v2581
        %3262 = vmatprep.subr.bf16.mxu0 %v2578
        %3263 = vmatpush1.bf16.msra.mxu0 %v2577
        %3264 = vmatprep.subr.bf16.mxu0 %v2574
        %3265 = vmatpush1.bf16.msra.mxu0 %v2573
        %3266 = vmatprep.subr.bf16.mxu0 %v2570
        %3267 = vmatpush1.bf16.msra.mxu0 %v2569
        %3268 = vmatprep.subr.bf16.mxu0 %v2566
        %3269 = vmatpush1.bf16.msra.mxu0 %v2565
        %3270 = vmatprep.subr.bf16.mxu0 %v2626
        %3271 = vmatpush2.bf16.msra.mxu0 %v2625
        %3272 = vmatprep.subr.bf16.mxu0 %v2622
        %3273 = vmatpush2.bf16.msra.mxu0 %v2621
        %3274 = vmatprep.subr.bf16.mxu0 %v2618
        %3275 = vmatpush2.bf16.msra.mxu0 %v2617
        %3276 = vmatprep.subr.bf16.mxu0 %v2614
        %3277 = vmatpush2.bf16.msra.mxu0 %v2613
        %3278 = vmatprep.subr.bf16.mxu0 %v2610
        %3279 = vmatpush2.bf16.msra.mxu0 %v2609
        %3280 = vmatprep.subr.bf16.mxu0 %v2606
        %3281 = vmatpush2.bf16.msra.mxu0 %v2605
        %3282 = vmatprep.subr.bf16.mxu0 %v2602
        %3283 = vmatpush2.bf16.msra.mxu0 %v2601
        %3284 = vmatprep.subr.bf16.mxu0 %v2598
        %3285 = vmatpush2.bf16.msra.mxu0 %v2597
        %3286 = vmatprep.mubr.bf16.mxu0 %v1316
        %3287 = vmatmul.mubr.bf16.gmra.mxu0 %v1315
        %v3288 = vpop.f32.mrf.mxu0
        %v3289 = vadd.f32 %v3236, %v3288
        %v3290 = vpop.f32.mrf.mxu0
        %v3291 = vadd.f32 %v3238, %v3290
        %v3292 = vpop.f32.mrf.mxu0
        %v3293 = vadd.f32 %v3240, %v3292
        %v3294 = vpop.f32.mrf.mxu0
        %v3295 = vadd.f32 %v3242, %v3294
        %3296 = vmatprep.mubr.bf16.mxu0 %v1324
        %3297 = vmatmul.mubr.bf16.gmra.mxu0 %v1323
        %v3298 = vpop.f32.mrf.mxu0
        %v3299 = vadd.f32 %v3246, %v3298
        %v3300 = vpop.f32.mrf.mxu0
        %v3301 = vadd.f32 %v3248, %v3300
        %v3302 = vpop.f32.mrf.mxu0
        %v3303 = vadd.f32 %v3250, %v3302
        %v3304 = vpop.f32.mrf.mxu0
        %v3305 = vadd.f32 %v3252, %v3304
        %3306 = vdwg.mxu0
        %vm3307 = vcmp.ge.f32.partialorder %v3077, 0.0
        %vm3308 = vcmp.ge.f32.partialorder %v3079, 0.0
        %vm3309 = vcmp.ge.f32.partialorder %v3289, 0.0
        %vm3310 = vcmp.ge.f32.partialorder %v3291, 0.0
        %vm3311 = vcmp.ge.f32.partialorder %v3081, 0.0
        %vm3312 = vcmp.ge.f32.partialorder %v3083, 0.0
        %vm3313 = vcmp.ge.f32.partialorder %v3293, 0.0
        %vm3314 = vcmp.ge.f32.partialorder %v3295, 0.0
        %vm3315 = vcmp.ge.f32.partialorder %v3087, 0.0
        %vm3316 = vcmp.ge.f32.partialorder %v3089, 0.0
        %vm3317 = vcmp.ge.f32.partialorder %v3299, 0.0
        %vm3318 = vcmp.ge.f32.partialorder %v3301, 0.0
        %vm3319 = vcmp.ge.f32.partialorder %v3091, 0.0
        %vm3320 = vcmp.ge.f32.partialorder %v3093, 0.0
        %vm3321 = vcmp.ge.f32.partialorder %v3303, 0.0
        %vm3322 = vcmp.ge.f32.partialorder %v3305, 0.0
        %v3323 = vmul.f32 %v3077, 0.01
        %v3324 = vmul.f32 %v3079, 0.01
        %v3325 = vmul.f32 %v3289, 0.01
        %v3326 = vmul.f32 %v3291, 0.01
        %v3327 = vmul.f32 %v3081, 0.01
        %v3328 = vmul.f32 %v3083, 0.01
        %v3329 = vmul.f32 %v3293, 0.01
        %v3330 = vmul.f32 %v3295, 0.01
        %v3331 = vmul.f32 %v3087, 0.01
        %v3332 = vmul.f32 %v3089, 0.01
        %v3333 = vmul.f32 %v3299, 0.01
        %v3334 = vmul.f32 %v3301, 0.01
        %v3335 = vmul.f32 %v3091, 0.01
        %v3336 = vmul.f32 %v3093, 0.01
        %v3337 = vmul.f32 %v3303, 0.01
        %v3338 = vmul.f32 %v3305, 0.01
        %v3339 = vsel %vm3307, %v3077, %v3323
        %v3340 = vsel %vm3308, %v3079, %v3324
        %v3341 = vsel %vm3309, %v3289, %v3325
        %v3342 = vsel %vm3310, %v3291, %v3326
        %v3343 = vsel %vm3311, %v3081, %v3327
        %v3344 = vsel %vm3312, %v3083, %v3328
        %v3345 = vsel %vm3313, %v3293, %v3329
        %v3346 = vsel %vm3314, %v3295, %v3330
        %v3347 = vsel %vm3315, %v3087, %v3331
        %v3348 = vsel %vm3316, %v3089, %v3332
        %v3349 = vsel %vm3317, %v3299, %v3333
        %v3350 = vsel %vm3318, %v3301, %v3334
        %v3351 = vsel %vm3319, %v3091, %v3335
        %v3352 = vsel %vm3320, %v3093, %v3336
        %v3353 = vsel %vm3321, %v3303, %v3337
        %v3354 = vsel %vm3322, %v3305, %v3338
        %v3355 = vpack.c.bf16 %v3343, %v3339
        %v3356 = vpack.c.bf16 %v3344, %v3340
        %v3357 = vpack.c.bf16 %v3345, %v3341
        %v3358 = vpack.c.bf16 %v3346, %v3342
        %v3359 = vpack.c.bf16 %v3351, %v3347
        %v3360 = vpack.c.bf16 %v3352, %v3348
        %v3361 = vpack.c.bf16 %v3353, %v3349
        %v3362 = vpack.c.bf16 %v3354, %v3350
        %v3363 = vld [vmem:[#allocation11] sm:$0xff]
        %v3364 = vld [vmem:[#allocation11 + $0x8] sm:$0xff]
        %v3365 = vld [vmem:[#allocation11 + $0x10] sm:$0xff]
        %v3366 = vld [vmem:[#allocation11 + $0x18] sm:$0xff]
        %v3367 = vld [vmem:[#allocation11 + $0x20] sm:$0xff]
        %v3368 = vld [vmem:[#allocation11 + $0x28] sm:$0xff]
        %v3369 = vld [vmem:[#allocation11 + $0x30] sm:$0xff]
        %v3370 = vld [vmem:[#allocation11 + $0x38] sm:$0xff]
        %v3371 = vld [vmem:[#allocation11 + $0x40] sm:$0xff]
        %v3372 = vld [vmem:[#allocation11 + $0x48] sm:$0xff]
        %v3373 = vld [vmem:[#allocation11 + $0x50] sm:$0xff]
        %v3374 = vld [vmem:[#allocation11 + $0x58] sm:$0xff]
        %v3375 = vld [vmem:[#allocation11 + $0x60] sm:$0xff]
        %v3376 = vld [vmem:[#allocation11 + $0x68] sm:$0xff]
        %v3377 = vld [vmem:[#allocation11 + $0x70] sm:$0xff]
        %v3378 = vld [vmem:[#allocation11 + $0x78] sm:$0xff]
        %v3379 = vld [vmem:[#allocation11 + $0x80] sm:$0xff]
        %v3380 = vld [vmem:[#allocation11 + $0x88] sm:$0xff]
        %v3381 = vld [vmem:[#allocation11 + $0x90] sm:$0xff]
        %v3382 = vld [vmem:[#allocation11 + $0x98] sm:$0xff]
        %v3383 = vld [vmem:[#allocation11 + $0xa0] sm:$0xff]
        %v3384 = vld [vmem:[#allocation11 + $0xa8] sm:$0xff]
        %v3385 = vld [vmem:[#allocation11 + $0xb0] sm:$0xff]
        %v3386 = vld [vmem:[#allocation11 + $0xb8] sm:$0xff]
        %v3387 = vld [vmem:[#allocation11 + $0xc0] sm:$0xff]
        %v3388 = vld [vmem:[#allocation11 + $0xc8] sm:$0xff]
        %v3389 = vld [vmem:[#allocation11 + $0xd0] sm:$0xff]
        %v3390 = vld [vmem:[#allocation11 + $0xd8] sm:$0xff]
        %v3391 = vld [vmem:[#allocation11 + $0xe0] sm:$0xff]
        %v3392 = vld [vmem:[#allocation11 + $0xe8] sm:$0xff]
        %v3393 = vld [vmem:[#allocation11 + $0xf0] sm:$0xff]
        %v3394 = vld [vmem:[#allocation11 + $0xf8] sm:$0xff]
        %v3395 = vld [vmem:[#allocation11 + $0x100] sm:$0xff]
        %v3396 = vld [vmem:[#allocation11 + $0x108] sm:$0xff]
        %v3397 = vld [vmem:[#allocation11 + $0x110] sm:$0xff]
        %v3398 = vld [vmem:[#allocation11 + $0x118] sm:$0xff]
        %v3399 = vld [vmem:[#allocation11 + $0x120] sm:$0xff]
        %v3400 = vld [vmem:[#allocation11 + $0x128] sm:$0xff]
        %v3401 = vld [vmem:[#allocation11 + $0x130] sm:$0xff]
        %v3402 = vld [vmem:[#allocation11 + $0x138] sm:$0xff]
        %v3403 = vld [vmem:[#allocation11 + $0x140] sm:$0xff]
        %v3404 = vld [vmem:[#allocation11 + $0x148] sm:$0xff]
        %v3405 = vld [vmem:[#allocation11 + $0x150] sm:$0xff]
        %v3406 = vld [vmem:[#allocation11 + $0x158] sm:$0xff]
        %v3407 = vld [vmem:[#allocation11 + $0x160] sm:$0xff]
        %v3408 = vld [vmem:[#allocation11 + $0x168] sm:$0xff]
        %v3409 = vld [vmem:[#allocation11 + $0x170] sm:$0xff]
        %v3410 = vld [vmem:[#allocation11 + $0x178] sm:$0xff]
        %v3411 = vld [vmem:[#allocation11 + $0x180] sm:$0xff]
        %v3412 = vld [vmem:[#allocation11 + $0x188] sm:$0xff]
        %v3413 = vld [vmem:[#allocation11 + $0x190] sm:$0xff]
        %v3414 = vld [vmem:[#allocation11 + $0x198] sm:$0xff]
        %v3415 = vld [vmem:[#allocation11 + $0x1a0] sm:$0xff]
        %v3416 = vld [vmem:[#allocation11 + $0x1a8] sm:$0xff]
        %v3417 = vld [vmem:[#allocation11 + $0x1b0] sm:$0xff]
        %v3418 = vld [vmem:[#allocation11 + $0x1b8] sm:$0xff]
        %v3419 = vld [vmem:[#allocation11 + $0x1c0] sm:$0xff]
        %v3420 = vld [vmem:[#allocation11 + $0x1c8] sm:$0xff]
        %v3421 = vld [vmem:[#allocation11 + $0x1d0] sm:$0xff]
        %v3422 = vld [vmem:[#allocation11 + $0x1d8] sm:$0xff]
        %v3423 = vld [vmem:[#allocation11 + $0x1e0] sm:$0xff]
        %v3424 = vld [vmem:[#allocation11 + $0x1e8] sm:$0xff]
        %v3425 = vld [vmem:[#allocation11 + $0x1f0] sm:$0xff]
        %v3426 = vld [vmem:[#allocation11 + $0x1f8] sm:$0xff]
        %v3427 = vld [vmem:[%s8] sm:$0x3]
        %v3429 = vlaneseq
        %v3430 = vshrl.u32 %v3429, 7
        %v3431 = vsub.s32 0, %v3430
        %v3432 = vrot.slane %v3427, %v3431
        %v3433 = vlaneseq
        %v3434 = vshrl.u32 %v3433, 7
        %v3435 = vsub.s32 1, %v3434
        %v3436 = vrot.slane %v3427, %v3435
        %v3503 = vunpack.c.l.b16 %v3363
        %v3504 = vunpack.c.h.b16 %v3363
        %v3505 = vunpack.c.l.b16 %v3364
        %v3506 = vunpack.c.h.b16 %v3364
        %v3507 = vunpack.c.l.b16 %v3365
        %v3508 = vunpack.c.h.b16 %v3365
        %v3509 = vunpack.c.l.b16 %v3366
        %v3510 = vunpack.c.h.b16 %v3366
        %v3511 = vunpack.c.l.b16 %v3367
        %v3512 = vunpack.c.h.b16 %v3367
        %v3513 = vunpack.c.l.b16 %v3368
        %v3514 = vunpack.c.h.b16 %v3368
        %v3515 = vunpack.c.l.b16 %v3369
        %v3516 = vunpack.c.h.b16 %v3369
        %v3517 = vunpack.c.l.b16 %v3370
        %v3518 = vunpack.c.h.b16 %v3370
        %v3519 = vunpack.c.l.b16 %v3371
        %v3520 = vunpack.c.h.b16 %v3371
        %v3521 = vunpack.c.l.b16 %v3372
        %v3522 = vunpack.c.h.b16 %v3372
        %v3523 = vunpack.c.l.b16 %v3373
        %v3524 = vunpack.c.h.b16 %v3373
        %v3525 = vunpack.c.l.b16 %v3374
        %v3526 = vunpack.c.h.b16 %v3374
        %v3527 = vunpack.c.l.b16 %v3375
        %v3528 = vunpack.c.h.b16 %v3375
        %v3529 = vunpack.c.l.b16 %v3376
        %v3530 = vunpack.c.h.b16 %v3376
        %v3531 = vunpack.c.l.b16 %v3377
        %v3532 = vunpack.c.h.b16 %v3377
        %v3533 = vunpack.c.l.b16 %v3378
        %v3534 = vunpack.c.h.b16 %v3378
        %v3535 = vunpack.c.l.b16 %v3379
        %v3536 = vunpack.c.h.b16 %v3379
        %v3537 = vunpack.c.l.b16 %v3380
        %v3538 = vunpack.c.h.b16 %v3380
        %v3539 = vunpack.c.l.b16 %v3381
        %v3540 = vunpack.c.h.b16 %v3381
        %v3541 = vunpack.c.l.b16 %v3382
        %v3542 = vunpack.c.h.b16 %v3382
        %v3543 = vunpack.c.l.b16 %v3383
        %v3544 = vunpack.c.h.b16 %v3383
        %v3545 = vunpack.c.l.b16 %v3384
        %v3546 = vunpack.c.h.b16 %v3384
        %v3547 = vunpack.c.l.b16 %v3385
        %v3548 = vunpack.c.h.b16 %v3385
        %v3549 = vunpack.c.l.b16 %v3386
        %v3550 = vunpack.c.h.b16 %v3386
        %v3551 = vunpack.c.l.b16 %v3387
        %v3552 = vunpack.c.h.b16 %v3387
        %v3553 = vunpack.c.l.b16 %v3388
        %v3554 = vunpack.c.h.b16 %v3388
        %v3555 = vunpack.c.l.b16 %v3389
        %v3556 = vunpack.c.h.b16 %v3389
        %v3557 = vunpack.c.l.b16 %v3390
        %v3558 = vunpack.c.h.b16 %v3390
        %v3559 = vunpack.c.l.b16 %v3391
        %v3560 = vunpack.c.h.b16 %v3391
        %v3561 = vunpack.c.l.b16 %v3392
        %v3562 = vunpack.c.h.b16 %v3392
        %v3563 = vunpack.c.l.b16 %v3393
        %v3564 = vunpack.c.h.b16 %v3393
        %v3565 = vunpack.c.l.b16 %v3394
        %v3566 = vunpack.c.h.b16 %v3394
        %v3567 = vunpack.c.l.b16 %v3395
        %v3568 = vunpack.c.h.b16 %v3395
        %v3569 = vunpack.c.l.b16 %v3396
        %v3570 = vunpack.c.h.b16 %v3396
        %v3571 = vunpack.c.l.b16 %v3397
        %v3572 = vunpack.c.h.b16 %v3397
        %v3573 = vunpack.c.l.b16 %v3398
        %v3574 = vunpack.c.h.b16 %v3398
        %v3575 = vunpack.c.l.b16 %v3399
        %v3576 = vunpack.c.h.b16 %v3399
        %v3577 = vunpack.c.l.b16 %v3400
        %v3578 = vunpack.c.h.b16 %v3400
        %v3579 = vunpack.c.l.b16 %v3401
        %v3580 = vunpack.c.h.b16 %v3401
        %v3581 = vunpack.c.l.b16 %v3402
        %v3582 = vunpack.c.h.b16 %v3402
        %v3583 = vunpack.c.l.b16 %v3403
        %v3584 = vunpack.c.h.b16 %v3403
        %v3585 = vunpack.c.l.b16 %v3404
        %v3586 = vunpack.c.h.b16 %v3404
        %v3587 = vunpack.c.l.b16 %v3405
        %v3588 = vunpack.c.h.b16 %v3405
        %v3589 = vunpack.c.l.b16 %v3406
        %v3590 = vunpack.c.h.b16 %v3406
        %v3591 = vunpack.c.l.b16 %v3407
        %v3592 = vunpack.c.h.b16 %v3407
        %v3593 = vunpack.c.l.b16 %v3408
        %v3594 = vunpack.c.h.b16 %v3408
        %v3595 = vunpack.c.l.b16 %v3409
        %v3596 = vunpack.c.h.b16 %v3409
        %v3597 = vunpack.c.l.b16 %v3410
        %v3598 = vunpack.c.h.b16 %v3410
        %v3599 = vunpack.c.l.b16 %v3411
        %v3600 = vunpack.c.h.b16 %v3411
        %v3601 = vunpack.c.l.b16 %v3412
        %v3602 = vunpack.c.h.b16 %v3412
        %v3603 = vunpack.c.l.b16 %v3413
        %v3604 = vunpack.c.h.b16 %v3413
        %v3605 = vunpack.c.l.b16 %v3414
        %v3606 = vunpack.c.h.b16 %v3414
        %v3607 = vunpack.c.l.b16 %v3415
        %v3608 = vunpack.c.h.b16 %v3415
        %v3609 = vunpack.c.l.b16 %v3416
        %v3610 = vunpack.c.h.b16 %v3416
        %v3611 = vunpack.c.l.b16 %v3417
        %v3612 = vunpack.c.h.b16 %v3417
        %v3613 = vunpack.c.l.b16 %v3418
        %v3614 = vunpack.c.h.b16 %v3418
        %v3615 = vunpack.c.l.b16 %v3419
        %v3616 = vunpack.c.h.b16 %v3419
        %v3617 = vunpack.c.l.b16 %v3420
        %v3618 = vunpack.c.h.b16 %v3420
        %v3619 = vunpack.c.l.b16 %v3421
        %v3620 = vunpack.c.h.b16 %v3421
        %v3621 = vunpack.c.l.b16 %v3422
        %v3622 = vunpack.c.h.b16 %v3422
        %v3623 = vunpack.c.l.b16 %v3423
        %v3624 = vunpack.c.h.b16 %v3423
        %v3625 = vunpack.c.l.b16 %v3424
        %v3626 = vunpack.c.h.b16 %v3424
        %v3627 = vunpack.c.l.b16 %v3425
        %v3628 = vunpack.c.h.b16 %v3425
        %v3629 = vunpack.c.l.b16 %v3426
        %v3630 = vunpack.c.h.b16 %v3426
        %v3631 = vpack.c.b16 %v3505, %v3503
        %v3632 = vpack.c.b16 %v3506, %v3504
        %v3633 = vpack.c.b16 %v3509, %v3507
        %v3634 = vpack.c.b16 %v3510, %v3508
        %v3635 = vpack.c.b16 %v3513, %v3511
        %v3636 = vpack.c.b16 %v3514, %v3512
        %v3637 = vpack.c.b16 %v3517, %v3515
        %v3638 = vpack.c.b16 %v3518, %v3516
        %v3639 = vpack.c.b16 %v3521, %v3519
        %v3640 = vpack.c.b16 %v3522, %v3520
        %v3641 = vpack.c.b16 %v3525, %v3523
        %v3642 = vpack.c.b16 %v3526, %v3524
        %v3643 = vpack.c.b16 %v3529, %v3527
        %v3644 = vpack.c.b16 %v3530, %v3528
        %v3645 = vpack.c.b16 %v3533, %v3531
        %v3646 = vpack.c.b16 %v3534, %v3532
        %v3647 = vpack.c.b16 %v3537, %v3535
        %v3648 = vpack.c.b16 %v3538, %v3536
        %v3649 = vpack.c.b16 %v3541, %v3539
        %v3650 = vpack.c.b16 %v3542, %v3540
        %v3651 = vpack.c.b16 %v3545, %v3543
        %v3652 = vpack.c.b16 %v3546, %v3544
        %v3653 = vpack.c.b16 %v3549, %v3547
        %v3654 = vpack.c.b16 %v3550, %v3548
        %v3655 = vpack.c.b16 %v3553, %v3551
        %v3656 = vpack.c.b16 %v3554, %v3552
        %v3657 = vpack.c.b16 %v3557, %v3555
        %v3658 = vpack.c.b16 %v3558, %v3556
        %v3659 = vpack.c.b16 %v3561, %v3559
        %v3660 = vpack.c.b16 %v3562, %v3560
        %v3661 = vpack.c.b16 %v3565, %v3563
        %v3662 = vpack.c.b16 %v3566, %v3564
        %v3663 = vpack.c.b16 %v3569, %v3567
        %v3664 = vpack.c.b16 %v3570, %v3568
        %v3665 = vpack.c.b16 %v3573, %v3571
        %v3666 = vpack.c.b16 %v3574, %v3572
        %v3667 = vpack.c.b16 %v3577, %v3575
        %v3668 = vpack.c.b16 %v3578, %v3576
        %v3669 = vpack.c.b16 %v3581, %v3579
        %v3670 = vpack.c.b16 %v3582, %v3580
        %v3671 = vpack.c.b16 %v3585, %v3583
        %v3672 = vpack.c.b16 %v3586, %v3584
        %v3673 = vpack.c.b16 %v3589, %v3587
        %v3674 = vpack.c.b16 %v3590, %v3588
        %v3675 = vpack.c.b16 %v3593, %v3591
        %v3676 = vpack.c.b16 %v3594, %v3592
        %v3677 = vpack.c.b16 %v3597, %v3595
        %v3678 = vpack.c.b16 %v3598, %v3596
        %v3679 = vpack.c.b16 %v3601, %v3599
        %v3680 = vpack.c.b16 %v3602, %v3600
        %v3681 = vpack.c.b16 %v3605, %v3603
        %v3682 = vpack.c.b16 %v3606, %v3604
        %v3683 = vpack.c.b16 %v3609, %v3607
        %v3684 = vpack.c.b16 %v3610, %v3608
        %v3685 = vpack.c.b16 %v3613, %v3611
        %v3686 = vpack.c.b16 %v3614, %v3612
        %v3687 = vpack.c.b16 %v3617, %v3615
        %v3688 = vpack.c.b16 %v3618, %v3616
        %v3689 = vpack.c.b16 %v3621, %v3619
        %v3690 = vpack.c.b16 %v3622, %v3620
        %v3691 = vpack.c.b16 %v3625, %v3623
        %v3692 = vpack.c.b16 %v3626, %v3624
        %v3693 = vpack.c.b16 %v3629, %v3627
        %v3694 = vpack.c.b16 %v3630, %v3628
        %3759 = vmatprep.subr.bf16.mxu0 %v3646
        %3760 = vmatpush1.bf16.msra.mxu0 %v3645
        %3761 = vmatprep.subr.bf16.mxu0 %v3644
        %3762 = vmatpush1.bf16.msra.mxu0 %v3643
        %3763 = vmatprep.subr.bf16.mxu0 %v3642
        %3764 = vmatpush1.bf16.msra.mxu0 %v3641
        %3765 = vmatprep.subr.bf16.mxu0 %v3640
        %3766 = vmatpush1.bf16.msra.mxu0 %v3639
        %3767 = vmatprep.subr.bf16.mxu0 %v3638
        %3768 = vmatpush1.bf16.msra.mxu0 %v3637
        %3769 = vmatprep.subr.bf16.mxu0 %v3636
        %3770 = vmatpush1.bf16.msra.mxu0 %v3635
        %3771 = vmatprep.subr.bf16.mxu0 %v3634
        %3772 = vmatpush1.bf16.msra.mxu0 %v3633
        %3773 = vmatprep.subr.bf16.mxu0 %v3632
        %3774 = vmatpush1.bf16.msra.mxu0 %v3631
        %3775 = vmatprep.subr.bf16.mxu0 %v3662
        %3776 = vmatpush2.bf16.msra.mxu0 %v3661
        %3777 = vmatprep.subr.bf16.mxu0 %v3660
        %3778 = vmatpush2.bf16.msra.mxu0 %v3659
        %3779 = vmatprep.subr.bf16.mxu0 %v3658
        %3780 = vmatpush2.bf16.msra.mxu0 %v3657
        %3781 = vmatprep.subr.bf16.mxu0 %v3656
        %3782 = vmatpush2.bf16.msra.mxu0 %v3655
        %3783 = vmatprep.subr.bf16.mxu0 %v3654
        %3784 = vmatpush2.bf16.msra.mxu0 %v3653
        %3785 = vmatprep.subr.bf16.mxu0 %v3652
        %3786 = vmatpush2.bf16.msra.mxu0 %v3651
        %3787 = vmatprep.subr.bf16.mxu0 %v3650
        %3788 = vmatpush2.bf16.msra.mxu0 %v3649
        %3789 = vmatprep.subr.bf16.mxu0 %v3648
        %3790 = vmatpush2.bf16.msra.mxu0 %v3647
        %3791 = vmatprep.mubr.bf16.mxu0 %v3356
        %3792 = vmatmul.mubr.bf16.gmra.mxu0 %v3355
        %v3793 = vpop.f32.mrf.mxu0
        %v3794 = vadd.f32 %v3432, %v3793
        %v3795 = vpop.f32.mrf.mxu0
        %v3796 = vadd.f32 %v3436, %v3795
        %v3797 = vpop.f32.mrf.mxu0
        %v3798 = vadd.f32 %v3432, %v3797
        %v3799 = vpop.f32.mrf.mxu0
        %v3800 = vadd.f32 %v3436, %v3799
        %3801 = vmatprep.mubr.bf16.mxu0 %v3360
        %3802 = vmatmul.mubr.bf16.gmra.mxu0 %v3359
        %v3803 = vpop.f32.mrf.mxu0
        %v3804 = vadd.f32 %v3432, %v3803
        %v3805 = vpop.f32.mrf.mxu0
        %v3806 = vadd.f32 %v3436, %v3805
        %v3807 = vpop.f32.mrf.mxu0
        %v3808 = vadd.f32 %v3432, %v3807
        %v3809 = vpop.f32.mrf.mxu0
        %v3810 = vadd.f32 %v3436, %v3809
        %3811 = vdwg.mxu0
        %3812 = vmatprep.subr.bf16.mxu0 %v3678
        %3813 = vmatpush1.bf16.msra.mxu0 %v3677
        %3814 = vmatprep.subr.bf16.mxu0 %v3676
        %3815 = vmatpush1.bf16.msra.mxu0 %v3675
        %3816 = vmatprep.subr.bf16.mxu0 %v3674
        %3817 = vmatpush1.bf16.msra.mxu0 %v3673
        %3818 = vmatprep.subr.bf16.mxu0 %v3672
        %3819 = vmatpush1.bf16.msra.mxu0 %v3671
        %3820 = vmatprep.subr.bf16.mxu0 %v3670
        %3821 = vmatpush1.bf16.msra.mxu0 %v3669
        %3822 = vmatprep.subr.bf16.mxu0 %v3668
        %3823 = vmatpush1.bf16.msra.mxu0 %v3667
        %3824 = vmatprep.subr.bf16.mxu0 %v3666
        %3825 = vmatpush1.bf16.msra.mxu0 %v3665
        %3826 = vmatprep.subr.bf16.mxu0 %v3664
        %3827 = vmatpush1.bf16.msra.mxu0 %v3663
        %3828 = vmatprep.subr.bf16.mxu0 %v3694
        %3829 = vmatpush2.bf16.msra.mxu0 %v3693
        %3830 = vmatprep.subr.bf16.mxu0 %v3692
        %3831 = vmatpush2.bf16.msra.mxu0 %v3691
        %3832 = vmatprep.subr.bf16.mxu0 %v3690
        %3833 = vmatpush2.bf16.msra.mxu0 %v3689
        %3834 = vmatprep.subr.bf16.mxu0 %v3688
        %3835 = vmatpush2.bf16.msra.mxu0 %v3687
        %3836 = vmatprep.subr.bf16.mxu0 %v3686
        %3837 = vmatpush2.bf16.msra.mxu0 %v3685
        %3838 = vmatprep.subr.bf16.mxu0 %v3684
        %3839 = vmatpush2.bf16.msra.mxu0 %v3683
        %3840 = vmatprep.subr.bf16.mxu0 %v3682
        %3841 = vmatpush2.bf16.msra.mxu0 %v3681
        %3842 = vmatprep.subr.bf16.mxu0 %v3680
        %3843 = vmatpush2.bf16.msra.mxu0 %v3679
        %3844 = vmatprep.mubr.bf16.mxu0 %v3358
        %3845 = vmatmul.mubr.bf16.gmra.mxu0 %v3357
        %v3846 = vpop.f32.mrf.mxu0
        %v3847 = vadd.f32 %v3794, %v3846
        %v3848 = vpop.f32.mrf.mxu0
        %v3849 = vadd.f32 %v3796, %v3848
        %v3850 = vpop.f32.mrf.mxu0
        %v3851 = vadd.f32 %v3798, %v3850
        %v3852 = vpop.f32.mrf.mxu0
        %v3853 = vadd.f32 %v3800, %v3852
        %3854 = vmatprep.mubr.bf16.mxu0 %v3362
        %3855 = vmatmul.mubr.bf16.gmra.mxu0 %v3361
        %v3856 = vpop.f32.mrf.mxu0
        %v3857 = vadd.f32 %v3804, %v3856
        %v3858 = vpop.f32.mrf.mxu0
        %v3859 = vadd.f32 %v3806, %v3858
        %v3860 = vpop.f32.mrf.mxu0
        %v3861 = vadd.f32 %v3808, %v3860
        %v3862 = vpop.f32.mrf.mxu0
        %v3863 = vadd.f32 %v3810, %v3862
        %3864 = vdwg.mxu0
        %v3865 = vsub.f32 0.0, %v3847
        %v3866 = vsub.f32 0.0, %v3849
        %v3867 = vsub.f32 0.0, %v3851
        %v3868 = vsub.f32 0.0, %v3853
        %v3869 = vsub.f32 0.0, %v3857
        %v3870 = vsub.f32 0.0, %v3859
        %v3871 = vsub.f32 0.0, %v3861
        %v3872 = vsub.f32 0.0, %v3863
        %v3873 = vmul.f32 %v3865, 1.442695
        %v3874 = vpow.pop %v3873
        %v3875 = vmul.f32 %v3866, 1.442695
        %v3876 = vpow.pop %v3875
        %v3877 = vmul.f32 %v3867, 1.442695
        %v3878 = vpow.pop %v3877
        %v3879 = vmul.f32 %v3868, 1.442695
        %v3880 = vpow.pop %v3879
        %v3881 = vmul.f32 %v3869, 1.442695
        %v3882 = vpow.pop %v3881
        %v3883 = vmul.f32 %v3870, 1.442695
        %v3884 = vpow.pop %v3883
        %v3885 = vmul.f32 %v3871, 1.442695
        %v3886 = vpow.pop %v3885
        %v3887 = vmul.f32 %v3872, 1.442695
        %v3888 = vpow.pop %v3887
        %v3889 = vadd.f32 %v3874, 1.0
        %v3890 = vadd.f32 %v3876, 1.0
        %v3891 = vadd.f32 %v3878, 1.0
        %v3892 = vadd.f32 %v3880, 1.0
        %v3893 = vadd.f32 %v3882, 1.0
        %v3894 = vadd.f32 %v3884, 1.0
        %v3895 = vadd.f32 %v3886, 1.0
        %v3896 = vadd.f32 %v3888, 1.0
        %v3897 = vrcp.pop %v3889
        %v3898 = vrcp.pop %v3890
        %v3899 = vrcp.pop %v3891
        %v3900 = vrcp.pop %v3892
        %v3901 = vrcp.pop %v3893
        %v3902 = vrcp.pop %v3894
        %v3903 = vrcp.pop %v3895
        %v3904 = vrcp.pop %v3896
        %3905 = vst [vmem:[%s421] sm:$0xff] %v3897
        %3906 = vst [vmem:[%s421 + $0x8] sm:$0xff] %v3898
        %3907 = vst [vmem:[%s421 + $0x10] sm:$0xff] %v3899
        %3908 = vst [vmem:[%s421 + $0x18] sm:$0xff] %v3900
        %3909 = vst [vmem:[%s421 + $0x20] sm:$0xff] %v3901
        %3910 = vst [vmem:[%s421 + $0x28] sm:$0xff] %v3902
        %3911 = vst [vmem:[%s421 + $0x30] sm:$0xff] %v3903
        %3912 = vst [vmem:[%s421 + $0x38] sm:$0xff] %v3904
        %s3913 = sand.u32 %s231, 1
        %s3914 = scalar_lea.sflag [#allocation4], %s3913
        %s3915 = sand.u32 %s231, 1
        %s3916 = smul.addr %s3915, 64
        %s3917 = scalar_lea.vmem [#allocation13], %s3916
        // Predicated region
        $region81: #{tpu_custom_call.1} parent=55 // pred_check
          %p3918 = pneg %p241
        $region82: #{tpu_custom_call.1} parent=55 // pred_check_branch
          %3920 = sbr.rel (%p3918) target = $region84
        $region83: #{tpu_custom_call.1} parent=55 // pred_region
          %s3921 = smul.u32 4, %s29
          %s3923 = ssub.s32 1024, 1024
          %3924 = vsyncadd %s3914, %s3923
          %s3925 = smul.addr %s3921, 2
          %s3926 = smul.addr %s3925, 128
          %s3927 = scalar_lea.hbm %s9, %s3926
          %s3928 = sshll.u32 %s3917, 4
          %s3929 = int_to_ptr.vmem [resolvable:$true] %s3928
          %3934 = dma.vmem_to_hbm [thread:$0]  %s3929, 1024, %s3927, %s3914, 256, 256, 16
        $region84: #{tpu_custom_call.1} parent=55 // pred_fallthru
          _
      $region56: #{tpu_custom_call.1} parent=5 // pred_fallthru
        _
      %p3935 = scmp.le.s32.totalorder 2, %s24
      // Predicated region
      $region85: #{tpu_custom_call.1} parent=5 // pred_check
        %p3936 = pneg %p3935
      $region86: #{tpu_custom_call.1} parent=5 // pred_check_branch
        %3938 = sbr.rel (%p3936) target = $region88
      $region87: #{tpu_custom_call.1} parent=5 // pred_region
        %s3939 = ssub.s32 %s24, 2
        // Predicated region
        $region89: #{tpu_custom_call.1} parent=87 // pred_check
          %p3940 = pneg %p247
        $region90: #{tpu_custom_call.1} parent=87 // pred_check_branch
          %3942 = sbr.rel (%p3940) target = $region92
        $region91: #{tpu_custom_call.1} parent=87 // pred_region
          %s3943 = sand.u32 %s232, 1
          %s3944 = scalar_lea.sflag [#allocation4], %s3943
          %s3945 = sand.u32 %s232, 1
          %s3946 = smul.addr %s3945, 64
          %s3947 = scalar_lea.vmem [#allocation13], %s3946
          %3948 = dma.done %s3944, 1024
        $region92: #{tpu_custom_call.1} parent=87 // pred_fallthru
          _
      $region88: #{tpu_custom_call.1} parent=5 // pred_fallthru
        _
    $region6: #{tpu_custom_call.1} parent=1 // loop_footer
      %s28 = sadd.s32 1, %s24
    $region7: #{tpu_custom_call.1} parent=1 // loop_footer_branch
      %23 = sbr.rel target = $region3
    $region8: #{tpu_custom_call.1} parent=1 // loop_exit
      _
    %3949 = vsyncpa [#allocation3], 1
    %s3950 = scalar_lea.sflag [#allocation3], 1
    %3951 = vsyncpa %s3950, 1
    %3952 = vsyncpa [#allocation6], 1
    %3953 = vsyncpa [#allocation9], 1
    %3954 = vsyncpa [#allocation12], 1
    %3955 = vsyncpa [#allocation4], 1
    %s3956 = scalar_lea.sflag [#allocation4], 1
    %3957 = vsyncpa %s3956, 1

</llo_original>
